<compile_context>
chip_gen: v6e
topology: v6e:2x2x1
jax: 0.10.0
libtpu: 0.0.40
codegen_flags: <defaults>
</compile_context>

<pallas_src>
import functools

import jax
import jax.numpy as jnp
from jax import lax
from jax.experimental import pallas as pl
from jax.experimental.pallas import tpu as pltpu


def fp_kernel(posq_ref, bq_ref, xskip_ref,          # query-side (tiled over M)
              posT_ref, bsrc_ref, x_ref,             # source-side (full, resident)
              w1a_ref, w1b_ref, b1_ref, w2_ref, b2_ref,   # MLP params (resident)
              out_ref,
              *, k):
    pq = posq_ref[...]                               # (TM, 3) f32
    TM = pq.shape[0]
    N = posT_ref.shape[1]

    # --- squared distances via 3 unrolled broadcast FMAs (VPU only) ----------
    d2 = jnp.zeros((TM, N), jnp.float32)
    for c in range(3):                               # static, tiny
        diff = pq[:, c:c + 1] - posT_ref[c:c + 1, :]  # (TM,1) - (1,N) -> (TM,N)
        d2 = d2 + diff * diff                        # exact, non-negative

    # --- mask out cross-batch pairs with a huge penalty ----------------------
    bq = bq_ref[...]                                 # (TM, 1) float batch ids
    bs = bsrc_ref[...]                               # (1 , N)
    bdiff = bq - bs
    d2 = d2 + jnp.where(bdiff * bdiff > 0.5,
                        jnp.float32(1e9), jnp.float32(0.0))

    iota_n = lax.broadcasted_iota(jnp.int32, (TM, N), 1)

    # --- iterative k-min extraction -> sparse weight matrix W (TM, N) --------
    W = jnp.zeros((TM, N), jnp.float32)
    wsum = jnp.zeros((TM, 1), jnp.float32)
    for _ in range(k):                               # k is small & static
        dmin = jnp.min(d2, axis=-1, keepdims=True)                     # (TM,1)
        first = jnp.min(jnp.where(d2 <= dmin, iota_n, N),
                        axis=-1, keepdims=True)                        # (TM,1)
        is_first = iota_n == first                                     # (TM,N)
        wv = 1.0 / jnp.maximum(dmin, jnp.float32(1e-16))               # (TM,1)
        W = W + jnp.where(is_first, wv, jnp.float32(0.0))
        wsum = wsum + wv
        d2 = jnp.where(is_first, jnp.float32(1e30), d2)

    # --- weighted interpolation as one MXU matmul -----------------------------
    inv_wsum = pl.reciprocal(wsum, approx=True)                        # EUP
    interp = jnp.dot(W, x_ref[...],
                     preferred_element_type=jnp.float32) * inv_wsum    # (TM,C)

    # --- split-matmul MLP (no concatenate) ------------------------------------
    h = (jnp.dot(interp, w1a_ref[...], preferred_element_type=jnp.float32)
         + jnp.dot(xskip_ref[...], w1b_ref[...],
                   preferred_element_type=jnp.float32)
         + b1_ref[...])
    h = jnp.maximum(h, 0.0)
    o = jnp.dot(h, w2_ref[...], preferred_element_type=jnp.float32) + b2_ref[...]
    out_ref[...] = o.astype(out_ref.dtype)


def feature_propagation(x, pos, batch, x_skip, pos_skip, batch_skip,
                        w1, b1, w2, b2, *, k, tm=128):
    """Pallas wrapper. Returns (x_out [M, OUT], pos_skip, batch_skip)."""
    N, C = x.shape
    M, C_skip = x_skip.shape
    H = w1.shape[1]
    OUT = w2.shape[1]
    assert w1.shape[0] == C + C_skip

    def rup(v, m):
        return ((v + m - 1) // m) * m

    f32 = jnp.float32
    tm = max(8, (min(tm, rup(M, 8)) // 8) * 8)       # tile <= padded M, mult of 8
    M_pad = rup(M, tm)
    N_pad = rup(N, 128)                              # lane-align source axis
    H_pad = rup(H, 128)                              # lane-dense hidden dim
    OUT_pad = rup(OUT, 128)                          # lane-dense output writeback

    # ---- query side (tiled over M); pad rows, padded queries get batch -2 ----
    pos_q = jnp.pad(pos_skip.astype(f32), ((0, M_pad - M), (0, 0)))
    bq = jnp.pad(batch_skip.astype(f32).reshape(M, 1),
                 ((0, M_pad - M), (0, 0)), constant_values=-2.0)
    xs_q = jnp.pad(x_skip.astype(f32), ((0, M_pad - M), (0, 0)))

    # ---- source side (fully resident); hoisted prep: (3,N) pos, (1,N) batch --
    pos_sT = jnp.pad(pos.astype(f32), ((0, N_pad - N), (0, 0))).T      # (3, N_pad)
    bs = jnp.pad(batch.astype(f32).reshape(1, N),
                 ((0, 0), (0, N_pad - N)), constant_values=-1.0)       # (1, N_pad)
    xsrc = jnp.pad(x.astype(f32), ((0, N_pad - N), (0, 0)))            # (N_pad, C)

    # ---- MLP params: split W1, pad H/OUT to 128 lanes -------------------------
    w1a = jnp.pad(w1[:C].astype(f32), ((0, 0), (0, H_pad - H)))        # (C, H_pad)
    w1b = jnp.pad(w1[C:].astype(f32), ((0, 0), (0, H_pad - H)))        # (C_skip, H_pad)
    b1r = jnp.pad(b1.astype(f32).reshape(1, H), ((0, 0), (0, H_pad - H)))
    w2p = jnp.pad(w2.astype(f32), ((0, H_pad - H), (0, OUT_pad - OUT)))
    b2r = jnp.pad(b2.astype(f32).reshape(1, OUT), ((0, 0), (0, OUT_pad - OUT)))

    # ---- explicit VMEM budget from the resident footprint ---------------------
    resident = sum(int(a.size) * a.dtype.itemsize
                   for a in (pos_sT, bs, xsrc, w1a, w1b, b1r, w2p, b2r))
    tile_bytes = tm * (3 + 1 + C_skip + OUT_pad) * 4
    scratch_est = 4 * tm * N_pad * 4                  # d2 / W / iota temporaries
    vmem_limit = int(min(100 << 20,
                         max(32 << 20,
                             2 * resident + 4 * tile_bytes + scratch_est + (4 << 20))))

    kernel = functools.partial(fp_kernel, k=k)

    out_full = pl.pallas_call(
        kernel,
        out_shape=jax.ShapeDtypeStruct((M_pad, OUT_pad), jnp.float32),
        grid_spec=pltpu.PrefetchScalarGridSpec(
            num_scalar_prefetch=0,
            grid=(M_pad // tm,),
            in_specs=[
                pl.BlockSpec((tm, 3),            lambda i: (i, 0)),   # pos_skip tile
                pl.BlockSpec((tm, 1),            lambda i: (i, 0)),   # batch_skip tile
                pl.BlockSpec((tm, C_skip),       lambda i: (i, 0)),   # x_skip tile
                pl.BlockSpec((3, N_pad),         lambda i: (0, 0)),   # pos^T (full)
                pl.BlockSpec((1, N_pad),         lambda i: (0, 0)),   # batch (full)
                pl.BlockSpec((N_pad, C),         lambda i: (0, 0)),   # x (full)
                pl.BlockSpec((C, H_pad),         lambda i: (0, 0)),   # W1[:C]
                pl.BlockSpec((C_skip, H_pad),    lambda i: (0, 0)),   # W1[C:]
                pl.BlockSpec((1, H_pad),         lambda i: (0, 0)),   # b1
                pl.BlockSpec((H_pad, OUT_pad),   lambda i: (0, 0)),   # W2
                pl.BlockSpec((1, OUT_pad),       lambda i: (0, 0)),   # b2
            ],
            out_specs=pl.BlockSpec((tm, OUT_pad), lambda i: (i, 0)),
        ),
        compiler_params=pltpu.CompilerParams(
            dimension_semantics=("parallel",),
            vmem_limit_bytes=vmem_limit),
    )(pos_q, bq, xs_q, pos_sT, bs, xsrc, w1a, w1b, b1r, w2p, b2r)

    return out_full[:M, :OUT], pos_skip, batch_skip


def reference(x, pos, batch, x_skip, pos_skip, batch_skip, w1, b1, w2, b2, *, k):
    """Pure-JAX reference mirroring torch_geometric.nn.knn_interpolate + MLP."""
    diff = pos_skip[:, None, :] - pos[None, :, :]
    d2 = jnp.sum(diff * diff, axis=-1)
    d2 = d2 + jnp.where(batch_skip[:, None] != batch[None, :], 1e9, 0.0)
    neg_d, idx = lax.top_k(-d2, k)                   # k smallest distances
    dk = -neg_d
    w = 1.0 / jnp.maximum(dk, 1e-16)                 # (M, k)
    gathered = x[idx]                                # (M, k, C)
    interp = jnp.sum(w[..., None] * gathered, axis=1) / jnp.sum(w, axis=1, keepdims=True)
    cat = jnp.concatenate([interp, x_skip], axis=1)
    h = jnp.maximum(cat @ w1 + b1[None, :], 0.0)
    return h @ w2 + b2[None, :]


if __name__ == "__main__":
    key = jax.random.PRNGKey(0)
    k_nn = 3
    N, M = 128, 256        # coarse (source) points, fine (skip/query) points
    C, C_skip = 32, 16     # feature channels
    H, OUT = 32, 32        # MLP hidden / output channels
    B = 2                  # two graphs in the batch

    ks = jax.random.split(key, 8)
    pos = jax.random.normal(ks[0], (N, 3), jnp.float32)
    pos_skip = jax.random.normal(ks[1], (M, 3), jnp.float32)
    x = jax.random.normal(ks[2], (N, C), jnp.float32)
    x_skip = jax.random.normal(ks[3], (M, C_skip), jnp.float32)
    batch = jnp.repeat(jnp.arange(B, dtype=jnp.int32), N // B)
    batch_skip = jnp.repeat(jnp.arange(B, dtype=jnp.int32), M // B)

    # deterministic MLP params (mlp = Linear(C+C_skip, H) -> ReLU -> Linear(H, OUT))
    w1 = jax.random.normal(ks[4], (C + C_skip, H), jnp.float32) * 0.1
    b1 = jax.random.normal(ks[5], (H,), jnp.float32) * 0.1
    w2 = jax.random.normal(ks[6], (H, OUT), jnp.float32) * 0.1
    b2 = jax.random.normal(ks[7], (OUT,), jnp.float32) * 0.1

    out, pos_out, batch_out = feature_propagation(
        x, pos, batch, x_skip, pos_skip, batch_skip, w1, b1, w2, b2,
        k=k_nn, tm=128)
    jax.block_until_ready(out)

    ref = reference(x, pos, batch, x_skip, pos_skip, batch_skip,
                    w1, b1, w2, b2, k=k_nn)
    assert out.shape == (M, OUT)
    # tolerance covers the approx (EUP) reciprocal used for the weight-sum divide
    assert jnp.allclose(out, ref, atol=1e-2, rtol=1e-2), "mismatch vs reference"

    print("KERNEL_OK")
</pallas_src>

<mosaic_0001>
module attributes {stable_mosaic.version = 11 : i64} {
  func.func @fp_kernel(%arg0: i32, %arg1: memref<128x3xf32, #tpu.memory_space<vmem>>, %arg2: memref<128x1xf32, #tpu.memory_space<vmem>>, %arg3: memref<128x16xf32, #tpu.memory_space<vmem>>, %arg4: memref<3x128xf32, #tpu.memory_space<vmem>>, %arg5: memref<1x128xf32, #tpu.memory_space<vmem>>, %arg6: memref<128x32xf32, #tpu.memory_space<vmem>>, %arg7: memref<32x128xf32, #tpu.memory_space<vmem>>, %arg8: memref<16x128xf32, #tpu.memory_space<vmem>>, %arg9: memref<1x128xf32, #tpu.memory_space<vmem>>, %arg10: memref<128x128xf32, #tpu.memory_space<vmem>>, %arg11: memref<1x128xf32, #tpu.memory_space<vmem>>, %arg12: memref<128x128xf32, #tpu.memory_space<vmem>>) attributes {dimension_semantics = [#tpu.dimension_semantics<parallel>], iteration_bounds = array<i64: 2>, scalar_prefetch = 0 : i64, scratch_operands = 0 : i64, tpu.core_type = #tpu.core_type<tc>, window_params = [{transform_indices = @transform_0, window_bounds = array<i64: 128, 3>}, {transform_indices = @transform_1, window_bounds = array<i64: 128, 1>}, {transform_indices = @transform_2, window_bounds = array<i64: 128, 16>}, {pipeline_mode = #tpu.pipeline_mode<synchronous>, transform_indices = @transform_3, window_bounds = array<i64: 3, 128>}, {pipeline_mode = #tpu.pipeline_mode<synchronous>, transform_indices = @transform_4, window_bounds = array<i64: 1, 128>}, {pipeline_mode = #tpu.pipeline_mode<synchronous>, transform_indices = @transform_5, window_bounds = array<i64: 128, 32>}, {pipeline_mode = #tpu.pipeline_mode<synchronous>, transform_indices = @transform_6, window_bounds = array<i64: 32, 128>}, {pipeline_mode = #tpu.pipeline_mode<synchronous>, transform_indices = @transform_7, window_bounds = array<i64: 16, 128>}, {pipeline_mode = #tpu.pipeline_mode<synchronous>, transform_indices = @transform_8, window_bounds = array<i64: 1, 128>}, {pipeline_mode = #tpu.pipeline_mode<synchronous>, transform_indices = @transform_9, window_bounds = array<i64: 128, 128>}, {pipeline_mode = #tpu.pipeline_mode<synchronous>, transform_indices = @transform_10, window_bounds = array<i64: 1, 128>}, {transform_indices = @transform_11, window_bounds = array<i64: 128, 128>}]} {
    %c0 = arith.constant 0 : index
    %c0_0 = arith.constant 0 : index
    %0 = vector.load %arg1[%c0, %c0_0] : memref<128x3xf32, #tpu.memory_space<vmem>>, vector<128x3xf32>
    %cst = arith.constant 0.000000e+00 : f32
    %1 = vector.broadcast %cst : f32 to vector<128x128xf32>
    %2 = vector.extract_strided_slice %0 {offsets = [0, 0], sizes = [128, 1], strides = [1, 1]} : vector<128x3xf32> to vector<128x1xf32>
    %c0_1 = arith.constant 0 : index
    %c0_2 = arith.constant 0 : index
    %3 = vector.load %arg4[%c0_1, %c0_2] : memref<3x128xf32, #tpu.memory_space<vmem>>, vector<1x128xf32>
    %4 = vector.broadcast %2 : vector<128x1xf32> to vector<128x128xf32>
    %5 = vector.broadcast %3 : vector<1x128xf32> to vector<128x128xf32>
    %6 = arith.subf %4, %5 : vector<128x128xf32>
    %7 = arith.mulf %6, %6 : vector<128x128xf32>
    %8 = arith.addf %1, %7 : vector<128x128xf32>
    %9 = vector.extract_strided_slice %0 {offsets = [0, 1], sizes = [128, 1], strides = [1, 1]} : vector<128x3xf32> to vector<128x1xf32>
    %c1 = arith.constant 1 : index
    %c0_3 = arith.constant 0 : index
    %10 = vector.load %arg4[%c1, %c0_3] : memref<3x128xf32, #tpu.memory_space<vmem>>, vector<1x128xf32>
    %11 = vector.broadcast %9 : vector<128x1xf32> to vector<128x128xf32>
    %12 = vector.broadcast %10 : vector<1x128xf32> to vector<128x128xf32>
    %13 = arith.subf %11, %12 : vector<128x128xf32>
    %14 = arith.mulf %13, %13 : vector<128x128xf32>
    %15 = arith.addf %8, %14 : vector<128x128xf32>
    %16 = vector.extract_strided_slice %0 {offsets = [0, 2], sizes = [128, 1], strides = [1, 1]} : vector<128x3xf32> to vector<128x1xf32>
    %c2 = arith.constant 2 : index
    %c0_4 = arith.constant 0 : index
    %17 = vector.load %arg4[%c2, %c0_4] : memref<3x128xf32, #tpu.memory_space<vmem>>, vector<1x128xf32>
    %18 = vector.broadcast %16 : vector<128x1xf32> to vector<128x128xf32>
    %19 = vector.broadcast %17 : vector<1x128xf32> to vector<128x128xf32>
    %20 = arith.subf %18, %19 : vector<128x128xf32>
    %21 = arith.mulf %20, %20 : vector<128x128xf32>
    %22 = arith.addf %15, %21 : vector<128x128xf32>
    %c0_5 = arith.constant 0 : index
    %c0_6 = arith.constant 0 : index
    %23 = vector.load %arg2[%c0_5, %c0_6] : memref<128x1xf32, #tpu.memory_space<vmem>>, vector<128x1xf32>
    %c0_7 = arith.constant 0 : index
    %c0_8 = arith.constant 0 : index
    %24 = vector.load %arg5[%c0_7, %c0_8] : memref<1x128xf32, #tpu.memory_space<vmem>>, vector<1x128xf32>
    %25 = vector.broadcast %23 : vector<128x1xf32> to vector<128x128xf32>
    %26 = vector.broadcast %24 : vector<1x128xf32> to vector<128x128xf32>
    %27 = arith.subf %25, %26 : vector<128x128xf32>
    %28 = arith.mulf %27, %27 : vector<128x128xf32>
    %cst_9 = arith.constant 5.000000e-01 : f32
    %29 = vector.broadcast %cst_9 : f32 to vector<128x128xf32>
    %30 = arith.cmpf ogt, %28, %29 : vector<128x128xf32>
    %cst_10 = arith.constant 1.000000e+09 : f32
    %cst_11 = arith.constant 0.000000e+00 : f32
    %31 = vector.broadcast %cst_10 : f32 to vector<128x128xf32>
    %32 = vector.broadcast %cst_11 : f32 to vector<128x128xf32>
    %33 = arith.select %30, %31, %32 : vector<128x128xi1>, vector<128x128xf32>
    %34 = arith.addf %22, %33 : vector<128x128xf32>
    %35 = tpu.iota {dimensions = array<i32: 1>} : vector<128x128xi32>
    %cst_12 = arith.constant 0.000000e+00 : f32
    %36 = vector.broadcast %cst_12 : f32 to vector<128x128xf32>
    %cst_13 = arith.constant 0.000000e+00 : f32
    %37 = vector.broadcast %cst_13 : f32 to vector<128x1xf32>
    %cst_14 = arith.constant dense<0x7F800000> : vector<128xf32>
    %38 = vector.multi_reduction <minimumf>, %34, %cst_14 [1] : vector<128x128xf32> to vector<128xf32>
    %39 = vector.shape_cast %38 : vector<128xf32> to vector<128x1xf32>
    %40 = vector.broadcast %39 : vector<128x1xf32> to vector<128x128xf32>
    %41 = arith.cmpf ole, %34, %40 : vector<128x128xf32>
    %c128_i32 = arith.constant 128 : i32
    %42 = vector.broadcast %c128_i32 : i32 to vector<128x128xi32>
    %43 = arith.select %41, %35, %42 : vector<128x128xi1>, vector<128x128xi32>
    %cst_15 = arith.constant dense<2147483647> : vector<128xi32>
    %44 = vector.multi_reduction <minsi>, %43, %cst_15 [1] : vector<128x128xi32> to vector<128xi32>
    %45 = vector.shape_cast %44 : vector<128xi32> to vector<128x1xi32>
    %46 = vector.broadcast %45 : vector<128x1xi32> to vector<128x128xi32>
    %47 = arith.cmpi eq, %35, %46 : vector<128x128xi32>
    %cst_16 = arith.constant 1.000000e-16 : f32
    %48 = vector.broadcast %cst_16 : f32 to vector<128x1xf32>
    %49 = arith.maximumf %39, %48 : vector<128x1xf32>
    %cst_17 = arith.constant 1.000000e+00 : f32
    %50 = vector.broadcast %cst_17 : f32 to vector<128x1xf32>
    %51 = arith.divf %50, %49 : vector<128x1xf32>
    %cst_18 = arith.constant 0.000000e+00 : f32
    %52 = vector.shape_cast %51 : vector<128x1xf32> to vector<128x1xf32>
    %53 = vector.broadcast %52 : vector<128x1xf32> to vector<128x128xf32>
    %54 = vector.broadcast %cst_18 : f32 to vector<128x128xf32>
    %55 = arith.select %47, %53, %54 : vector<128x128xi1>, vector<128x128xf32>
    %56 = arith.addf %36, %55 : vector<128x128xf32>
    %57 = arith.addf %37, %51 : vector<128x1xf32>
    %cst_19 = arith.constant 1.000000e+30 : f32
    %58 = vector.broadcast %cst_19 : f32 to vector<128x128xf32>
    %59 = arith.select %47, %58, %34 : vector<128x128xi1>, vector<128x128xf32>
    %cst_20 = arith.constant dense<0x7F800000> : vector<128xf32>
    %60 = vector.multi_reduction <minimumf>, %59, %cst_20 [1] : vector<128x128xf32> to vector<128xf32>
    %61 = vector.shape_cast %60 : vector<128xf32> to vector<128x1xf32>
    %62 = vector.broadcast %61 : vector<128x1xf32> to vector<128x128xf32>
    %63 = arith.cmpf ole, %59, %62 : vector<128x128xf32>
    %c128_i32_21 = arith.constant 128 : i32
    %64 = vector.broadcast %c128_i32_21 : i32 to vector<128x128xi32>
    %65 = arith.select %63, %35, %64 : vector<128x128xi1>, vector<128x128xi32>
    %cst_22 = arith.constant dense<2147483647> : vector<128xi32>
    %66 = vector.multi_reduction <minsi>, %65, %cst_22 [1] : vector<128x128xi32> to vector<128xi32>
    %67 = vector.shape_cast %66 : vector<128xi32> to vector<128x1xi32>
    %68 = vector.broadcast %67 : vector<128x1xi32> to vector<128x128xi32>
    %69 = arith.cmpi eq, %35, %68 : vector<128x128xi32>
    %cst_23 = arith.constant 1.000000e-16 : f32
    %70 = vector.broadcast %cst_23 : f32 to vector<128x1xf32>
    %71 = arith.maximumf %61, %70 : vector<128x1xf32>
    %cst_24 = arith.constant 1.000000e+00 : f32
    %72 = vector.broadcast %cst_24 : f32 to vector<128x1xf32>
    %73 = arith.divf %72, %71 : vector<128x1xf32>
    %cst_25 = arith.constant 0.000000e+00 : f32
    %74 = vector.shape_cast %73 : vector<128x1xf32> to vector<128x1xf32>
    %75 = vector.broadcast %74 : vector<128x1xf32> to vector<128x128xf32>
    %76 = vector.broadcast %cst_25 : f32 to vector<128x128xf32>
    %77 = arith.select %69, %75, %76 : vector<128x128xi1>, vector<128x128xf32>
    %78 = arith.addf %56, %77 : vector<128x128xf32>
    %79 = arith.addf %57, %73 : vector<128x1xf32>
    %cst_26 = arith.constant 1.000000e+30 : f32
    %80 = vector.broadcast %cst_26 : f32 to vector<128x128xf32>
    %81 = arith.select %69, %80, %59 : vector<128x128xi1>, vector<128x128xf32>
    %cst_27 = arith.constant dense<0x7F800000> : vector<128xf32>
    %82 = vector.multi_reduction <minimumf>, %81, %cst_27 [1] : vector<128x128xf32> to vector<128xf32>
    %83 = vector.shape_cast %82 : vector<128xf32> to vector<128x1xf32>
    %84 = vector.broadcast %83 : vector<128x1xf32> to vector<128x128xf32>
    %85 = arith.cmpf ole, %81, %84 : vector<128x128xf32>
    %c128_i32_28 = arith.constant 128 : i32
    %86 = vector.broadcast %c128_i32_28 : i32 to vector<128x128xi32>
    %87 = arith.select %85, %35, %86 : vector<128x128xi1>, vector<128x128xi32>
    %cst_29 = arith.constant dense<2147483647> : vector<128xi32>
    %88 = vector.multi_reduction <minsi>, %87, %cst_29 [1] : vector<128x128xi32> to vector<128xi32>
    %89 = vector.shape_cast %88 : vector<128xi32> to vector<128x1xi32>
    %90 = vector.broadcast %89 : vector<128x1xi32> to vector<128x128xi32>
    %91 = arith.cmpi eq, %35, %90 : vector<128x128xi32>
    %cst_30 = arith.constant 1.000000e-16 : f32
    %92 = vector.broadcast %cst_30 : f32 to vector<128x1xf32>
    %93 = arith.maximumf %83, %92 : vector<128x1xf32>
    %cst_31 = arith.constant 1.000000e+00 : f32
    %94 = vector.broadcast %cst_31 : f32 to vector<128x1xf32>
    %95 = arith.divf %94, %93 : vector<128x1xf32>
    %cst_32 = arith.constant 0.000000e+00 : f32
    %96 = vector.shape_cast %95 : vector<128x1xf32> to vector<128x1xf32>
    %97 = vector.broadcast %96 : vector<128x1xf32> to vector<128x128xf32>
    %98 = vector.broadcast %cst_32 : f32 to vector<128x128xf32>
    %99 = arith.select %91, %97, %98 : vector<128x128xi1>, vector<128x128xf32>
    %100 = arith.addf %78, %99 : vector<128x128xf32>
    %101 = arith.addf %79, %95 : vector<128x1xf32>
    %102 = tpu.reciprocal %101 {approx = true} : vector<128x1xf32> -> vector<128x1xf32>
    %c0_33 = arith.constant 0 : index
    %c0_34 = arith.constant 0 : index
    %103 = vector.load %arg6[%c0_33, %c0_34] : memref<128x32xf32, #tpu.memory_space<vmem>>, vector<128x32xf32>
    %cst_35 = arith.constant dense<0.000000e+00> : vector<128x32xf32>
    %104 = tpu.matmul %100, %103, %cst_35 {dimension_numbers = #tpu.dot_dimension_numbers<[1], [0], [0], [1], [0, 0, 1, 1], [], []>} : vector<128x128xf32>, vector<128x32xf32>, vector<128x32xf32> -> vector<128x32xf32>
    %105 = vector.broadcast %102 : vector<128x1xf32> to vector<128x32xf32>
    %106 = arith.mulf %104, %105 : vector<128x32xf32>
    %c0_36 = arith.constant 0 : index
    %c0_37 = arith.constant 0 : index
    %107 = vector.load %arg7[%c0_36, %c0_37] : memref<32x128xf32, #tpu.memory_space<vmem>>, vector<32x128xf32>
    %cst_38 = arith.constant dense<0.000000e+00> : vector<128x128xf32>
    %108 = tpu.matmul %106, %107, %cst_38 {dimension_numbers = #tpu.dot_dimension_numbers<[1], [0], [0], [1], [0, 0, 1, 1], [], []>} : vector<128x32xf32>, vector<32x128xf32>, vector<128x128xf32> -> vector<128x128xf32>
    %c0_39 = arith.constant 0 : index
    %c0_40 = arith.constant 0 : index
    %109 = vector.load %arg3[%c0_39, %c0_40] : memref<128x16xf32, #tpu.memory_space<vmem>>, vector<128x16xf32>
    %c0_41 = arith.constant 0 : index
    %c0_42 = arith.constant 0 : index
    %110 = vector.load %arg8[%c0_41, %c0_42] : memref<16x128xf32, #tpu.memory_space<vmem>>, vector<16x128xf32>
    %cst_43 = arith.constant dense<0.000000e+00> : vector<128x128xf32>
    %111 = tpu.matmul %109, %110, %cst_43 {dimension_numbers = #tpu.dot_dimension_numbers<[1], [0], [0], [1], [0, 0, 1, 1], [], []>} : vector<128x16xf32>, vector<16x128xf32>, vector<128x128xf32> -> vector<128x128xf32>
    %112 = arith.addf %108, %111 : vector<128x128xf32>
    %c0_44 = arith.constant 0 : index
    %c0_45 = arith.constant 0 : index
    %113 = vector.load %arg9[%c0_44, %c0_45] : memref<1x128xf32, #tpu.memory_space<vmem>>, vector<1x128xf32>
    %114 = vector.broadcast %113 : vector<1x128xf32> to vector<128x128xf32>
    %115 = arith.addf %112, %114 : vector<128x128xf32>
    %cst_46 = arith.constant 0.000000e+00 : f32
    %116 = vector.broadcast %cst_46 : f32 to vector<128x128xf32>
    %117 = arith.maximumf %115, %116 : vector<128x128xf32>
    %c0_47 = arith.constant 0 : index
    %c0_48 = arith.constant 0 : index
    %118 = vector.load %arg10[%c0_47, %c0_48] : memref<128x128xf32, #tpu.memory_space<vmem>>, vector<128x128xf32>
    %cst_49 = arith.constant dense<0.000000e+00> : vector<128x128xf32>
    %119 = tpu.matmul %117, %118, %cst_49 {dimension_numbers = #tpu.dot_dimension_numbers<[1], [0], [0], [1], [0, 0, 1, 1], [], []>} : vector<128x128xf32>, vector<128x128xf32>, vector<128x128xf32> -> vector<128x128xf32>
    %c0_50 = arith.constant 0 : index
    %c0_51 = arith.constant 0 : index
    %120 = vector.load %arg11[%c0_50, %c0_51] : memref<1x128xf32, #tpu.memory_space<vmem>>, vector<1x128xf32>
    %121 = vector.broadcast %120 : vector<1x128xf32> to vector<128x128xf32>
    %122 = arith.addf %119, %121 : vector<128x128xf32>
    %c0_52 = arith.constant 0 : index
    %c0_53 = arith.constant 0 : index
    %123 = vector.load %arg12[%c0_52, %c0_53] : memref<128x128xf32, #tpu.memory_space<vmem>>, vector<128x128xf32>
    tpu.vector_store %arg12[%c0_52, %c0_53], %122 {strides = array<i32>} : memref<128x128xf32, #tpu.memory_space<vmem>>, vector<128x128xf32>,
    return
  }
  func.func @transform_0(%arg0: i32) -> (i32, i32) {
    %c0_i32 = arith.constant 0 : i32
    %c0_i32_0 = arith.constant 0 : i32
    return %arg0, %c0_i32 : i32, i32
  }
  func.func @transform_1(%arg0: i32) -> (i32, i32) {
    %c0_i32 = arith.constant 0 : i32
    %c0_i32_0 = arith.constant 0 : i32
    return %arg0, %c0_i32 : i32, i32
  }
  func.func @transform_2(%arg0: i32) -> (i32, i32) {
    %c0_i32 = arith.constant 0 : i32
    %c0_i32_0 = arith.constant 0 : i32
    return %arg0, %c0_i32 : i32, i32
  }
  func.func @transform_3(%arg0: i32) -> (i32, i32) {
    %c0_i32 = arith.constant 0 : i32
    %c0_i32_0 = arith.constant 0 : i32
    %c0_i32_1 = arith.constant 0 : i32
    return %c0_i32, %c0_i32_0 : i32, i32
  }
  func.func @transform_4(%arg0: i32) -> (i32, i32) {
    %c0_i32 = arith.constant 0 : i32
    %c0_i32_0 = arith.constant 0 : i32
    %c0_i32_1 = arith.constant 0 : i32
    return %c0_i32, %c0_i32_0 : i32, i32
  }
  func.func @transform_5(%arg0: i32) -> (i32, i32) {
    %c0_i32 = arith.constant 0 : i32
    %c0_i32_0 = arith.constant 0 : i32
    %c0_i32_1 = arith.constant 0 : i32
    return %c0_i32, %c0_i32_0 : i32, i32
  }
  func.func @transform_6(%arg0: i32) -> (i32, i32) {
    %c0_i32 = arith.constant 0 : i32
    %c0_i32_0 = arith.constant 0 : i32
    %c0_i32_1 = arith.constant 0 : i32
    return %c0_i32, %c0_i32_0 : i32, i32
  }
  func.func @transform_7(%arg0: i32) -> (i32, i32) {
    %c0_i32 = arith.constant 0 : i32
    %c0_i32_0 = arith.constant 0 : i32
    %c0_i32_1 = arith.constant 0 : i32
    return %c0_i32, %c0_i32_0 : i32, i32
  }
  func.func @transform_8(%arg0: i32) -> (i32, i32) {
    %c0_i32 = arith.constant 0 : i32
    %c0_i32_0 = arith.constant 0 : i32
    %c0_i32_1 = arith.constant 0 : i32
    return %c0_i32, %c0_i32_0 : i32, i32
  }
  func.func @transform_9(%arg0: i32) -> (i32, i32) {
    %c0_i32 = arith.constant 0 : i32
    %c0_i32_0 = arith.constant 0 : i32
    %c0_i32_1 = arith.constant 0 : i32
    return %c0_i32, %c0_i32_0 : i32, i32
  }
  func.func @transform_10(%arg0: i32) -> (i32, i32) {
    %c0_i32 = arith.constant 0 : i32
    %c0_i32_0 = arith.constant 0 : i32
    %c0_i32_1 = arith.constant 0 : i32
    return %c0_i32, %c0_i32_0 : i32, i32
  }
  func.func @transform_11(%arg0: i32) -> (i32, i32) {
    %c0_i32 = arith.constant 0 : i32
    %c0_i32_0 = arith.constant 0 : i32
    return %arg0, %c0_i32 : i32, i32
  }
}

</mosaic_0001>

<llo_original>
// kernel: tpu_custom_call.1
$region0: #{tpu_custom_call.1}
  #allocation0 [shape = 'u32[]', space=smem, size = 0x4, offset = 0x4, fixed_abs, tag = 'smem constant byte address 0x4 - core index']
  #allocation1 [shape = 'u32[144,128]{1,0:T(1,128)}', space=vmem, size = 0x12000, scoped, tag = 'internal scratch']
  %s0 = inlined_call_operand.vmem [shape: f32[256,3], index: 0, kind: input, shape index: {}]
  %s1 = inlined_call_operand.vmem [shape: f32[256,1], index: 1, kind: input, shape index: {}]
  %s2 = inlined_call_operand.vmem [shape: f32[256,16], index: 2, kind: input, shape index: {}]
  %s3 = inlined_call_operand.vmem [shape: f32[3,128], index: 3, kind: input, shape index: {}]
  %s4 = inlined_call_operand.vmem [shape: f32[1,128], index: 4, kind: input, shape index: {}]
  %s5 = inlined_call_operand.vmem [shape: f32[128,32], index: 5, kind: input, shape index: {}]
  %s6 = inlined_call_operand.vmem [shape: f32[32,128], index: 6, kind: input, shape index: {}]
  %s7 = inlined_call_operand.vmem [shape: f32[16,128], index: 7, kind: input, shape index: {}]
  %s8 = inlined_call_operand.vmem [shape: f32[1,128], index: 8, kind: input, shape index: {}]
  %s9 = inlined_call_operand.vmem [shape: f32[128,128], index: 9, kind: input, shape index: {}]
  %s10 = inlined_call_operand.vmem [shape: f32[1,128], index: 10, kind: input, shape index: {}]
  %s11 = inlined_call_operand.hbm [shape: f32[256,128], index: 11, kind: output, shape index: {}]
  %s12 = sld [smem:[#allocation0]]
  $region77: #{tpu_custom_call.1} parent=0
    _
  %s14 = ssub.s32 1, %s12
  %s15 = scalar_select 0, %s14, %s12
  $region1: #{tpu_custom_call.1} parent=0
    #allocation2 [shape = 'u8[131072]{0}', space=vmem, size = 0x20000, scoped, tag = 'output window, operand 0']
    #allocation3 [shape = 's32[2]{0}', space=sflag, size = 0x8, scoped, tag = 'scoped memory for tpu_custom_call.1']
    %16 = vsyncpa [#allocation3], 0
    %s17 = scalar_lea.sflag [#allocation3], 1
    %18 = vsyncpa %s17, 0
    loop: start=0, step=1, limit=4
    $region2: #{tpu_custom_call.1} parent=1 // loop_pre_header
      _
    $region3: #{tpu_custom_call.1} parent=1 // loop_header
      %s20 = sphi 0, %s24
      %p21 = scmp.ge.s32.totalorder %s20, 4
      %s30 = sphi 0, %s32
      %s33 = sphi 0, %s30
      %s34 = sphi 0, %s33
      %s50 = sphi 0, %s34
      %s56 = sphi 0, %s58
      %s59 = sphi 0, %s56
      %s60 = sphi 0, %s59
      %s76 = sphi 0, %s60
      %s82 = sphi 0, %s84
      %s85 = sphi 0, %s82
      %s86 = sphi 0, %s85
      %s102 = sphi 0, %s86
      %s106 = sphi 0, %s106
      %s108 = sphi 0, %s106
      %s109 = sphi 0, %s108
      %s123 = sphi 0, %s109
      %s127 = sphi 0, %s127
      %s129 = sphi 0, %s127
      %s130 = sphi 0, %s129
      %s144 = sphi 0, %s130
      %s148 = sphi 0, %s148
      %s150 = sphi 0, %s148
      %s151 = sphi 0, %s150
      %s165 = sphi 0, %s151
      %s169 = sphi 0, %s169
      %s171 = sphi 0, %s169
      %s172 = sphi 0, %s171
      %s186 = sphi 0, %s172
      %s190 = sphi 0, %s190
      %s192 = sphi 0, %s190
      %s193 = sphi 0, %s192
      %s207 = sphi 0, %s193
      %s211 = sphi 0, %s211
      %s213 = sphi 0, %s211
      %s214 = sphi 0, %s213
      %s228 = sphi 0, %s214
      %s232 = sphi 0, %s232
      %s234 = sphi 0, %s232
      %s235 = sphi 0, %s234
      %s249 = sphi 0, %s235
      %s253 = sphi 0, %s253
      %s255 = sphi 0, %s253
      %s256 = sphi 0, %s255
      %s270 = sphi 0, %s256
      %s276 = sphi 0, %s278
      %s279 = sphi 0, %s276
      %s280 = sphi 0, %s279
      %s296 = sphi 0, %s280
    $region4: #{tpu_custom_call.1} parent=1 // loop_header_branch
      %23 = sbr.rel (%p21) target = $region8
    $region5: #{tpu_custom_call.1} parent=1 // loop_body
      %s25 = ssub.s32 %s20, 1
      %s26 = ssub.s32 %s20, 2
      %s27 = sadd.s32 %s20, 1
      %s28 = ssub.s32 %s20, %s27
      %p29 = scmp.eq.s32.totalorder %s28, 0
      %s31 = sadd.s32 %s30, 1
      %s32 = scalar_select %p29, %s30, %s31
      %p35 = pneg %p29
      %p36 = scmp.eq.s32.totalorder %s20, 1
      %p37 = por %p35, %p36
      %p38 = scmp.ne.s32.totalorder %s30, %s33
      %p39 = scmp.eq.s32.totalorder %s20, 0
      %p40 = por %p38, %p39
      %p41 = scmp.ne.s32.totalorder %s30, %s33
      %p42 = scmp.eq.s32.totalorder %s25, 1
      %p43 = por %p41, %p42
      %p44 = scmp.ne.s32.totalorder %s33, %s34
      %p45 = scmp.eq.s32.totalorder %s25, 0
      %p46 = por %p44, %p45
      %p47 = scmp.ne.s32.totalorder %s33, %s34
      %p48 = scmp.eq.s32.totalorder %s26, 1
      %p49 = por %p47, %p48
      %p51 = scmp.ne.s32.totalorder %s34, %s50
      %p52 = scmp.eq.s32.totalorder %s26, 0
      %p53 = por %p51, %p52
      %s54 = ssub.s32 %s20, %s27
      %p55 = scmp.eq.s32.totalorder %s54, 0
      %s57 = sadd.s32 %s56, 1
      %s58 = scalar_select %p55, %s56, %s57
      %p61 = pneg %p55
      %p62 = scmp.eq.s32.totalorder %s20, 1
      %p63 = por %p61, %p62
      %p64 = scmp.ne.s32.totalorder %s56, %s59
      %p65 = scmp.eq.s32.totalorder %s20, 0
      %p66 = por %p64, %p65
      %p67 = scmp.ne.s32.totalorder %s56, %s59
      %p68 = scmp.eq.s32.totalorder %s25, 1
      %p69 = por %p67, %p68
      %p70 = scmp.ne.s32.totalorder %s59, %s60
      %p71 = scmp.eq.s32.totalorder %s25, 0
      %p72 = por %p70, %p71
      %p73 = scmp.ne.s32.totalorder %s59, %s60
      %p74 = scmp.eq.s32.totalorder %s26, 1
      %p75 = por %p73, %p74
      %p77 = scmp.ne.s32.totalorder %s60, %s76
      %p78 = scmp.eq.s32.totalorder %s26, 0
      %p79 = por %p77, %p78
      %s80 = ssub.s32 %s20, %s27
      %p81 = scmp.eq.s32.totalorder %s80, 0
      %s83 = sadd.s32 %s82, 1
      %s84 = scalar_select %p81, %s82, %s83
      %p87 = pneg %p81
      %p88 = scmp.eq.s32.totalorder %s20, 1
      %p89 = por %p87, %p88
      %p90 = scmp.ne.s32.totalorder %s82, %s85
      %p91 = scmp.eq.s32.totalorder %s20, 0
      %p92 = por %p90, %p91
      %p93 = scmp.ne.s32.totalorder %s82, %s85
      %p94 = scmp.eq.s32.totalorder %s25, 1
      %p95 = por %p93, %p94
      %p96 = scmp.ne.s32.totalorder %s85, %s86
      %p97 = scmp.eq.s32.totalorder %s25, 0
      %p98 = por %p96, %p97
      %p99 = scmp.ne.s32.totalorder %s85, %s86
      %p100 = scmp.eq.s32.totalorder %s26, 1
      %p101 = por %p99, %p100
      %p103 = scmp.ne.s32.totalorder %s86, %s102
      %p104 = scmp.eq.s32.totalorder %s26, 0
      %p105 = por %p103, %p104
      %s107 = sadd.s32 %s106, 1
      %p110 = scmp.eq.s32.totalorder %s20, 1
      %p111 = scmp.ne.s32.totalorder %s106, %s108
      %p112 = scmp.eq.s32.totalorder %s20, 0
      %p113 = por %p111, %p112
      %p114 = scmp.ne.s32.totalorder %s106, %s108
      %p115 = scmp.eq.s32.totalorder %s25, 1
      %p116 = por %p114, %p115
      %p117 = scmp.ne.s32.totalorder %s108, %s109
      %p118 = scmp.eq.s32.totalorder %s25, 0
      %p119 = por %p117, %p118
      %p120 = scmp.ne.s32.totalorder %s108, %s109
      %p121 = scmp.eq.s32.totalorder %s26, 1
      %p122 = por %p120, %p121
      %p124 = scmp.ne.s32.totalorder %s109, %s123
      %p125 = scmp.eq.s32.totalorder %s26, 0
      %p126 = por %p124, %p125
      %s128 = sadd.s32 %s127, 1
      %p131 = scmp.eq.s32.totalorder %s20, 1
      %p132 = scmp.ne.s32.totalorder %s127, %s129
      %p133 = scmp.eq.s32.totalorder %s20, 0
      %p134 = por %p132, %p133
      %p135 = scmp.ne.s32.totalorder %s127, %s129
      %p136 = scmp.eq.s32.totalorder %s25, 1
      %p137 = por %p135, %p136
      %p138 = scmp.ne.s32.totalorder %s129, %s130
      %p139 = scmp.eq.s32.totalorder %s25, 0
      %p140 = por %p138, %p139
      %p141 = scmp.ne.s32.totalorder %s129, %s130
      %p142 = scmp.eq.s32.totalorder %s26, 1
      %p143 = por %p141, %p142
      %p145 = scmp.ne.s32.totalorder %s130, %s144
      %p146 = scmp.eq.s32.totalorder %s26, 0
      %p147 = por %p145, %p146
      %s149 = sadd.s32 %s148, 1
      %p152 = scmp.eq.s32.totalorder %s20, 1
      %p153 = scmp.ne.s32.totalorder %s148, %s150
      %p154 = scmp.eq.s32.totalorder %s20, 0
      %p155 = por %p153, %p154
      %p156 = scmp.ne.s32.totalorder %s148, %s150
      %p157 = scmp.eq.s32.totalorder %s25, 1
      %p158 = por %p156, %p157
      %p159 = scmp.ne.s32.totalorder %s150, %s151
      %p160 = scmp.eq.s32.totalorder %s25, 0
      %p161 = por %p159, %p160
      %p162 = scmp.ne.s32.totalorder %s150, %s151
      %p163 = scmp.eq.s32.totalorder %s26, 1
      %p164 = por %p162, %p163
      %p166 = scmp.ne.s32.totalorder %s151, %s165
      %p167 = scmp.eq.s32.totalorder %s26, 0
      %p168 = por %p166, %p167
      %s170 = sadd.s32 %s169, 1
      %p173 = scmp.eq.s32.totalorder %s20, 1
      %p174 = scmp.ne.s32.totalorder %s169, %s171
      %p175 = scmp.eq.s32.totalorder %s20, 0
      %p176 = por %p174, %p175
      %p177 = scmp.ne.s32.totalorder %s169, %s171
      %p178 = scmp.eq.s32.totalorder %s25, 1
      %p179 = por %p177, %p178
      %p180 = scmp.ne.s32.totalorder %s171, %s172
      %p181 = scmp.eq.s32.totalorder %s25, 0
      %p182 = por %p180, %p181
      %p183 = scmp.ne.s32.totalorder %s171, %s172
      %p184 = scmp.eq.s32.totalorder %s26, 1
      %p185 = por %p183, %p184
      %p187 = scmp.ne.s32.totalorder %s172, %s186
      %p188 = scmp.eq.s32.totalorder %s26, 0
      %p189 = por %p187, %p188
      %s191 = sadd.s32 %s190, 1
      %p194 = scmp.eq.s32.totalorder %s20, 1
      %p195 = scmp.ne.s32.totalorder %s190, %s192
      %p196 = scmp.eq.s32.totalorder %s20, 0
      %p197 = por %p195, %p196
      %p198 = scmp.ne.s32.totalorder %s190, %s192
      %p199 = scmp.eq.s32.totalorder %s25, 1
      %p200 = por %p198, %p199
      %p201 = scmp.ne.s32.totalorder %s192, %s193
      %p202 = scmp.eq.s32.totalorder %s25, 0
      %p203 = por %p201, %p202
      %p204 = scmp.ne.s32.totalorder %s192, %s193
      %p205 = scmp.eq.s32.totalorder %s26, 1
      %p206 = por %p204, %p205
      %p208 = scmp.ne.s32.totalorder %s193, %s207
      %p209 = scmp.eq.s32.totalorder %s26, 0
      %p210 = por %p208, %p209
      %s212 = sadd.s32 %s211, 1
      %p215 = scmp.eq.s32.totalorder %s20, 1
      %p216 = scmp.ne.s32.totalorder %s211, %s213
      %p217 = scmp.eq.s32.totalorder %s20, 0
      %p218 = por %p216, %p217
      %p219 = scmp.ne.s32.totalorder %s211, %s213
      %p220 = scmp.eq.s32.totalorder %s25, 1
      %p221 = por %p219, %p220
      %p222 = scmp.ne.s32.totalorder %s213, %s214
      %p223 = scmp.eq.s32.totalorder %s25, 0
      %p224 = por %p222, %p223
      %p225 = scmp.ne.s32.totalorder %s213, %s214
      %p226 = scmp.eq.s32.totalorder %s26, 1
      %p227 = por %p225, %p226
      %p229 = scmp.ne.s32.totalorder %s214, %s228
      %p230 = scmp.eq.s32.totalorder %s26, 0
      %p231 = por %p229, %p230
      %s233 = sadd.s32 %s232, 1
      %p236 = scmp.eq.s32.totalorder %s20, 1
      %p237 = scmp.ne.s32.totalorder %s232, %s234
      %p238 = scmp.eq.s32.totalorder %s20, 0
      %p239 = por %p237, %p238
      %p240 = scmp.ne.s32.totalorder %s232, %s234
      %p241 = scmp.eq.s32.totalorder %s25, 1
      %p242 = por %p240, %p241
      %p243 = scmp.ne.s32.totalorder %s234, %s235
      %p244 = scmp.eq.s32.totalorder %s25, 0
      %p245 = por %p243, %p244
      %p246 = scmp.ne.s32.totalorder %s234, %s235
      %p247 = scmp.eq.s32.totalorder %s26, 1
      %p248 = por %p246, %p247
      %p250 = scmp.ne.s32.totalorder %s235, %s249
      %p251 = scmp.eq.s32.totalorder %s26, 0
      %p252 = por %p250, %p251
      %s254 = sadd.s32 %s253, 1
      %p257 = scmp.eq.s32.totalorder %s20, 1
      %p258 = scmp.ne.s32.totalorder %s253, %s255
      %p259 = scmp.eq.s32.totalorder %s20, 0
      %p260 = por %p258, %p259
      %p261 = scmp.ne.s32.totalorder %s253, %s255
      %p262 = scmp.eq.s32.totalorder %s25, 1
      %p263 = por %p261, %p262
      %p264 = scmp.ne.s32.totalorder %s255, %s256
      %p265 = scmp.eq.s32.totalorder %s25, 0
      %p266 = por %p264, %p265
      %p267 = scmp.ne.s32.totalorder %s255, %s256
      %p268 = scmp.eq.s32.totalorder %s26, 1
      %p269 = por %p267, %p268
      %p271 = scmp.ne.s32.totalorder %s256, %s270
      %p272 = scmp.eq.s32.totalorder %s26, 0
      %p273 = por %p271, %p272
      %s274 = ssub.s32 %s20, %s27
      %p275 = scmp.eq.s32.totalorder %s274, 0
      %s277 = sadd.s32 %s276, 1
      %s278 = scalar_select %p275, %s276, %s277
      %p281 = pneg %p275
      %p282 = scmp.eq.s32.totalorder %s20, 1
      %p283 = por %p281, %p282
      %p284 = scmp.ne.s32.totalorder %s276, %s279
      %p285 = scmp.eq.s32.totalorder %s20, 0
      %p286 = por %p284, %p285
      %p287 = scmp.ne.s32.totalorder %s276, %s279
      %p288 = scmp.eq.s32.totalorder %s25, 1
      %p289 = por %p287, %p288
      %p290 = scmp.ne.s32.totalorder %s279, %s280
      %p291 = scmp.eq.s32.totalorder %s25, 0
      %p292 = por %p290, %p291
      %p293 = scmp.ne.s32.totalorder %s279, %s280
      %p294 = scmp.eq.s32.totalorder %s26, 1
      %p295 = por %p293, %p294
      %p297 = scmp.ne.s32.totalorder %s280, %s296
      %p298 = scmp.eq.s32.totalorder %s26, 0
      %p299 = por %p297, %p298
      %p300 = scmp.le.s32.totalorder 1, %s20
      %p301 = scmp.lt.s32.totalorder %s20, 3
      %p302 = pnand %p300, %p301
      %p303 = pneg %p302
      // Predicated region
      $region9: #{tpu_custom_call.1} parent=5 // pred_check
        _
      $region10: #{tpu_custom_call.1} parent=5 // pred_check_branch
        %305 = sbr.rel (%p302) target = $region12
      $region11: #{tpu_custom_call.1} parent=5 // pred_region
        %s306 = ssub.s32 %s20, 1
        // Predicated region
        $region13: #{tpu_custom_call.1} parent=11 // pred_check
          %p307 = pneg %p119
        $region14: #{tpu_custom_call.1} parent=11 // pred_check_branch
          %309 = sbr.rel (%p307) target = $region16
        $region15: #{tpu_custom_call.1} parent=11 // pred_region
          _
        $region16: #{tpu_custom_call.1} parent=11 // pred_fallthru
          _
        // Predicated region
        $region17: #{tpu_custom_call.1} parent=11 // pred_check
          %p310 = pneg %p140
        $region18: #{tpu_custom_call.1} parent=11 // pred_check_branch
          %312 = sbr.rel (%p310) target = $region20
        $region19: #{tpu_custom_call.1} parent=11 // pred_region
          _
        $region20: #{tpu_custom_call.1} parent=11 // pred_fallthru
          _
        // Predicated region
        $region21: #{tpu_custom_call.1} parent=11 // pred_check
          %p313 = pneg %p161
        $region22: #{tpu_custom_call.1} parent=11 // pred_check_branch
          %315 = sbr.rel (%p313) target = $region24
        $region23: #{tpu_custom_call.1} parent=11 // pred_region
          _
        $region24: #{tpu_custom_call.1} parent=11 // pred_fallthru
          _
        // Predicated region
        $region25: #{tpu_custom_call.1} parent=11 // pred_check
          %p316 = pneg %p182
        $region26: #{tpu_custom_call.1} parent=11 // pred_check_branch
          %318 = sbr.rel (%p316) target = $region28
        $region27: #{tpu_custom_call.1} parent=11 // pred_region
          _
        $region28: #{tpu_custom_call.1} parent=11 // pred_fallthru
          _
        // Predicated region
        $region29: #{tpu_custom_call.1} parent=11 // pred_check
          %p319 = pneg %p203
        $region30: #{tpu_custom_call.1} parent=11 // pred_check_branch
          %321 = sbr.rel (%p319) target = $region32
        $region31: #{tpu_custom_call.1} parent=11 // pred_region
          _
        $region32: #{tpu_custom_call.1} parent=11 // pred_fallthru
          _
        // Predicated region
        $region33: #{tpu_custom_call.1} parent=11 // pred_check
          %p322 = pneg %p224
        $region34: #{tpu_custom_call.1} parent=11 // pred_check_branch
          %324 = sbr.rel (%p322) target = $region36
        $region35: #{tpu_custom_call.1} parent=11 // pred_region
          _
        $region36: #{tpu_custom_call.1} parent=11 // pred_fallthru
          _
        // Predicated region
        $region37: #{tpu_custom_call.1} parent=11 // pred_check
          %p325 = pneg %p245
        $region38: #{tpu_custom_call.1} parent=11 // pred_check_branch
          %327 = sbr.rel (%p325) target = $region40
        $region39: #{tpu_custom_call.1} parent=11 // pred_region
          _
        $region40: #{tpu_custom_call.1} parent=11 // pred_fallthru
          _
        // Predicated region
        $region41: #{tpu_custom_call.1} parent=11 // pred_check
          %p328 = pneg %p266
        $region42: #{tpu_custom_call.1} parent=11 // pred_check_branch
          %330 = sbr.rel (%p328) target = $region44
        $region43: #{tpu_custom_call.1} parent=11 // pred_region
          _
        $region44: #{tpu_custom_call.1} parent=11 // pred_fallthru
          _
      $region12: #{tpu_custom_call.1} parent=5 // pred_fallthru
        _
      %p331 = scmp.lt.s32.totalorder %s20, 2
      // Predicated region
      $region45: #{tpu_custom_call.1} parent=5 // pred_check
        %p332 = pneg %p331
      $region46: #{tpu_custom_call.1} parent=5 // pred_check_branch
        %334 = sbr.rel (%p332) target = $region48
      $region47: #{tpu_custom_call.1} parent=5 // pred_region
        // Predicated region
        $region49: #{tpu_custom_call.1} parent=47 // pred_check
          %p335 = pneg %p40
        $region50: #{tpu_custom_call.1} parent=47 // pred_check_branch
          %337 = sbr.rel (%p335) target = $region52
        $region51: #{tpu_custom_call.1} parent=47 // pred_region
          %s338 = smul.u32 16, %s20
          %p339 = scmp.lt.s32.totalorder %s338, 31
          %s340 = scalar_select %p339, %s338, 31
          %s341 = smul.addr %s340, 8
          %s342 = scalar_lea.vmem %s0, %s341
          %s343 = smul.u32 16, %s20
        $region52: #{tpu_custom_call.1} parent=47 // pred_fallthru
          _
        // Predicated region
        $region53: #{tpu_custom_call.1} parent=47 // pred_check
          %p344 = pneg %p66
        $region54: #{tpu_custom_call.1} parent=47 // pred_check_branch
          %346 = sbr.rel (%p344) target = $region56
        $region55: #{tpu_custom_call.1} parent=47 // pred_region
          %s347 = smul.u32 16, %s20
          %p348 = scmp.lt.s32.totalorder %s347, 31
          %s349 = scalar_select %p348, %s347, 31
          %s350 = smul.addr %s349, 8
          %s351 = scalar_lea.vmem %s1, %s350
          %s352 = smul.u32 16, %s20
        $region56: #{tpu_custom_call.1} parent=47 // pred_fallthru
          _
        // Predicated region
        $region57: #{tpu_custom_call.1} parent=47 // pred_check
          %p353 = pneg %p92
        $region58: #{tpu_custom_call.1} parent=47 // pred_check_branch
          %355 = sbr.rel (%p353) target = $region60
        $region59: #{tpu_custom_call.1} parent=47 // pred_region
          %s356 = smul.u32 16, %s20
          %p357 = scmp.lt.s32.totalorder %s356, 31
          %s358 = scalar_select %p357, %s356, 31
          %s359 = smul.addr %s358, 8
          %s360 = scalar_lea.vmem %s2, %s359
          %s361 = smul.u32 16, %s20
        $region60: #{tpu_custom_call.1} parent=47 // pred_fallthru
          _
      $region48: #{tpu_custom_call.1} parent=5 // pred_fallthru
        _
      %p362 = scmp.le.s32.totalorder 1, %s20
      %p363 = scmp.lt.s32.totalorder %s20, 3
      %p364 = pnand %p362, %p363
      %p365 = pneg %p364
      // Predicated region
      $region61: #{tpu_custom_call.1} parent=5 // pred_check
        _
      $region62: #{tpu_custom_call.1} parent=5 // pred_check_branch
        %367 = sbr.rel (%p364) target = $region64
      $region63: #{tpu_custom_call.1} parent=5 // pred_region
        %s368 = ssub.s32 %s20, 1
        %s369 = smul.u32 16, %s25
        %p370 = scmp.lt.s32.totalorder %s369, 31
        %s371 = scalar_select %p370, %s369, 31
        %s372 = smul.addr %s371, 8
        %s373 = scalar_lea.vmem %s0, %s372
        %p374 = pneg %p46
        %p375 = pneg %p43
        %s376 = smul.u32 16, %s25
        %p377 = scmp.lt.s32.totalorder %s376, 31
        %s378 = scalar_select %p377, %s376, 31
        %s379 = smul.addr %s378, 8
        %s380 = scalar_lea.vmem %s1, %s379
        %p381 = pneg %p72
        %p382 = pneg %p69
        %s383 = smul.u32 16, %s25
        %p384 = scmp.lt.s32.totalorder %s383, 31
        %s385 = scalar_select %p384, %s383, 31
        %s386 = smul.addr %s385, 8
        %s387 = scalar_lea.vmem %s2, %s386
        %p388 = pneg %p98
        %p389 = pneg %p95
        %p390 = pneg %p119
        %p391 = pneg %p116
        %p392 = pneg %p140
        %p393 = pneg %p137
        %p394 = pneg %p161
        %p395 = pneg %p158
        %p396 = pneg %p182
        %p397 = pneg %p179
        %p398 = pneg %p203
        %p399 = pneg %p200
        %p400 = pneg %p224
        %p401 = pneg %p221
        %p402 = pneg %p245
        %p403 = pneg %p242
        %p404 = pneg %p266
        %p405 = pneg %p263
        %p406 = pneg %p292
        %p407 = pneg %p289
        %s408 = sand.u32 %s279, 1
        %s409 = scalar_lea.sflag [#allocation3], %s408
        %s410 = sand.u32 %s279, 1
        %s411 = smul.addr %s410, 128
        %s412 = scalar_lea.vmem [#allocation2], %s411
        %s413 = smul.u32 16, %s25
        %p414 = scmp.lt.s32.totalorder %s413, 31
        %s415 = scalar_select %p414, %s413, 31
        %s416 = smul.addr %s415, 8
        %s417 = scalar_lea.vmem %s0, %s416
        %s418 = smul.u32 16, %s25
        %s419 = smul.u32 16, %s25
        %p420 = scmp.lt.s32.totalorder %s419, 31
        %s421 = scalar_select %p420, %s419, 31
        %s422 = smul.addr %s421, 8
        %s423 = scalar_lea.vmem %s1, %s422
        %s424 = smul.u32 16, %s25
        %s425 = smul.u32 16, %s25
        %p426 = scmp.lt.s32.totalorder %s425, 31
        %s427 = scalar_select %p426, %s425, 31
        %s428 = smul.addr %s427, 8
        %s429 = scalar_lea.vmem %s2, %s428
        %s430 = smul.u32 16, %s25
        %s431 = smul.u32 16, %s25
        %v432 = vld [vmem:[%s417] sm:$0xff]
        %v433 = vld [vmem:[%s417 + $0x8] sm:$0xff]
        %v434 = vld [vmem:[%s417 + $0x10] sm:$0xff]
        %v435 = vld [vmem:[%s417 + $0x18] sm:$0xff]
        %v436 = vld [vmem:[%s417 + $0x20] sm:$0xff]
        %v437 = vld [vmem:[%s417 + $0x28] sm:$0xff]
        %v438 = vld [vmem:[%s417 + $0x30] sm:$0xff]
        %v439 = vld [vmem:[%s417 + $0x38] sm:$0xff]
        %v440 = vld [vmem:[%s417 + $0x40] sm:$0xff]
        %v441 = vld [vmem:[%s417 + $0x48] sm:$0xff]
        %v442 = vld [vmem:[%s417 + $0x50] sm:$0xff]
        %v443 = vld [vmem:[%s417 + $0x58] sm:$0xff]
        %v444 = vld [vmem:[%s417 + $0x60] sm:$0xff]
        %v445 = vld [vmem:[%s417 + $0x68] sm:$0xff]
        %v446 = vld [vmem:[%s417 + $0x70] sm:$0xff]
        %v447 = vld [vmem:[%s417 + $0x78] sm:$0xff]
        %v448 = vld [vmem:[%s3] sm:$0x1]
        %450 = vset.pattern.permute.xlu0 0
        %451 = vperm.xlu0 %450, %v432
        %v452 = vpop.permute.xlu0 %451
        %455 = vset.pattern.permute.xlu0 0
        %456 = vperm.xlu0 %455, %v433
        %v457 = vpop.permute.xlu0 %456
        %460 = vset.pattern.permute.xlu0 0
        %461 = vperm.xlu0 %460, %v434
        %v462 = vpop.permute.xlu0 %461
        %465 = vset.pattern.permute.xlu0 0
        %466 = vperm.xlu0 %465, %v435
        %v467 = vpop.permute.xlu0 %466
        %470 = vset.pattern.permute.xlu0 0
        %471 = vperm.xlu0 %470, %v436
        %v472 = vpop.permute.xlu0 %471
        %475 = vset.pattern.permute.xlu0 0
        %476 = vperm.xlu0 %475, %v437
        %v477 = vpop.permute.xlu0 %476
        %480 = vset.pattern.permute.xlu0 0
        %481 = vperm.xlu0 %480, %v438
        %v482 = vpop.permute.xlu0 %481
        %485 = vset.pattern.permute.xlu0 0
        %486 = vperm.xlu0 %485, %v439
        %v487 = vpop.permute.xlu0 %486
        %490 = vset.pattern.permute.xlu0 0
        %491 = vperm.xlu0 %490, %v440
        %v492 = vpop.permute.xlu0 %491
        %495 = vset.pattern.permute.xlu0 0
        %496 = vperm.xlu0 %495, %v441
        %v497 = vpop.permute.xlu0 %496
        %500 = vset.pattern.permute.xlu0 0
        %501 = vperm.xlu0 %500, %v442
        %v502 = vpop.permute.xlu0 %501
        %505 = vset.pattern.permute.xlu0 0
        %506 = vperm.xlu0 %505, %v443
        %v507 = vpop.permute.xlu0 %506
        %510 = vset.pattern.permute.xlu0 0
        %511 = vperm.xlu0 %510, %v444
        %v512 = vpop.permute.xlu0 %511
        %515 = vset.pattern.permute.xlu0 0
        %516 = vperm.xlu0 %515, %v445
        %v517 = vpop.permute.xlu0 %516
        %520 = vset.pattern.permute.xlu0 0
        %521 = vperm.xlu0 %520, %v446
        %v522 = vpop.permute.xlu0 %521
        %525 = vset.pattern.permute.xlu0 0
        %526 = vperm.xlu0 %525, %v447
        %v527 = vpop.permute.xlu0 %526
        %v529 = vlaneseq
        %v530 = vshrl.u32 %v529, 7
        %v531 = vsub.s32 0, %v530
        %v532 = vrot.slane %v448, %v531
        %v533 = vsub.f32 %v452, %v532
        %v534 = vsub.f32 %v457, %v532
        %v535 = vsub.f32 %v462, %v532
        %v536 = vsub.f32 %v467, %v532
        %v537 = vsub.f32 %v472, %v532
        %v538 = vsub.f32 %v477, %v532
        %v539 = vsub.f32 %v482, %v532
        %v540 = vsub.f32 %v487, %v532
        %v541 = vsub.f32 %v492, %v532
        %v542 = vsub.f32 %v497, %v532
        %v543 = vsub.f32 %v502, %v532
        %v544 = vsub.f32 %v507, %v532
        %v545 = vsub.f32 %v512, %v532
        %v546 = vsub.f32 %v517, %v532
        %v547 = vsub.f32 %v522, %v532
        %v548 = vsub.f32 %v527, %v532
        %v549 = vmul.f32 %v533, %v533
        %v550 = vmul.f32 %v534, %v534
        %v551 = vmul.f32 %v535, %v535
        %v552 = vmul.f32 %v536, %v536
        %v553 = vmul.f32 %v537, %v537
        %v554 = vmul.f32 %v538, %v538
        %v555 = vmul.f32 %v539, %v539
        %v556 = vmul.f32 %v540, %v540
        %v557 = vmul.f32 %v541, %v541
        %v558 = vmul.f32 %v542, %v542
        %v559 = vmul.f32 %v543, %v543
        %v560 = vmul.f32 %v544, %v544
        %v561 = vmul.f32 %v545, %v545
        %v562 = vmul.f32 %v546, %v546
        %v563 = vmul.f32 %v547, %v547
        %v564 = vmul.f32 %v548, %v548
        %v565 = vadd.f32 %v549, 0.0
        %v566 = vadd.f32 %v550, 0.0
        %v567 = vadd.f32 %v551, 0.0
        %v568 = vadd.f32 %v552, 0.0
        %v569 = vadd.f32 %v553, 0.0
        %v570 = vadd.f32 %v554, 0.0
        %v571 = vadd.f32 %v555, 0.0
        %v572 = vadd.f32 %v556, 0.0
        %v573 = vadd.f32 %v557, 0.0
        %v574 = vadd.f32 %v558, 0.0
        %v575 = vadd.f32 %v559, 0.0
        %v576 = vadd.f32 %v560, 0.0
        %v577 = vadd.f32 %v561, 0.0
        %v578 = vadd.f32 %v562, 0.0
        %v579 = vadd.f32 %v563, 0.0
        %v580 = vadd.f32 %v564, 0.0
        %v581 = vld [vmem:[%s3 + $0x1] sm:$0x1]
        %582 = vset.pattern.permute.xlu0 1
        %583 = vperm.xlu0 %582, %v432
        %v584 = vpop.permute.xlu0 %583
        %586 = vset.pattern.permute.xlu0 1
        %587 = vperm.xlu0 %586, %v433
        %v588 = vpop.permute.xlu0 %587
        %590 = vset.pattern.permute.xlu0 1
        %591 = vperm.xlu0 %590, %v434
        %v592 = vpop.permute.xlu0 %591
        %594 = vset.pattern.permute.xlu0 1
        %595 = vperm.xlu0 %594, %v435
        %v596 = vpop.permute.xlu0 %595
        %598 = vset.pattern.permute.xlu0 1
        %599 = vperm.xlu0 %598, %v436
        %v600 = vpop.permute.xlu0 %599
        %602 = vset.pattern.permute.xlu0 1
        %603 = vperm.xlu0 %602, %v437
        %v604 = vpop.permute.xlu0 %603
        %606 = vset.pattern.permute.xlu0 1
        %607 = vperm.xlu0 %606, %v438
        %v608 = vpop.permute.xlu0 %607
        %610 = vset.pattern.permute.xlu0 1
        %611 = vperm.xlu0 %610, %v439
        %v612 = vpop.permute.xlu0 %611
        %614 = vset.pattern.permute.xlu0 1
        %615 = vperm.xlu0 %614, %v440
        %v616 = vpop.permute.xlu0 %615
        %618 = vset.pattern.permute.xlu0 1
        %619 = vperm.xlu0 %618, %v441
        %v620 = vpop.permute.xlu0 %619
        %622 = vset.pattern.permute.xlu0 1
        %623 = vperm.xlu0 %622, %v442
        %v624 = vpop.permute.xlu0 %623
        %626 = vset.pattern.permute.xlu0 1
        %627 = vperm.xlu0 %626, %v443
        %v628 = vpop.permute.xlu0 %627
        %630 = vset.pattern.permute.xlu0 1
        %631 = vperm.xlu0 %630, %v444
        %v632 = vpop.permute.xlu0 %631
        %634 = vset.pattern.permute.xlu0 1
        %635 = vperm.xlu0 %634, %v445
        %v636 = vpop.permute.xlu0 %635
        %638 = vset.pattern.permute.xlu0 1
        %639 = vperm.xlu0 %638, %v446
        %v640 = vpop.permute.xlu0 %639
        %642 = vset.pattern.permute.xlu0 1
        %643 = vperm.xlu0 %642, %v447
        %v644 = vpop.permute.xlu0 %643
        %v646 = vlaneseq
        %v647 = vshrl.u32 %v646, 7
        %v648 = vsub.s32 0, %v647
        %v649 = vrot.slane %v581, %v648
        %v650 = vsub.f32 %v584, %v649
        %v651 = vsub.f32 %v588, %v649
        %v652 = vsub.f32 %v592, %v649
        %v653 = vsub.f32 %v596, %v649
        %v654 = vsub.f32 %v600, %v649
        %v655 = vsub.f32 %v604, %v649
        %v656 = vsub.f32 %v608, %v649
        %v657 = vsub.f32 %v612, %v649
        %v658 = vsub.f32 %v616, %v649
        %v659 = vsub.f32 %v620, %v649
        %v660 = vsub.f32 %v624, %v649
        %v661 = vsub.f32 %v628, %v649
        %v662 = vsub.f32 %v632, %v649
        %v663 = vsub.f32 %v636, %v649
        %v664 = vsub.f32 %v640, %v649
        %v665 = vsub.f32 %v644, %v649
        %v666 = vmul.f32 %v650, %v650
        %v667 = vmul.f32 %v651, %v651
        %v668 = vmul.f32 %v652, %v652
        %v669 = vmul.f32 %v653, %v653
        %v670 = vmul.f32 %v654, %v654
        %v671 = vmul.f32 %v655, %v655
        %v672 = vmul.f32 %v656, %v656
        %v673 = vmul.f32 %v657, %v657
        %v674 = vmul.f32 %v658, %v658
        %v675 = vmul.f32 %v659, %v659
        %v676 = vmul.f32 %v660, %v660
        %v677 = vmul.f32 %v661, %v661
        %v678 = vmul.f32 %v662, %v662
        %v679 = vmul.f32 %v663, %v663
        %v680 = vmul.f32 %v664, %v664
        %v681 = vmul.f32 %v665, %v665
        %v682 = vadd.f32 %v565, %v666
        %v683 = vadd.f32 %v566, %v667
        %v684 = vadd.f32 %v567, %v668
        %v685 = vadd.f32 %v568, %v669
        %v686 = vadd.f32 %v569, %v670
        %v687 = vadd.f32 %v570, %v671
        %v688 = vadd.f32 %v571, %v672
        %v689 = vadd.f32 %v572, %v673
        %v690 = vadd.f32 %v573, %v674
        %v691 = vadd.f32 %v574, %v675
        %v692 = vadd.f32 %v575, %v676
        %v693 = vadd.f32 %v576, %v677
        %v694 = vadd.f32 %v577, %v678
        %v695 = vadd.f32 %v578, %v679
        %v696 = vadd.f32 %v579, %v680
        %v697 = vadd.f32 %v580, %v681
        %v698 = vld [vmem:[%s3 + $0x2] sm:$0x1]
        %699 = vset.pattern.permute.xlu0 2
        %700 = vperm.xlu0 %699, %v432
        %v701 = vpop.permute.xlu0 %700
        %703 = vset.pattern.permute.xlu0 2
        %704 = vperm.xlu0 %703, %v433
        %v705 = vpop.permute.xlu0 %704
        %707 = vset.pattern.permute.xlu0 2
        %708 = vperm.xlu0 %707, %v434
        %v709 = vpop.permute.xlu0 %708
        %711 = vset.pattern.permute.xlu0 2
        %712 = vperm.xlu0 %711, %v435
        %v713 = vpop.permute.xlu0 %712
        %715 = vset.pattern.permute.xlu0 2
        %716 = vperm.xlu0 %715, %v436
        %v717 = vpop.permute.xlu0 %716
        %719 = vset.pattern.permute.xlu0 2
        %720 = vperm.xlu0 %719, %v437
        %v721 = vpop.permute.xlu0 %720
        %723 = vset.pattern.permute.xlu0 2
        %724 = vperm.xlu0 %723, %v438
        %v725 = vpop.permute.xlu0 %724
        %727 = vset.pattern.permute.xlu0 2
        %728 = vperm.xlu0 %727, %v439
        %v729 = vpop.permute.xlu0 %728
        %731 = vset.pattern.permute.xlu0 2
        %732 = vperm.xlu0 %731, %v440
        %v733 = vpop.permute.xlu0 %732
        %735 = vset.pattern.permute.xlu0 2
        %736 = vperm.xlu0 %735, %v441
        %v737 = vpop.permute.xlu0 %736
        %739 = vset.pattern.permute.xlu0 2
        %740 = vperm.xlu0 %739, %v442
        %v741 = vpop.permute.xlu0 %740
        %743 = vset.pattern.permute.xlu0 2
        %744 = vperm.xlu0 %743, %v443
        %v745 = vpop.permute.xlu0 %744
        %747 = vset.pattern.permute.xlu0 2
        %748 = vperm.xlu0 %747, %v444
        %v749 = vpop.permute.xlu0 %748
        %751 = vset.pattern.permute.xlu0 2
        %752 = vperm.xlu0 %751, %v445
        %v753 = vpop.permute.xlu0 %752
        %755 = vset.pattern.permute.xlu0 2
        %756 = vperm.xlu0 %755, %v446
        %v757 = vpop.permute.xlu0 %756
        %759 = vset.pattern.permute.xlu0 2
        %760 = vperm.xlu0 %759, %v447
        %v761 = vpop.permute.xlu0 %760
        %v763 = vlaneseq
        %v764 = vshrl.u32 %v763, 7
        %v765 = vsub.s32 0, %v764
        %v766 = vrot.slane %v698, %v765
        %v767 = vsub.f32 %v701, %v766
        %v768 = vsub.f32 %v705, %v766
        %v769 = vsub.f32 %v709, %v766
        %v770 = vsub.f32 %v713, %v766
        %v771 = vsub.f32 %v717, %v766
        %v772 = vsub.f32 %v721, %v766
        %v773 = vsub.f32 %v725, %v766
        %v774 = vsub.f32 %v729, %v766
        %v775 = vsub.f32 %v733, %v766
        %v776 = vsub.f32 %v737, %v766
        %v777 = vsub.f32 %v741, %v766
        %v778 = vsub.f32 %v745, %v766
        %v779 = vsub.f32 %v749, %v766
        %v780 = vsub.f32 %v753, %v766
        %v781 = vsub.f32 %v757, %v766
        %v782 = vsub.f32 %v761, %v766
        %v783 = vmul.f32 %v767, %v767
        %v784 = vmul.f32 %v768, %v768
        %v785 = vmul.f32 %v769, %v769
        %v786 = vmul.f32 %v770, %v770
        %v787 = vmul.f32 %v771, %v771
        %v788 = vmul.f32 %v772, %v772
        %v789 = vmul.f32 %v773, %v773
        %v790 = vmul.f32 %v774, %v774
        %v791 = vmul.f32 %v775, %v775
        %v792 = vmul.f32 %v776, %v776
        %v793 = vmul.f32 %v777, %v777
        %v794 = vmul.f32 %v778, %v778
        %v795 = vmul.f32 %v779, %v779
        %v796 = vmul.f32 %v780, %v780
        %v797 = vmul.f32 %v781, %v781
        %v798 = vmul.f32 %v782, %v782
        %v799 = vadd.f32 %v682, %v783
        %v800 = vadd.f32 %v683, %v784
        %v801 = vadd.f32 %v684, %v785
        %v802 = vadd.f32 %v685, %v786
        %v803 = vadd.f32 %v686, %v787
        %v804 = vadd.f32 %v687, %v788
        %v805 = vadd.f32 %v688, %v789
        %v806 = vadd.f32 %v689, %v790
        %v807 = vadd.f32 %v690, %v791
        %v808 = vadd.f32 %v691, %v792
        %v809 = vadd.f32 %v692, %v793
        %v810 = vadd.f32 %v693, %v794
        %v811 = vadd.f32 %v694, %v795
        %v812 = vadd.f32 %v695, %v796
        %v813 = vadd.f32 %v696, %v797
        %v814 = vadd.f32 %v697, %v798
        %v815 = vld [vmem:[%s423] sm:$0xff]
        %v816 = vld [vmem:[%s423 + $0x8] sm:$0xff]
        %v817 = vld [vmem:[%s423 + $0x10] sm:$0xff]
        %v818 = vld [vmem:[%s423 + $0x18] sm:$0xff]
        %v819 = vld [vmem:[%s423 + $0x20] sm:$0xff]
        %v820 = vld [vmem:[%s423 + $0x28] sm:$0xff]
        %v821 = vld [vmem:[%s423 + $0x30] sm:$0xff]
        %v822 = vld [vmem:[%s423 + $0x38] sm:$0xff]
        %v823 = vld [vmem:[%s423 + $0x40] sm:$0xff]
        %v824 = vld [vmem:[%s423 + $0x48] sm:$0xff]
        %v825 = vld [vmem:[%s423 + $0x50] sm:$0xff]
        %v826 = vld [vmem:[%s423 + $0x58] sm:$0xff]
        %v827 = vld [vmem:[%s423 + $0x60] sm:$0xff]
        %v828 = vld [vmem:[%s423 + $0x68] sm:$0xff]
        %v829 = vld [vmem:[%s423 + $0x70] sm:$0xff]
        %v830 = vld [vmem:[%s423 + $0x78] sm:$0xff]
        %v831 = vld [vmem:[%s4] sm:$0x1]
        %833 = vset.pattern.permute.xlu0 0
        %834 = vperm.xlu0 %833, %v815
        %v835 = vpop.permute.xlu0 %834
        %838 = vset.pattern.permute.xlu0 0
        %839 = vperm.xlu0 %838, %v816
        %v840 = vpop.permute.xlu0 %839
        %843 = vset.pattern.permute.xlu0 0
        %844 = vperm.xlu0 %843, %v817
        %v845 = vpop.permute.xlu0 %844
        %848 = vset.pattern.permute.xlu0 0
        %849 = vperm.xlu0 %848, %v818
        %v850 = vpop.permute.xlu0 %849
        %853 = vset.pattern.permute.xlu0 0
        %854 = vperm.xlu0 %853, %v819
        %v855 = vpop.permute.xlu0 %854
        %858 = vset.pattern.permute.xlu0 0
        %859 = vperm.xlu0 %858, %v820
        %v860 = vpop.permute.xlu0 %859
        %863 = vset.pattern.permute.xlu0 0
        %864 = vperm.xlu0 %863, %v821
        %v865 = vpop.permute.xlu0 %864
        %868 = vset.pattern.permute.xlu0 0
        %869 = vperm.xlu0 %868, %v822
        %v870 = vpop.permute.xlu0 %869
        %873 = vset.pattern.permute.xlu0 0
        %874 = vperm.xlu0 %873, %v823
        %v875 = vpop.permute.xlu0 %874
        %878 = vset.pattern.permute.xlu0 0
        %879 = vperm.xlu0 %878, %v824
        %v880 = vpop.permute.xlu0 %879
        %883 = vset.pattern.permute.xlu0 0
        %884 = vperm.xlu0 %883, %v825
        %v885 = vpop.permute.xlu0 %884
        %888 = vset.pattern.permute.xlu0 0
        %889 = vperm.xlu0 %888, %v826
        %v890 = vpop.permute.xlu0 %889
        %893 = vset.pattern.permute.xlu0 0
        %894 = vperm.xlu0 %893, %v827
        %v895 = vpop.permute.xlu0 %894
        %898 = vset.pattern.permute.xlu0 0
        %899 = vperm.xlu0 %898, %v828
        %v900 = vpop.permute.xlu0 %899
        %903 = vset.pattern.permute.xlu0 0
        %904 = vperm.xlu0 %903, %v829
        %v905 = vpop.permute.xlu0 %904
        %908 = vset.pattern.permute.xlu0 0
        %909 = vperm.xlu0 %908, %v830
        %v910 = vpop.permute.xlu0 %909
        %v913 = vlaneseq
        %v914 = vshrl.u32 %v913, 7
        %v915 = vsub.s32 0, %v914
        %v916 = vrot.slane %v831, %v915
        %v918 = vsub.f32 %v835, %v916
        %v919 = vsub.f32 %v840, %v916
        %v920 = vsub.f32 %v845, %v916
        %v921 = vsub.f32 %v850, %v916
        %v922 = vsub.f32 %v855, %v916
        %v923 = vsub.f32 %v860, %v916
        %v924 = vsub.f32 %v865, %v916
        %v925 = vsub.f32 %v870, %v916
        %v926 = vsub.f32 %v875, %v916
        %v927 = vsub.f32 %v880, %v916
        %v928 = vsub.f32 %v885, %v916
        %v929 = vsub.f32 %v890, %v916
        %v930 = vsub.f32 %v895, %v916
        %v931 = vsub.f32 %v900, %v916
        %v932 = vsub.f32 %v905, %v916
        %v933 = vsub.f32 %v910, %v916
        %v934 = vmul.f32 %v918, %v918
        %v935 = vmul.f32 %v919, %v919
        %v936 = vmul.f32 %v920, %v920
        %v937 = vmul.f32 %v921, %v921
        %v938 = vmul.f32 %v922, %v922
        %v939 = vmul.f32 %v923, %v923
        %v940 = vmul.f32 %v924, %v924
        %v941 = vmul.f32 %v925, %v925
        %v942 = vmul.f32 %v926, %v926
        %v943 = vmul.f32 %v927, %v927
        %v944 = vmul.f32 %v928, %v928
        %v945 = vmul.f32 %v929, %v929
        %v946 = vmul.f32 %v930, %v930
        %v947 = vmul.f32 %v931, %v931
        %v948 = vmul.f32 %v932, %v932
        %v949 = vmul.f32 %v933, %v933
        %vm950 = vcmp.gt.f32.partialorder %v934, 0.5
        %vm951 = vcmp.gt.f32.partialorder %v935, 0.5
        %vm952 = vcmp.gt.f32.partialorder %v936, 0.5
        %vm953 = vcmp.gt.f32.partialorder %v937, 0.5
        %vm954 = vcmp.gt.f32.partialorder %v938, 0.5
        %vm955 = vcmp.gt.f32.partialorder %v939, 0.5
        %vm956 = vcmp.gt.f32.partialorder %v940, 0.5
        %vm957 = vcmp.gt.f32.partialorder %v941, 0.5
        %vm958 = vcmp.gt.f32.partialorder %v942, 0.5
        %vm959 = vcmp.gt.f32.partialorder %v943, 0.5
        %vm960 = vcmp.gt.f32.partialorder %v944, 0.5
        %vm961 = vcmp.gt.f32.partialorder %v945, 0.5
        %vm962 = vcmp.gt.f32.partialorder %v946, 0.5
        %vm963 = vcmp.gt.f32.partialorder %v947, 0.5
        %vm964 = vcmp.gt.f32.partialorder %v948, 0.5
        %vm965 = vcmp.gt.f32.partialorder %v949, 0.5
        %v966 = vsel %vm950, 1e+09, 0.0
        %v967 = vsel %vm951, 1e+09, 0.0
        %v968 = vsel %vm952, 1e+09, 0.0
        %v969 = vsel %vm953, 1e+09, 0.0
        %v970 = vsel %vm954, 1e+09, 0.0
        %v971 = vsel %vm955, 1e+09, 0.0
        %v972 = vsel %vm956, 1e+09, 0.0
        %v973 = vsel %vm957, 1e+09, 0.0
        %v974 = vsel %vm958, 1e+09, 0.0
        %v975 = vsel %vm959, 1e+09, 0.0
        %v976 = vsel %vm960, 1e+09, 0.0
        %v977 = vsel %vm961, 1e+09, 0.0
        %v978 = vsel %vm962, 1e+09, 0.0
        %v979 = vsel %vm963, 1e+09, 0.0
        %v980 = vsel %vm964, 1e+09, 0.0
        %v981 = vsel %vm965, 1e+09, 0.0
        %v982 = vadd.f32 %v799, %v966
        %v983 = vadd.f32 %v800, %v967
        %v984 = vadd.f32 %v801, %v968
        %v985 = vadd.f32 %v802, %v969
        %v986 = vadd.f32 %v803, %v970
        %v987 = vadd.f32 %v804, %v971
        %v988 = vadd.f32 %v805, %v972
        %v989 = vadd.f32 %v806, %v973
        %v990 = vadd.f32 %v807, %v974
        %v991 = vadd.f32 %v808, %v975
        %v992 = vadd.f32 %v809, %v976
        %v993 = vadd.f32 %v810, %v977
        %v994 = vadd.f32 %v811, %v978
        %v995 = vadd.f32 %v812, %v979
        %v996 = vadd.f32 %v813, %v980
        %v997 = vadd.f32 %v814, %v981
        %v998 = vlaneseq
        %v999 = vand.u32 %v998, 127
        %1000 = vmin.xlane.f32.xlu0 %v982
        %v1001 = vpop.xlane.xlu0 %1000
        %1002 = vmin.xlane.f32.xlu0 %v983
        %v1003 = vpop.xlane.xlu0 %1002
        %1004 = vmin.xlane.f32.xlu0 %v984
        %v1005 = vpop.xlane.xlu0 %1004
        %1006 = vmin.xlane.f32.xlu0 %v985
        %v1007 = vpop.xlane.xlu0 %1006
        %1008 = vmin.xlane.f32.xlu0 %v986
        %v1009 = vpop.xlane.xlu0 %1008
        %1010 = vmin.xlane.f32.xlu0 %v987
        %v1011 = vpop.xlane.xlu0 %1010
        %1012 = vmin.xlane.f32.xlu0 %v988
        %v1013 = vpop.xlane.xlu0 %1012
        %1014 = vmin.xlane.f32.xlu0 %v989
        %v1015 = vpop.xlane.xlu0 %1014
        %1016 = vmin.xlane.f32.xlu0 %v990
        %v1017 = vpop.xlane.xlu0 %1016
        %1018 = vmin.xlane.f32.xlu0 %v991
        %v1019 = vpop.xlane.xlu0 %1018
        %1020 = vmin.xlane.f32.xlu0 %v992
        %v1021 = vpop.xlane.xlu0 %1020
        %1022 = vmin.xlane.f32.xlu0 %v993
        %v1023 = vpop.xlane.xlu0 %1022
        %1024 = vmin.xlane.f32.xlu0 %v994
        %v1025 = vpop.xlane.xlu0 %1024
        %1026 = vmin.xlane.f32.xlu0 %v995
        %v1027 = vpop.xlane.xlu0 %1026
        %1028 = vmin.xlane.f32.xlu0 %v996
        %v1029 = vpop.xlane.xlu0 %1028
        %1030 = vmin.xlane.f32.xlu0 %v997
        %v1031 = vpop.xlane.xlu0 %1030
        %vm1032 = vcmp.le.f32.partialorder %v982, %v1001
        %vm1033 = vcmp.le.f32.partialorder %v983, %v1003
        %vm1034 = vcmp.le.f32.partialorder %v984, %v1005
        %vm1035 = vcmp.le.f32.partialorder %v985, %v1007
        %vm1036 = vcmp.le.f32.partialorder %v986, %v1009
        %vm1037 = vcmp.le.f32.partialorder %v987, %v1011
        %vm1038 = vcmp.le.f32.partialorder %v988, %v1013
        %vm1039 = vcmp.le.f32.partialorder %v989, %v1015
        %vm1040 = vcmp.le.f32.partialorder %v990, %v1017
        %vm1041 = vcmp.le.f32.partialorder %v991, %v1019
        %vm1042 = vcmp.le.f32.partialorder %v992, %v1021
        %vm1043 = vcmp.le.f32.partialorder %v993, %v1023
        %vm1044 = vcmp.le.f32.partialorder %v994, %v1025
        %vm1045 = vcmp.le.f32.partialorder %v995, %v1027
        %vm1046 = vcmp.le.f32.partialorder %v996, %v1029
        %vm1047 = vcmp.le.f32.partialorder %v997, %v1031
        %v1048 = vsel %vm1032, %v999, 128
        %v1049 = vsel %vm1033, %v999, 128
        %v1050 = vsel %vm1034, %v999, 128
        %v1051 = vsel %vm1035, %v999, 128
        %v1052 = vsel %vm1036, %v999, 128
        %v1053 = vsel %vm1037, %v999, 128
        %v1054 = vsel %vm1038, %v999, 128
        %v1055 = vsel %vm1039, %v999, 128
        %v1056 = vsel %vm1040, %v999, 128
        %v1057 = vsel %vm1041, %v999, 128
        %v1058 = vsel %vm1042, %v999, 128
        %v1059 = vsel %vm1043, %v999, 128
        %v1060 = vsel %vm1044, %v999, 128
        %v1061 = vsel %vm1045, %v999, 128
        %v1062 = vsel %vm1046, %v999, 128
        %v1063 = vsel %vm1047, %v999, 128
        %v1064 = vand.u32 %v1048, 65535
        %v1065 = vshra.s32 %v1048, 16
        %v1066 = vcvt.s32.f32 %v1064
        %v1067 = vcvt.s32.f32 %v1065
        %1068 = vmin.xlane.f32.xlu0 %v1067
        %v1069 = vpop.xlane.xlu0 %1068
        %vm1070 = vcmp.eq.f32.partialorder %v1067, %v1069
        %v1071 = vsel %vm1070, %v1066, inf
        %1072 = vmin.xlane.f32.xlu0 %v1071
        %v1073 = vpop.xlane.xlu0 %1072
        %v1074 = vcvt.f32.s32 %v1073
        %v1075 = vcvt.f32.s32 %v1069
        %v1076 = vshll.u32 %v1075, 16
        %v1077 = vadd.s32 %v1076, %v1074
        %v1078 = vand.u32 %v1049, 65535
        %v1079 = vshra.s32 %v1049, 16
        %v1080 = vcvt.s32.f32 %v1078
        %v1081 = vcvt.s32.f32 %v1079
        %1082 = vmin.xlane.f32.xlu0 %v1081
        %v1083 = vpop.xlane.xlu0 %1082
        %vm1084 = vcmp.eq.f32.partialorder %v1081, %v1083
        %v1085 = vsel %vm1084, %v1080, inf
        %1086 = vmin.xlane.f32.xlu0 %v1085
        %v1087 = vpop.xlane.xlu0 %1086
        %v1088 = vcvt.f32.s32 %v1087
        %v1089 = vcvt.f32.s32 %v1083
        %v1090 = vshll.u32 %v1089, 16
        %v1091 = vadd.s32 %v1090, %v1088
        %v1092 = vand.u32 %v1050, 65535
        %v1093 = vshra.s32 %v1050, 16
        %v1094 = vcvt.s32.f32 %v1092
        %v1095 = vcvt.s32.f32 %v1093
        %1096 = vmin.xlane.f32.xlu0 %v1095
        %v1097 = vpop.xlane.xlu0 %1096
        %vm1098 = vcmp.eq.f32.partialorder %v1095, %v1097
        %v1099 = vsel %vm1098, %v1094, inf
        %1100 = vmin.xlane.f32.xlu0 %v1099
        %v1101 = vpop.xlane.xlu0 %1100
        %v1102 = vcvt.f32.s32 %v1101
        %v1103 = vcvt.f32.s32 %v1097
        %v1104 = vshll.u32 %v1103, 16
        %v1105 = vadd.s32 %v1104, %v1102
        %v1106 = vand.u32 %v1051, 65535
        %v1107 = vshra.s32 %v1051, 16
        %v1108 = vcvt.s32.f32 %v1106
        %v1109 = vcvt.s32.f32 %v1107
        %1110 = vmin.xlane.f32.xlu0 %v1109
        %v1111 = vpop.xlane.xlu0 %1110
        %vm1112 = vcmp.eq.f32.partialorder %v1109, %v1111
        %v1113 = vsel %vm1112, %v1108, inf
        %1114 = vmin.xlane.f32.xlu0 %v1113
        %v1115 = vpop.xlane.xlu0 %1114
        %v1116 = vcvt.f32.s32 %v1115
        %v1117 = vcvt.f32.s32 %v1111
        %v1118 = vshll.u32 %v1117, 16
        %v1119 = vadd.s32 %v1118, %v1116
        %v1120 = vand.u32 %v1052, 65535
        %v1121 = vshra.s32 %v1052, 16
        %v1122 = vcvt.s32.f32 %v1120
        %v1123 = vcvt.s32.f32 %v1121
        %1124 = vmin.xlane.f32.xlu0 %v1123
        %v1125 = vpop.xlane.xlu0 %1124
        %vm1126 = vcmp.eq.f32.partialorder %v1123, %v1125
        %v1127 = vsel %vm1126, %v1122, inf
        %1128 = vmin.xlane.f32.xlu0 %v1127
        %v1129 = vpop.xlane.xlu0 %1128
        %v1130 = vcvt.f32.s32 %v1129
        %v1131 = vcvt.f32.s32 %v1125
        %v1132 = vshll.u32 %v1131, 16
        %v1133 = vadd.s32 %v1132, %v1130
        %v1134 = vand.u32 %v1053, 65535
        %v1135 = vshra.s32 %v1053, 16
        %v1136 = vcvt.s32.f32 %v1134
        %v1137 = vcvt.s32.f32 %v1135
        %1138 = vmin.xlane.f32.xlu0 %v1137
        %v1139 = vpop.xlane.xlu0 %1138
        %vm1140 = vcmp.eq.f32.partialorder %v1137, %v1139
        %v1141 = vsel %vm1140, %v1136, inf
        %1142 = vmin.xlane.f32.xlu0 %v1141
        %v1143 = vpop.xlane.xlu0 %1142
        %v1144 = vcvt.f32.s32 %v1143
        %v1145 = vcvt.f32.s32 %v1139
        %v1146 = vshll.u32 %v1145, 16
        %v1147 = vadd.s32 %v1146, %v1144
        %v1148 = vand.u32 %v1054, 65535
        %v1149 = vshra.s32 %v1054, 16
        %v1150 = vcvt.s32.f32 %v1148
        %v1151 = vcvt.s32.f32 %v1149
        %1152 = vmin.xlane.f32.xlu0 %v1151
        %v1153 = vpop.xlane.xlu0 %1152
        %vm1154 = vcmp.eq.f32.partialorder %v1151, %v1153
        %v1155 = vsel %vm1154, %v1150, inf
        %1156 = vmin.xlane.f32.xlu0 %v1155
        %v1157 = vpop.xlane.xlu0 %1156
        %v1158 = vcvt.f32.s32 %v1157
        %v1159 = vcvt.f32.s32 %v1153
        %v1160 = vshll.u32 %v1159, 16
        %v1161 = vadd.s32 %v1160, %v1158
        %v1162 = vand.u32 %v1055, 65535
        %v1163 = vshra.s32 %v1055, 16
        %v1164 = vcvt.s32.f32 %v1162
        %v1165 = vcvt.s32.f32 %v1163
        %1166 = vmin.xlane.f32.xlu0 %v1165
        %v1167 = vpop.xlane.xlu0 %1166
        %vm1168 = vcmp.eq.f32.partialorder %v1165, %v1167
        %v1169 = vsel %vm1168, %v1164, inf
        %1170 = vmin.xlane.f32.xlu0 %v1169
        %v1171 = vpop.xlane.xlu0 %1170
        %v1172 = vcvt.f32.s32 %v1171
        %v1173 = vcvt.f32.s32 %v1167
        %v1174 = vshll.u32 %v1173, 16
        %v1175 = vadd.s32 %v1174, %v1172
        %v1176 = vand.u32 %v1056, 65535
        %v1177 = vshra.s32 %v1056, 16
        %v1178 = vcvt.s32.f32 %v1176
        %v1179 = vcvt.s32.f32 %v1177
        %1180 = vmin.xlane.f32.xlu0 %v1179
        %v1181 = vpop.xlane.xlu0 %1180
        %vm1182 = vcmp.eq.f32.partialorder %v1179, %v1181
        %v1183 = vsel %vm1182, %v1178, inf
        %1184 = vmin.xlane.f32.xlu0 %v1183
        %v1185 = vpop.xlane.xlu0 %1184
        %v1186 = vcvt.f32.s32 %v1185
        %v1187 = vcvt.f32.s32 %v1181
        %v1188 = vshll.u32 %v1187, 16
        %v1189 = vadd.s32 %v1188, %v1186
        %v1190 = vand.u32 %v1057, 65535
        %v1191 = vshra.s32 %v1057, 16
        %v1192 = vcvt.s32.f32 %v1190
        %v1193 = vcvt.s32.f32 %v1191
        %1194 = vmin.xlane.f32.xlu0 %v1193
        %v1195 = vpop.xlane.xlu0 %1194
        %vm1196 = vcmp.eq.f32.partialorder %v1193, %v1195
        %v1197 = vsel %vm1196, %v1192, inf
        %1198 = vmin.xlane.f32.xlu0 %v1197
        %v1199 = vpop.xlane.xlu0 %1198
        %v1200 = vcvt.f32.s32 %v1199
        %v1201 = vcvt.f32.s32 %v1195
        %v1202 = vshll.u32 %v1201, 16
        %v1203 = vadd.s32 %v1202, %v1200
        %v1204 = vand.u32 %v1058, 65535
        %v1205 = vshra.s32 %v1058, 16
        %v1206 = vcvt.s32.f32 %v1204
        %v1207 = vcvt.s32.f32 %v1205
        %1208 = vmin.xlane.f32.xlu0 %v1207
        %v1209 = vpop.xlane.xlu0 %1208
        %vm1210 = vcmp.eq.f32.partialorder %v1207, %v1209
        %v1211 = vsel %vm1210, %v1206, inf
        %1212 = vmin.xlane.f32.xlu0 %v1211
        %v1213 = vpop.xlane.xlu0 %1212
        %v1214 = vcvt.f32.s32 %v1213
        %v1215 = vcvt.f32.s32 %v1209
        %v1216 = vshll.u32 %v1215, 16
        %v1217 = vadd.s32 %v1216, %v1214
        %v1218 = vand.u32 %v1059, 65535
        %v1219 = vshra.s32 %v1059, 16
        %v1220 = vcvt.s32.f32 %v1218
        %v1221 = vcvt.s32.f32 %v1219
        %1222 = vmin.xlane.f32.xlu0 %v1221
        %v1223 = vpop.xlane.xlu0 %1222
        %vm1224 = vcmp.eq.f32.partialorder %v1221, %v1223
        %v1225 = vsel %vm1224, %v1220, inf
        %1226 = vmin.xlane.f32.xlu0 %v1225
        %v1227 = vpop.xlane.xlu0 %1226
        %v1228 = vcvt.f32.s32 %v1227
        %v1229 = vcvt.f32.s32 %v1223
        %v1230 = vshll.u32 %v1229, 16
        %v1231 = vadd.s32 %v1230, %v1228
        %v1232 = vand.u32 %v1060, 65535
        %v1233 = vshra.s32 %v1060, 16
        %v1234 = vcvt.s32.f32 %v1232
        %v1235 = vcvt.s32.f32 %v1233
        %1236 = vmin.xlane.f32.xlu0 %v1235
        %v1237 = vpop.xlane.xlu0 %1236
        %vm1238 = vcmp.eq.f32.partialorder %v1235, %v1237
        %v1239 = vsel %vm1238, %v1234, inf
        %1240 = vmin.xlane.f32.xlu0 %v1239
        %v1241 = vpop.xlane.xlu0 %1240
        %v1242 = vcvt.f32.s32 %v1241
        %v1243 = vcvt.f32.s32 %v1237
        %v1244 = vshll.u32 %v1243, 16
        %v1245 = vadd.s32 %v1244, %v1242
        %v1246 = vand.u32 %v1061, 65535
        %v1247 = vshra.s32 %v1061, 16
        %v1248 = vcvt.s32.f32 %v1246
        %v1249 = vcvt.s32.f32 %v1247
        %1250 = vmin.xlane.f32.xlu0 %v1249
        %v1251 = vpop.xlane.xlu0 %1250
        %vm1252 = vcmp.eq.f32.partialorder %v1249, %v1251
        %v1253 = vsel %vm1252, %v1248, inf
        %1254 = vmin.xlane.f32.xlu0 %v1253
        %v1255 = vpop.xlane.xlu0 %1254
        %v1256 = vcvt.f32.s32 %v1255
        %v1257 = vcvt.f32.s32 %v1251
        %v1258 = vshll.u32 %v1257, 16
        %v1259 = vadd.s32 %v1258, %v1256
        %v1260 = vand.u32 %v1062, 65535
        %v1261 = vshra.s32 %v1062, 16
        %v1262 = vcvt.s32.f32 %v1260
        %v1263 = vcvt.s32.f32 %v1261
        %1264 = vmin.xlane.f32.xlu0 %v1263
        %v1265 = vpop.xlane.xlu0 %1264
        %vm1266 = vcmp.eq.f32.partialorder %v1263, %v1265
        %v1267 = vsel %vm1266, %v1262, inf
        %1268 = vmin.xlane.f32.xlu0 %v1267
        %v1269 = vpop.xlane.xlu0 %1268
        %v1270 = vcvt.f32.s32 %v1269
        %v1271 = vcvt.f32.s32 %v1265
        %v1272 = vshll.u32 %v1271, 16
        %v1273 = vadd.s32 %v1272, %v1270
        %v1274 = vand.u32 %v1063, 65535
        %v1275 = vshra.s32 %v1063, 16
        %v1276 = vcvt.s32.f32 %v1274
        %v1277 = vcvt.s32.f32 %v1275
        %1278 = vmin.xlane.f32.xlu0 %v1277
        %v1279 = vpop.xlane.xlu0 %1278
        %vm1280 = vcmp.eq.f32.partialorder %v1277, %v1279
        %v1281 = vsel %vm1280, %v1276, inf
        %1282 = vmin.xlane.f32.xlu0 %v1281
        %v1283 = vpop.xlane.xlu0 %1282
        %v1284 = vcvt.f32.s32 %v1283
        %v1285 = vcvt.f32.s32 %v1279
        %v1286 = vshll.u32 %v1285, 16
        %v1287 = vadd.s32 %v1286, %v1284
        %vm1288 = vcmp.eq.s32.totalorder %v999, %v1077
        %vm1289 = vcmp.eq.s32.totalorder %v999, %v1091
        %vm1290 = vcmp.eq.s32.totalorder %v999, %v1105
        %vm1291 = vcmp.eq.s32.totalorder %v999, %v1119
        %vm1292 = vcmp.eq.s32.totalorder %v999, %v1133
        %vm1293 = vcmp.eq.s32.totalorder %v999, %v1147
        %vm1294 = vcmp.eq.s32.totalorder %v999, %v1161
        %vm1295 = vcmp.eq.s32.totalorder %v999, %v1175
        %vm1296 = vcmp.eq.s32.totalorder %v999, %v1189
        %vm1297 = vcmp.eq.s32.totalorder %v999, %v1203
        %vm1298 = vcmp.eq.s32.totalorder %v999, %v1217
        %vm1299 = vcmp.eq.s32.totalorder %v999, %v1231
        %vm1300 = vcmp.eq.s32.totalorder %v999, %v1245
        %vm1301 = vcmp.eq.s32.totalorder %v999, %v1259
        %vm1302 = vcmp.eq.s32.totalorder %v999, %v1273
        %vm1303 = vcmp.eq.s32.totalorder %v999, %v1287
        %v1304 = vmax.f32 %v1001, 1e-16
        %v1305 = vmax.f32 %v1003, 1e-16
        %v1306 = vmax.f32 %v1005, 1e-16
        %v1307 = vmax.f32 %v1007, 1e-16
        %v1308 = vmax.f32 %v1009, 1e-16
        %v1309 = vmax.f32 %v1011, 1e-16
        %v1310 = vmax.f32 %v1013, 1e-16
        %v1311 = vmax.f32 %v1015, 1e-16
        %v1312 = vmax.f32 %v1017, 1e-16
        %v1313 = vmax.f32 %v1019, 1e-16
        %v1314 = vmax.f32 %v1021, 1e-16
        %v1315 = vmax.f32 %v1023, 1e-16
        %v1316 = vmax.f32 %v1025, 1e-16
        %v1317 = vmax.f32 %v1027, 1e-16
        %v1318 = vmax.f32 %v1029, 1e-16
        %v1319 = vmax.f32 %v1031, 1e-16
        %v1320 = vrcp.pop %v1304
        %v1321 = vmul.f32 1.0, %v1320
        %v1322 = vrcp.pop %v1305
        %v1323 = vmul.f32 1.0, %v1322
        %v1324 = vrcp.pop %v1306
        %v1325 = vmul.f32 1.0, %v1324
        %v1326 = vrcp.pop %v1307
        %v1327 = vmul.f32 1.0, %v1326
        %v1328 = vrcp.pop %v1308
        %v1329 = vmul.f32 1.0, %v1328
        %v1330 = vrcp.pop %v1309
        %v1331 = vmul.f32 1.0, %v1330
        %v1332 = vrcp.pop %v1310
        %v1333 = vmul.f32 1.0, %v1332
        %v1334 = vrcp.pop %v1311
        %v1335 = vmul.f32 1.0, %v1334
        %v1336 = vrcp.pop %v1312
        %v1337 = vmul.f32 1.0, %v1336
        %v1338 = vrcp.pop %v1313
        %v1339 = vmul.f32 1.0, %v1338
        %v1340 = vrcp.pop %v1314
        %v1341 = vmul.f32 1.0, %v1340
        %v1342 = vrcp.pop %v1315
        %v1343 = vmul.f32 1.0, %v1342
        %v1344 = vrcp.pop %v1316
        %v1345 = vmul.f32 1.0, %v1344
        %v1346 = vrcp.pop %v1317
        %v1347 = vmul.f32 1.0, %v1346
        %v1348 = vrcp.pop %v1318
        %v1349 = vmul.f32 1.0, %v1348
        %v1350 = vrcp.pop %v1319
        %v1351 = vmul.f32 1.0, %v1350
        %v1352 = vsel %vm1288, %v1321, 0.0
        %v1353 = vsel %vm1289, %v1323, 0.0
        %v1354 = vsel %vm1290, %v1325, 0.0
        %v1355 = vsel %vm1291, %v1327, 0.0
        %v1356 = vsel %vm1292, %v1329, 0.0
        %v1357 = vsel %vm1293, %v1331, 0.0
        %v1358 = vsel %vm1294, %v1333, 0.0
        %v1359 = vsel %vm1295, %v1335, 0.0
        %v1360 = vsel %vm1296, %v1337, 0.0
        %v1361 = vsel %vm1297, %v1339, 0.0
        %v1362 = vsel %vm1298, %v1341, 0.0
        %v1363 = vsel %vm1299, %v1343, 0.0
        %v1364 = vsel %vm1300, %v1345, 0.0
        %v1365 = vsel %vm1301, %v1347, 0.0
        %v1366 = vsel %vm1302, %v1349, 0.0
        %v1367 = vsel %vm1303, %v1351, 0.0
        %v1368 = vadd.f32 %v1352, 0.0
        %v1369 = vadd.f32 %v1353, 0.0
        %v1370 = vadd.f32 %v1354, 0.0
        %v1371 = vadd.f32 %v1355, 0.0
        %v1372 = vadd.f32 %v1356, 0.0
        %v1373 = vadd.f32 %v1357, 0.0
        %v1374 = vadd.f32 %v1358, 0.0
        %v1375 = vadd.f32 %v1359, 0.0
        %v1376 = vadd.f32 %v1360, 0.0
        %v1377 = vadd.f32 %v1361, 0.0
        %v1378 = vadd.f32 %v1362, 0.0
        %v1379 = vadd.f32 %v1363, 0.0
        %v1380 = vadd.f32 %v1364, 0.0
        %v1381 = vadd.f32 %v1365, 0.0
        %v1382 = vadd.f32 %v1366, 0.0
        %v1383 = vadd.f32 %v1367, 0.0
        %v1384 = vadd.f32 %v1321, 0.0
        %v1385 = vadd.f32 %v1323, 0.0
        %v1386 = vadd.f32 %v1325, 0.0
        %v1387 = vadd.f32 %v1327, 0.0
        %v1388 = vadd.f32 %v1329, 0.0
        %v1389 = vadd.f32 %v1331, 0.0
        %v1390 = vadd.f32 %v1333, 0.0
        %v1391 = vadd.f32 %v1335, 0.0
        %v1392 = vadd.f32 %v1337, 0.0
        %v1393 = vadd.f32 %v1339, 0.0
        %v1394 = vadd.f32 %v1341, 0.0
        %v1395 = vadd.f32 %v1343, 0.0
        %v1396 = vadd.f32 %v1345, 0.0
        %v1397 = vadd.f32 %v1347, 0.0
        %v1398 = vadd.f32 %v1349, 0.0
        %v1399 = vadd.f32 %v1351, 0.0
        %v1400 = vsel %vm1288, 1e+30, %v982
        %v1401 = vsel %vm1289, 1e+30, %v983
        %v1402 = vsel %vm1290, 1e+30, %v984
        %v1403 = vsel %vm1291, 1e+30, %v985
        %v1404 = vsel %vm1292, 1e+30, %v986
        %v1405 = vsel %vm1293, 1e+30, %v987
        %v1406 = vsel %vm1294, 1e+30, %v988
        %v1407 = vsel %vm1295, 1e+30, %v989
        %v1408 = vsel %vm1296, 1e+30, %v990
        %v1409 = vsel %vm1297, 1e+30, %v991
        %v1410 = vsel %vm1298, 1e+30, %v992
        %v1411 = vsel %vm1299, 1e+30, %v993
        %v1412 = vsel %vm1300, 1e+30, %v994
        %v1413 = vsel %vm1301, 1e+30, %v995
        %v1414 = vsel %vm1302, 1e+30, %v996
        %v1415 = vsel %vm1303, 1e+30, %v997
        %1416 = vmin.xlane.f32.xlu0 %v1400
        %v1417 = vpop.xlane.xlu0 %1416
        %1418 = vmin.xlane.f32.xlu0 %v1401
        %v1419 = vpop.xlane.xlu0 %1418
        %1420 = vmin.xlane.f32.xlu0 %v1402
        %v1421 = vpop.xlane.xlu0 %1420
        %1422 = vmin.xlane.f32.xlu0 %v1403
        %v1423 = vpop.xlane.xlu0 %1422
        %1424 = vmin.xlane.f32.xlu0 %v1404
        %v1425 = vpop.xlane.xlu0 %1424
        %1426 = vmin.xlane.f32.xlu0 %v1405
        %v1427 = vpop.xlane.xlu0 %1426
        %1428 = vmin.xlane.f32.xlu0 %v1406
        %v1429 = vpop.xlane.xlu0 %1428
        %1430 = vmin.xlane.f32.xlu0 %v1407
        %v1431 = vpop.xlane.xlu0 %1430
        %1432 = vmin.xlane.f32.xlu0 %v1408
        %v1433 = vpop.xlane.xlu0 %1432
        %1434 = vmin.xlane.f32.xlu0 %v1409
        %v1435 = vpop.xlane.xlu0 %1434
        %1436 = vmin.xlane.f32.xlu0 %v1410
        %v1437 = vpop.xlane.xlu0 %1436
        %1438 = vmin.xlane.f32.xlu0 %v1411
        %v1439 = vpop.xlane.xlu0 %1438
        %1440 = vmin.xlane.f32.xlu0 %v1412
        %v1441 = vpop.xlane.xlu0 %1440
        %1442 = vmin.xlane.f32.xlu0 %v1413
        %v1443 = vpop.xlane.xlu0 %1442
        %1444 = vmin.xlane.f32.xlu0 %v1414
        %v1445 = vpop.xlane.xlu0 %1444
        %1446 = vmin.xlane.f32.xlu0 %v1415
        %v1447 = vpop.xlane.xlu0 %1446
        %vm1448 = vcmp.le.f32.partialorder %v1400, %v1417
        %vm1449 = vcmp.le.f32.partialorder %v1401, %v1419
        %vm1450 = vcmp.le.f32.partialorder %v1402, %v1421
        %vm1451 = vcmp.le.f32.partialorder %v1403, %v1423
        %vm1452 = vcmp.le.f32.partialorder %v1404, %v1425
        %vm1453 = vcmp.le.f32.partialorder %v1405, %v1427
        %vm1454 = vcmp.le.f32.partialorder %v1406, %v1429
        %vm1455 = vcmp.le.f32.partialorder %v1407, %v1431
        %vm1456 = vcmp.le.f32.partialorder %v1408, %v1433
        %vm1457 = vcmp.le.f32.partialorder %v1409, %v1435
        %vm1458 = vcmp.le.f32.partialorder %v1410, %v1437
        %vm1459 = vcmp.le.f32.partialorder %v1411, %v1439
        %vm1460 = vcmp.le.f32.partialorder %v1412, %v1441
        %vm1461 = vcmp.le.f32.partialorder %v1413, %v1443
        %vm1462 = vcmp.le.f32.partialorder %v1414, %v1445
        %vm1463 = vcmp.le.f32.partialorder %v1415, %v1447
        %v1464 = vsel %vm1448, %v999, 128
        %v1465 = vsel %vm1449, %v999, 128
        %v1466 = vsel %vm1450, %v999, 128
        %v1467 = vsel %vm1451, %v999, 128
        %v1468 = vsel %vm1452, %v999, 128
        %v1469 = vsel %vm1453, %v999, 128
        %v1470 = vsel %vm1454, %v999, 128
        %v1471 = vsel %vm1455, %v999, 128
        %v1472 = vsel %vm1456, %v999, 128
        %v1473 = vsel %vm1457, %v999, 128
        %v1474 = vsel %vm1458, %v999, 128
        %v1475 = vsel %vm1459, %v999, 128
        %v1476 = vsel %vm1460, %v999, 128
        %v1477 = vsel %vm1461, %v999, 128
        %v1478 = vsel %vm1462, %v999, 128
        %v1479 = vsel %vm1463, %v999, 128
        %v1480 = vand.u32 %v1464, 65535
        %v1481 = vshra.s32 %v1464, 16
        %v1482 = vcvt.s32.f32 %v1480
        %v1483 = vcvt.s32.f32 %v1481
        %1484 = vmin.xlane.f32.xlu0 %v1483
        %v1485 = vpop.xlane.xlu0 %1484
        %vm1486 = vcmp.eq.f32.partialorder %v1483, %v1485
        %v1487 = vsel %vm1486, %v1482, inf
        %1488 = vmin.xlane.f32.xlu0 %v1487
        %v1489 = vpop.xlane.xlu0 %1488
        %v1490 = vcvt.f32.s32 %v1489
        %v1491 = vcvt.f32.s32 %v1485
        %v1492 = vshll.u32 %v1491, 16
        %v1493 = vadd.s32 %v1492, %v1490
        %v1494 = vand.u32 %v1465, 65535
        %v1495 = vshra.s32 %v1465, 16
        %v1496 = vcvt.s32.f32 %v1494
        %v1497 = vcvt.s32.f32 %v1495
        %1498 = vmin.xlane.f32.xlu0 %v1497
        %v1499 = vpop.xlane.xlu0 %1498
        %vm1500 = vcmp.eq.f32.partialorder %v1497, %v1499
        %v1501 = vsel %vm1500, %v1496, inf
        %1502 = vmin.xlane.f32.xlu0 %v1501
        %v1503 = vpop.xlane.xlu0 %1502
        %v1504 = vcvt.f32.s32 %v1503
        %v1505 = vcvt.f32.s32 %v1499
        %v1506 = vshll.u32 %v1505, 16
        %v1507 = vadd.s32 %v1506, %v1504
        %v1508 = vand.u32 %v1466, 65535
        %v1509 = vshra.s32 %v1466, 16
        %v1510 = vcvt.s32.f32 %v1508
        %v1511 = vcvt.s32.f32 %v1509
        %1512 = vmin.xlane.f32.xlu0 %v1511
        %v1513 = vpop.xlane.xlu0 %1512
        %vm1514 = vcmp.eq.f32.partialorder %v1511, %v1513
        %v1515 = vsel %vm1514, %v1510, inf
        %1516 = vmin.xlane.f32.xlu0 %v1515
        %v1517 = vpop.xlane.xlu0 %1516
        %v1518 = vcvt.f32.s32 %v1517
        %v1519 = vcvt.f32.s32 %v1513
        %v1520 = vshll.u32 %v1519, 16
        %v1521 = vadd.s32 %v1520, %v1518
        %v1522 = vand.u32 %v1467, 65535
        %v1523 = vshra.s32 %v1467, 16
        %v1524 = vcvt.s32.f32 %v1522
        %v1525 = vcvt.s32.f32 %v1523
        %1526 = vmin.xlane.f32.xlu0 %v1525
        %v1527 = vpop.xlane.xlu0 %1526
        %vm1528 = vcmp.eq.f32.partialorder %v1525, %v1527
        %v1529 = vsel %vm1528, %v1524, inf
        %1530 = vmin.xlane.f32.xlu0 %v1529
        %v1531 = vpop.xlane.xlu0 %1530
        %v1532 = vcvt.f32.s32 %v1531
        %v1533 = vcvt.f32.s32 %v1527
        %v1534 = vshll.u32 %v1533, 16
        %v1535 = vadd.s32 %v1534, %v1532
        %v1536 = vand.u32 %v1468, 65535
        %v1537 = vshra.s32 %v1468, 16
        %v1538 = vcvt.s32.f32 %v1536
        %v1539 = vcvt.s32.f32 %v1537
        %1540 = vmin.xlane.f32.xlu0 %v1539
        %v1541 = vpop.xlane.xlu0 %1540
        %vm1542 = vcmp.eq.f32.partialorder %v1539, %v1541
        %v1543 = vsel %vm1542, %v1538, inf
        %1544 = vmin.xlane.f32.xlu0 %v1543
        %v1545 = vpop.xlane.xlu0 %1544
        %v1546 = vcvt.f32.s32 %v1545
        %v1547 = vcvt.f32.s32 %v1541
        %v1548 = vshll.u32 %v1547, 16
        %v1549 = vadd.s32 %v1548, %v1546
        %v1550 = vand.u32 %v1469, 65535
        %v1551 = vshra.s32 %v1469, 16
        %v1552 = vcvt.s32.f32 %v1550
        %v1553 = vcvt.s32.f32 %v1551
        %1554 = vmin.xlane.f32.xlu0 %v1553
        %v1555 = vpop.xlane.xlu0 %1554
        %vm1556 = vcmp.eq.f32.partialorder %v1553, %v1555
        %v1557 = vsel %vm1556, %v1552, inf
        %1558 = vmin.xlane.f32.xlu0 %v1557
        %v1559 = vpop.xlane.xlu0 %1558
        %v1560 = vcvt.f32.s32 %v1559
        %v1561 = vcvt.f32.s32 %v1555
        %v1562 = vshll.u32 %v1561, 16
        %v1563 = vadd.s32 %v1562, %v1560
        %v1564 = vand.u32 %v1470, 65535
        %v1565 = vshra.s32 %v1470, 16
        %v1566 = vcvt.s32.f32 %v1564
        %v1567 = vcvt.s32.f32 %v1565
        %1568 = vmin.xlane.f32.xlu0 %v1567
        %v1569 = vpop.xlane.xlu0 %1568
        %vm1570 = vcmp.eq.f32.partialorder %v1567, %v1569
        %v1571 = vsel %vm1570, %v1566, inf
        %1572 = vmin.xlane.f32.xlu0 %v1571
        %v1573 = vpop.xlane.xlu0 %1572
        %v1574 = vcvt.f32.s32 %v1573
        %v1575 = vcvt.f32.s32 %v1569
        %v1576 = vshll.u32 %v1575, 16
        %v1577 = vadd.s32 %v1576, %v1574
        %v1578 = vand.u32 %v1471, 65535
        %v1579 = vshra.s32 %v1471, 16
        %v1580 = vcvt.s32.f32 %v1578
        %v1581 = vcvt.s32.f32 %v1579
        %1582 = vmin.xlane.f32.xlu0 %v1581
        %v1583 = vpop.xlane.xlu0 %1582
        %vm1584 = vcmp.eq.f32.partialorder %v1581, %v1583
        %v1585 = vsel %vm1584, %v1580, inf
        %1586 = vmin.xlane.f32.xlu0 %v1585
        %v1587 = vpop.xlane.xlu0 %1586
        %v1588 = vcvt.f32.s32 %v1587
        %v1589 = vcvt.f32.s32 %v1583
        %v1590 = vshll.u32 %v1589, 16
        %v1591 = vadd.s32 %v1590, %v1588
        %v1592 = vand.u32 %v1472, 65535
        %v1593 = vshra.s32 %v1472, 16
        %v1594 = vcvt.s32.f32 %v1592
        %v1595 = vcvt.s32.f32 %v1593
        %1596 = vmin.xlane.f32.xlu0 %v1595
        %v1597 = vpop.xlane.xlu0 %1596
        %vm1598 = vcmp.eq.f32.partialorder %v1595, %v1597
        %v1599 = vsel %vm1598, %v1594, inf
        %1600 = vmin.xlane.f32.xlu0 %v1599
        %v1601 = vpop.xlane.xlu0 %1600
        %v1602 = vcvt.f32.s32 %v1601
        %v1603 = vcvt.f32.s32 %v1597
        %v1604 = vshll.u32 %v1603, 16
        %v1605 = vadd.s32 %v1604, %v1602
        %v1606 = vand.u32 %v1473, 65535
        %v1607 = vshra.s32 %v1473, 16
        %v1608 = vcvt.s32.f32 %v1606
        %v1609 = vcvt.s32.f32 %v1607
        %1610 = vmin.xlane.f32.xlu0 %v1609
        %v1611 = vpop.xlane.xlu0 %1610
        %vm1612 = vcmp.eq.f32.partialorder %v1609, %v1611
        %v1613 = vsel %vm1612, %v1608, inf
        %1614 = vmin.xlane.f32.xlu0 %v1613
        %v1615 = vpop.xlane.xlu0 %1614
        %v1616 = vcvt.f32.s32 %v1615
        %v1617 = vcvt.f32.s32 %v1611
        %v1618 = vshll.u32 %v1617, 16
        %v1619 = vadd.s32 %v1618, %v1616
        %v1620 = vand.u32 %v1474, 65535
        %v1621 = vshra.s32 %v1474, 16
        %v1622 = vcvt.s32.f32 %v1620
        %v1623 = vcvt.s32.f32 %v1621
        %1624 = vmin.xlane.f32.xlu0 %v1623
        %v1625 = vpop.xlane.xlu0 %1624
        %vm1626 = vcmp.eq.f32.partialorder %v1623, %v1625
        %v1627 = vsel %vm1626, %v1622, inf
        %1628 = vmin.xlane.f32.xlu0 %v1627
        %v1629 = vpop.xlane.xlu0 %1628
        %v1630 = vcvt.f32.s32 %v1629
        %v1631 = vcvt.f32.s32 %v1625
        %v1632 = vshll.u32 %v1631, 16
        %v1633 = vadd.s32 %v1632, %v1630
        %v1634 = vand.u32 %v1475, 65535
        %v1635 = vshra.s32 %v1475, 16
        %v1636 = vcvt.s32.f32 %v1634
        %v1637 = vcvt.s32.f32 %v1635
        %1638 = vmin.xlane.f32.xlu0 %v1637
        %v1639 = vpop.xlane.xlu0 %1638
        %vm1640 = vcmp.eq.f32.partialorder %v1637, %v1639
        %v1641 = vsel %vm1640, %v1636, inf
        %1642 = vmin.xlane.f32.xlu0 %v1641
        %v1643 = vpop.xlane.xlu0 %1642
        %v1644 = vcvt.f32.s32 %v1643
        %v1645 = vcvt.f32.s32 %v1639
        %v1646 = vshll.u32 %v1645, 16
        %v1647 = vadd.s32 %v1646, %v1644
        %v1648 = vand.u32 %v1476, 65535
        %v1649 = vshra.s32 %v1476, 16
        %v1650 = vcvt.s32.f32 %v1648
        %v1651 = vcvt.s32.f32 %v1649
        %1652 = vmin.xlane.f32.xlu0 %v1651
        %v1653 = vpop.xlane.xlu0 %1652
        %vm1654 = vcmp.eq.f32.partialorder %v1651, %v1653
        %v1655 = vsel %vm1654, %v1650, inf
        %1656 = vmin.xlane.f32.xlu0 %v1655
        %v1657 = vpop.xlane.xlu0 %1656
        %v1658 = vcvt.f32.s32 %v1657
        %v1659 = vcvt.f32.s32 %v1653
        %v1660 = vshll.u32 %v1659, 16
        %v1661 = vadd.s32 %v1660, %v1658
        %v1662 = vand.u32 %v1477, 65535
        %v1663 = vshra.s32 %v1477, 16
        %v1664 = vcvt.s32.f32 %v1662
        %v1665 = vcvt.s32.f32 %v1663
        %1666 = vmin.xlane.f32.xlu0 %v1665
        %v1667 = vpop.xlane.xlu0 %1666
        %vm1668 = vcmp.eq.f32.partialorder %v1665, %v1667
        %v1669 = vsel %vm1668, %v1664, inf
        %1670 = vmin.xlane.f32.xlu0 %v1669
        %v1671 = vpop.xlane.xlu0 %1670
        %v1672 = vcvt.f32.s32 %v1671
        %v1673 = vcvt.f32.s32 %v1667
        %v1674 = vshll.u32 %v1673, 16
        %v1675 = vadd.s32 %v1674, %v1672
        %v1676 = vand.u32 %v1478, 65535
        %v1677 = vshra.s32 %v1478, 16
        %v1678 = vcvt.s32.f32 %v1676
        %v1679 = vcvt.s32.f32 %v1677
        %1680 = vmin.xlane.f32.xlu0 %v1679
        %v1681 = vpop.xlane.xlu0 %1680
        %vm1682 = vcmp.eq.f32.partialorder %v1679, %v1681
        %v1683 = vsel %vm1682, %v1678, inf
        %1684 = vmin.xlane.f32.xlu0 %v1683
        %v1685 = vpop.xlane.xlu0 %1684
        %v1686 = vcvt.f32.s32 %v1685
        %v1687 = vcvt.f32.s32 %v1681
        %v1688 = vshll.u32 %v1687, 16
        %v1689 = vadd.s32 %v1688, %v1686
        %v1690 = vand.u32 %v1479, 65535
        %v1691 = vshra.s32 %v1479, 16
        %v1692 = vcvt.s32.f32 %v1690
        %v1693 = vcvt.s32.f32 %v1691
        %1694 = vmin.xlane.f32.xlu0 %v1693
        %v1695 = vpop.xlane.xlu0 %1694
        %vm1696 = vcmp.eq.f32.partialorder %v1693, %v1695
        %v1697 = vsel %vm1696, %v1692, inf
        %1698 = vmin.xlane.f32.xlu0 %v1697
        %v1699 = vpop.xlane.xlu0 %1698
        %v1700 = vcvt.f32.s32 %v1699
        %v1701 = vcvt.f32.s32 %v1695
        %v1702 = vshll.u32 %v1701, 16
        %v1703 = vadd.s32 %v1702, %v1700
        %vm1704 = vcmp.eq.s32.totalorder %v999, %v1493
        %vm1705 = vcmp.eq.s32.totalorder %v999, %v1507
        %vm1706 = vcmp.eq.s32.totalorder %v999, %v1521
        %vm1707 = vcmp.eq.s32.totalorder %v999, %v1535
        %vm1708 = vcmp.eq.s32.totalorder %v999, %v1549
        %vm1709 = vcmp.eq.s32.totalorder %v999, %v1563
        %vm1710 = vcmp.eq.s32.totalorder %v999, %v1577
        %vm1711 = vcmp.eq.s32.totalorder %v999, %v1591
        %vm1712 = vcmp.eq.s32.totalorder %v999, %v1605
        %vm1713 = vcmp.eq.s32.totalorder %v999, %v1619
        %vm1714 = vcmp.eq.s32.totalorder %v999, %v1633
        %vm1715 = vcmp.eq.s32.totalorder %v999, %v1647
        %vm1716 = vcmp.eq.s32.totalorder %v999, %v1661
        %vm1717 = vcmp.eq.s32.totalorder %v999, %v1675
        %vm1718 = vcmp.eq.s32.totalorder %v999, %v1689
        %vm1719 = vcmp.eq.s32.totalorder %v999, %v1703
        %v1720 = vmax.f32 %v1417, 1e-16
        %v1721 = vmax.f32 %v1419, 1e-16
        %v1722 = vmax.f32 %v1421, 1e-16
        %v1723 = vmax.f32 %v1423, 1e-16
        %v1724 = vmax.f32 %v1425, 1e-16
        %v1725 = vmax.f32 %v1427, 1e-16
        %v1726 = vmax.f32 %v1429, 1e-16
        %v1727 = vmax.f32 %v1431, 1e-16
        %v1728 = vmax.f32 %v1433, 1e-16
        %v1729 = vmax.f32 %v1435, 1e-16
        %v1730 = vmax.f32 %v1437, 1e-16
        %v1731 = vmax.f32 %v1439, 1e-16
        %v1732 = vmax.f32 %v1441, 1e-16
        %v1733 = vmax.f32 %v1443, 1e-16
        %v1734 = vmax.f32 %v1445, 1e-16
        %v1735 = vmax.f32 %v1447, 1e-16
        %v1736 = vrcp.pop %v1720
        %v1737 = vmul.f32 1.0, %v1736
        %v1738 = vrcp.pop %v1721
        %v1739 = vmul.f32 1.0, %v1738
        %v1740 = vrcp.pop %v1722
        %v1741 = vmul.f32 1.0, %v1740
        %v1742 = vrcp.pop %v1723
        %v1743 = vmul.f32 1.0, %v1742
        %v1744 = vrcp.pop %v1724
        %v1745 = vmul.f32 1.0, %v1744
        %v1746 = vrcp.pop %v1725
        %v1747 = vmul.f32 1.0, %v1746
        %v1748 = vrcp.pop %v1726
        %v1749 = vmul.f32 1.0, %v1748
        %v1750 = vrcp.pop %v1727
        %v1751 = vmul.f32 1.0, %v1750
        %v1752 = vrcp.pop %v1728
        %v1753 = vmul.f32 1.0, %v1752
        %v1754 = vrcp.pop %v1729
        %v1755 = vmul.f32 1.0, %v1754
        %v1756 = vrcp.pop %v1730
        %v1757 = vmul.f32 1.0, %v1756
        %v1758 = vrcp.pop %v1731
        %v1759 = vmul.f32 1.0, %v1758
        %v1760 = vrcp.pop %v1732
        %v1761 = vmul.f32 1.0, %v1760
        %v1762 = vrcp.pop %v1733
        %v1763 = vmul.f32 1.0, %v1762
        %v1764 = vrcp.pop %v1734
        %v1765 = vmul.f32 1.0, %v1764
        %v1766 = vrcp.pop %v1735
        %v1767 = vmul.f32 1.0, %v1766
        %v1768 = vsel %vm1704, %v1737, 0.0
        %v1769 = vsel %vm1705, %v1739, 0.0
        %v1770 = vsel %vm1706, %v1741, 0.0
        %v1771 = vsel %vm1707, %v1743, 0.0
        %v1772 = vsel %vm1708, %v1745, 0.0
        %v1773 = vsel %vm1709, %v1747, 0.0
        %v1774 = vsel %vm1710, %v1749, 0.0
        %v1775 = vsel %vm1711, %v1751, 0.0
        %v1776 = vsel %vm1712, %v1753, 0.0
        %v1777 = vsel %vm1713, %v1755, 0.0
        %v1778 = vsel %vm1714, %v1757, 0.0
        %v1779 = vsel %vm1715, %v1759, 0.0
        %v1780 = vsel %vm1716, %v1761, 0.0
        %v1781 = vsel %vm1717, %v1763, 0.0
        %v1782 = vsel %vm1718, %v1765, 0.0
        %v1783 = vsel %vm1719, %v1767, 0.0
        %v1784 = vadd.f32 %v1368, %v1768
        %v1785 = vadd.f32 %v1369, %v1769
        %v1786 = vadd.f32 %v1370, %v1770
        %v1787 = vadd.f32 %v1371, %v1771
        %v1788 = vadd.f32 %v1372, %v1772
        %v1789 = vadd.f32 %v1373, %v1773
        %v1790 = vadd.f32 %v1374, %v1774
        %v1791 = vadd.f32 %v1375, %v1775
        %v1792 = vadd.f32 %v1376, %v1776
        %v1793 = vadd.f32 %v1377, %v1777
        %v1794 = vadd.f32 %v1378, %v1778
        %v1795 = vadd.f32 %v1379, %v1779
        %v1796 = vadd.f32 %v1380, %v1780
        %v1797 = vadd.f32 %v1381, %v1781
        %v1798 = vadd.f32 %v1382, %v1782
        %v1799 = vadd.f32 %v1383, %v1783
        %v1800 = vadd.f32 %v1384, %v1737
        %v1801 = vadd.f32 %v1385, %v1739
        %v1802 = vadd.f32 %v1386, %v1741
        %v1803 = vadd.f32 %v1387, %v1743
        %v1804 = vadd.f32 %v1388, %v1745
        %v1805 = vadd.f32 %v1389, %v1747
        %v1806 = vadd.f32 %v1390, %v1749
        %v1807 = vadd.f32 %v1391, %v1751
        %v1808 = vadd.f32 %v1392, %v1753
        %v1809 = vadd.f32 %v1393, %v1755
        %v1810 = vadd.f32 %v1394, %v1757
        %v1811 = vadd.f32 %v1395, %v1759
        %v1812 = vadd.f32 %v1396, %v1761
        %v1813 = vadd.f32 %v1397, %v1763
        %v1814 = vadd.f32 %v1398, %v1765
        %v1815 = vadd.f32 %v1399, %v1767
        %v1816 = vsel %vm1704, 1e+30, %v1400
        %v1817 = vsel %vm1705, 1e+30, %v1401
        %v1818 = vsel %vm1706, 1e+30, %v1402
        %v1819 = vsel %vm1707, 1e+30, %v1403
        %v1820 = vsel %vm1708, 1e+30, %v1404
        %v1821 = vsel %vm1709, 1e+30, %v1405
        %v1822 = vsel %vm1710, 1e+30, %v1406
        %v1823 = vsel %vm1711, 1e+30, %v1407
        %v1824 = vsel %vm1712, 1e+30, %v1408
        %v1825 = vsel %vm1713, 1e+30, %v1409
        %v1826 = vsel %vm1714, 1e+30, %v1410
        %v1827 = vsel %vm1715, 1e+30, %v1411
        %v1828 = vsel %vm1716, 1e+30, %v1412
        %v1829 = vsel %vm1717, 1e+30, %v1413
        %v1830 = vsel %vm1718, 1e+30, %v1414
        %v1831 = vsel %vm1719, 1e+30, %v1415
        %1832 = vmin.xlane.f32.xlu0 %v1816
        %v1833 = vpop.xlane.xlu0 %1832
        %1834 = vmin.xlane.f32.xlu0 %v1817
        %v1835 = vpop.xlane.xlu0 %1834
        %1836 = vmin.xlane.f32.xlu0 %v1818
        %v1837 = vpop.xlane.xlu0 %1836
        %1838 = vmin.xlane.f32.xlu0 %v1819
        %v1839 = vpop.xlane.xlu0 %1838
        %1840 = vmin.xlane.f32.xlu0 %v1820
        %v1841 = vpop.xlane.xlu0 %1840
        %1842 = vmin.xlane.f32.xlu0 %v1821
        %v1843 = vpop.xlane.xlu0 %1842
        %1844 = vmin.xlane.f32.xlu0 %v1822
        %v1845 = vpop.xlane.xlu0 %1844
        %1846 = vmin.xlane.f32.xlu0 %v1823
        %v1847 = vpop.xlane.xlu0 %1846
        %1848 = vmin.xlane.f32.xlu0 %v1824
        %v1849 = vpop.xlane.xlu0 %1848
        %1850 = vmin.xlane.f32.xlu0 %v1825
        %v1851 = vpop.xlane.xlu0 %1850
        %1852 = vmin.xlane.f32.xlu0 %v1826
        %v1853 = vpop.xlane.xlu0 %1852
        %1854 = vmin.xlane.f32.xlu0 %v1827
        %v1855 = vpop.xlane.xlu0 %1854
        %1856 = vmin.xlane.f32.xlu0 %v1828
        %v1857 = vpop.xlane.xlu0 %1856
        %1858 = vmin.xlane.f32.xlu0 %v1829
        %v1859 = vpop.xlane.xlu0 %1858
        %1860 = vmin.xlane.f32.xlu0 %v1830
        %v1861 = vpop.xlane.xlu0 %1860
        %1862 = vmin.xlane.f32.xlu0 %v1831
        %v1863 = vpop.xlane.xlu0 %1862
        %vm1864 = vcmp.le.f32.partialorder %v1816, %v1833
        %vm1865 = vcmp.le.f32.partialorder %v1817, %v1835
        %vm1866 = vcmp.le.f32.partialorder %v1818, %v1837
        %vm1867 = vcmp.le.f32.partialorder %v1819, %v1839
        %vm1868 = vcmp.le.f32.partialorder %v1820, %v1841
        %vm1869 = vcmp.le.f32.partialorder %v1821, %v1843
        %vm1870 = vcmp.le.f32.partialorder %v1822, %v1845
        %vm1871 = vcmp.le.f32.partialorder %v1823, %v1847
        %vm1872 = vcmp.le.f32.partialorder %v1824, %v1849
        %vm1873 = vcmp.le.f32.partialorder %v1825, %v1851
        %vm1874 = vcmp.le.f32.partialorder %v1826, %v1853
        %vm1875 = vcmp.le.f32.partialorder %v1827, %v1855
        %vm1876 = vcmp.le.f32.partialorder %v1828, %v1857
        %vm1877 = vcmp.le.f32.partialorder %v1829, %v1859
        %vm1878 = vcmp.le.f32.partialorder %v1830, %v1861
        %vm1879 = vcmp.le.f32.partialorder %v1831, %v1863
        %v1880 = vsel %vm1864, %v999, 128
        %v1881 = vsel %vm1865, %v999, 128
        %v1882 = vsel %vm1866, %v999, 128
        %v1883 = vsel %vm1867, %v999, 128
        %v1884 = vsel %vm1868, %v999, 128
        %v1885 = vsel %vm1869, %v999, 128
        %v1886 = vsel %vm1870, %v999, 128
        %v1887 = vsel %vm1871, %v999, 128
        %v1888 = vsel %vm1872, %v999, 128
        %v1889 = vsel %vm1873, %v999, 128
        %v1890 = vsel %vm1874, %v999, 128
        %v1891 = vsel %vm1875, %v999, 128
        %v1892 = vsel %vm1876, %v999, 128
        %v1893 = vsel %vm1877, %v999, 128
        %v1894 = vsel %vm1878, %v999, 128
        %v1895 = vsel %vm1879, %v999, 128
        %v1896 = vand.u32 %v1880, 65535
        %v1897 = vshra.s32 %v1880, 16
        %v1898 = vcvt.s32.f32 %v1896
        %v1899 = vcvt.s32.f32 %v1897
        %1900 = vmin.xlane.f32.xlu0 %v1899
        %v1901 = vpop.xlane.xlu0 %1900
        %vm1902 = vcmp.eq.f32.partialorder %v1899, %v1901
        %v1903 = vsel %vm1902, %v1898, inf
        %1904 = vmin.xlane.f32.xlu0 %v1903
        %v1905 = vpop.xlane.xlu0 %1904
        %v1906 = vcvt.f32.s32 %v1905
        %v1907 = vcvt.f32.s32 %v1901
        %v1908 = vshll.u32 %v1907, 16
        %v1909 = vadd.s32 %v1908, %v1906
        %v1910 = vand.u32 %v1881, 65535
        %v1911 = vshra.s32 %v1881, 16
        %v1912 = vcvt.s32.f32 %v1910
        %v1913 = vcvt.s32.f32 %v1911
        %1914 = vmin.xlane.f32.xlu0 %v1913
        %v1915 = vpop.xlane.xlu0 %1914
        %vm1916 = vcmp.eq.f32.partialorder %v1913, %v1915
        %v1917 = vsel %vm1916, %v1912, inf
        %1918 = vmin.xlane.f32.xlu0 %v1917
        %v1919 = vpop.xlane.xlu0 %1918
        %v1920 = vcvt.f32.s32 %v1919
        %v1921 = vcvt.f32.s32 %v1915
        %v1922 = vshll.u32 %v1921, 16
        %v1923 = vadd.s32 %v1922, %v1920
        %v1924 = vand.u32 %v1882, 65535
        %v1925 = vshra.s32 %v1882, 16
        %v1926 = vcvt.s32.f32 %v1924
        %v1927 = vcvt.s32.f32 %v1925
        %1928 = vmin.xlane.f32.xlu0 %v1927
        %v1929 = vpop.xlane.xlu0 %1928
        %vm1930 = vcmp.eq.f32.partialorder %v1927, %v1929
        %v1931 = vsel %vm1930, %v1926, inf
        %1932 = vmin.xlane.f32.xlu0 %v1931
        %v1933 = vpop.xlane.xlu0 %1932
        %v1934 = vcvt.f32.s32 %v1933
        %v1935 = vcvt.f32.s32 %v1929
        %v1936 = vshll.u32 %v1935, 16
        %v1937 = vadd.s32 %v1936, %v1934
        %v1938 = vand.u32 %v1883, 65535
        %v1939 = vshra.s32 %v1883, 16
        %v1940 = vcvt.s32.f32 %v1938
        %v1941 = vcvt.s32.f32 %v1939
        %1942 = vmin.xlane.f32.xlu0 %v1941
        %v1943 = vpop.xlane.xlu0 %1942
        %vm1944 = vcmp.eq.f32.partialorder %v1941, %v1943
        %v1945 = vsel %vm1944, %v1940, inf
        %1946 = vmin.xlane.f32.xlu0 %v1945
        %v1947 = vpop.xlane.xlu0 %1946
        %v1948 = vcvt.f32.s32 %v1947
        %v1949 = vcvt.f32.s32 %v1943
        %v1950 = vshll.u32 %v1949, 16
        %v1951 = vadd.s32 %v1950, %v1948
        %v1952 = vand.u32 %v1884, 65535
        %v1953 = vshra.s32 %v1884, 16
        %v1954 = vcvt.s32.f32 %v1952
        %v1955 = vcvt.s32.f32 %v1953
        %1956 = vmin.xlane.f32.xlu0 %v1955
        %v1957 = vpop.xlane.xlu0 %1956
        %vm1958 = vcmp.eq.f32.partialorder %v1955, %v1957
        %v1959 = vsel %vm1958, %v1954, inf
        %1960 = vmin.xlane.f32.xlu0 %v1959
        %v1961 = vpop.xlane.xlu0 %1960
        %v1962 = vcvt.f32.s32 %v1961
        %v1963 = vcvt.f32.s32 %v1957
        %v1964 = vshll.u32 %v1963, 16
        %v1965 = vadd.s32 %v1964, %v1962
        %v1966 = vand.u32 %v1885, 65535
        %v1967 = vshra.s32 %v1885, 16
        %v1968 = vcvt.s32.f32 %v1966
        %v1969 = vcvt.s32.f32 %v1967
        %1970 = vmin.xlane.f32.xlu0 %v1969
        %v1971 = vpop.xlane.xlu0 %1970
        %vm1972 = vcmp.eq.f32.partialorder %v1969, %v1971
        %v1973 = vsel %vm1972, %v1968, inf
        %1974 = vmin.xlane.f32.xlu0 %v1973
        %v1975 = vpop.xlane.xlu0 %1974
        %v1976 = vcvt.f32.s32 %v1975
        %v1977 = vcvt.f32.s32 %v1971
        %v1978 = vshll.u32 %v1977, 16
        %v1979 = vadd.s32 %v1978, %v1976
        %v1980 = vand.u32 %v1886, 65535
        %v1981 = vshra.s32 %v1886, 16
        %v1982 = vcvt.s32.f32 %v1980
        %v1983 = vcvt.s32.f32 %v1981
        %1984 = vmin.xlane.f32.xlu0 %v1983
        %v1985 = vpop.xlane.xlu0 %1984
        %vm1986 = vcmp.eq.f32.partialorder %v1983, %v1985
        %v1987 = vsel %vm1986, %v1982, inf
        %1988 = vmin.xlane.f32.xlu0 %v1987
        %v1989 = vpop.xlane.xlu0 %1988
        %v1990 = vcvt.f32.s32 %v1989
        %v1991 = vcvt.f32.s32 %v1985
        %v1992 = vshll.u32 %v1991, 16
        %v1993 = vadd.s32 %v1992, %v1990
        %v1994 = vand.u32 %v1887, 65535
        %v1995 = vshra.s32 %v1887, 16
        %v1996 = vcvt.s32.f32 %v1994
        %v1997 = vcvt.s32.f32 %v1995
        %1998 = vmin.xlane.f32.xlu0 %v1997
        %v1999 = vpop.xlane.xlu0 %1998
        %vm2000 = vcmp.eq.f32.partialorder %v1997, %v1999
        %v2001 = vsel %vm2000, %v1996, inf
        %2002 = vmin.xlane.f32.xlu0 %v2001
        %v2003 = vpop.xlane.xlu0 %2002
        %v2004 = vcvt.f32.s32 %v2003
        %v2005 = vcvt.f32.s32 %v1999
        %v2006 = vshll.u32 %v2005, 16
        %v2007 = vadd.s32 %v2006, %v2004
        %v2008 = vand.u32 %v1888, 65535
        %v2009 = vshra.s32 %v1888, 16
        %v2010 = vcvt.s32.f32 %v2008
        %v2011 = vcvt.s32.f32 %v2009
        %2012 = vmin.xlane.f32.xlu0 %v2011
        %v2013 = vpop.xlane.xlu0 %2012
        %vm2014 = vcmp.eq.f32.partialorder %v2011, %v2013
        %v2015 = vsel %vm2014, %v2010, inf
        %2016 = vmin.xlane.f32.xlu0 %v2015
        %v2017 = vpop.xlane.xlu0 %2016
        %v2018 = vcvt.f32.s32 %v2017
        %v2019 = vcvt.f32.s32 %v2013
        %v2020 = vshll.u32 %v2019, 16
        %v2021 = vadd.s32 %v2020, %v2018
        %v2022 = vand.u32 %v1889, 65535
        %v2023 = vshra.s32 %v1889, 16
        %v2024 = vcvt.s32.f32 %v2022
        %v2025 = vcvt.s32.f32 %v2023
        %2026 = vmin.xlane.f32.xlu0 %v2025
        %v2027 = vpop.xlane.xlu0 %2026
        %vm2028 = vcmp.eq.f32.partialorder %v2025, %v2027
        %v2029 = vsel %vm2028, %v2024, inf
        %2030 = vmin.xlane.f32.xlu0 %v2029
        %v2031 = vpop.xlane.xlu0 %2030
        %v2032 = vcvt.f32.s32 %v2031
        %v2033 = vcvt.f32.s32 %v2027
        %v2034 = vshll.u32 %v2033, 16
        %v2035 = vadd.s32 %v2034, %v2032
        %v2036 = vand.u32 %v1890, 65535
        %v2037 = vshra.s32 %v1890, 16
        %v2038 = vcvt.s32.f32 %v2036
        %v2039 = vcvt.s32.f32 %v2037
        %2040 = vmin.xlane.f32.xlu0 %v2039
        %v2041 = vpop.xlane.xlu0 %2040
        %vm2042 = vcmp.eq.f32.partialorder %v2039, %v2041
        %v2043 = vsel %vm2042, %v2038, inf
        %2044 = vmin.xlane.f32.xlu0 %v2043
        %v2045 = vpop.xlane.xlu0 %2044
        %v2046 = vcvt.f32.s32 %v2045
        %v2047 = vcvt.f32.s32 %v2041
        %v2048 = vshll.u32 %v2047, 16
        %v2049 = vadd.s32 %v2048, %v2046
        %v2050 = vand.u32 %v1891, 65535
        %v2051 = vshra.s32 %v1891, 16
        %v2052 = vcvt.s32.f32 %v2050
        %v2053 = vcvt.s32.f32 %v2051
        %2054 = vmin.xlane.f32.xlu0 %v2053
        %v2055 = vpop.xlane.xlu0 %2054
        %vm2056 = vcmp.eq.f32.partialorder %v2053, %v2055
        %v2057 = vsel %vm2056, %v2052, inf
        %2058 = vmin.xlane.f32.xlu0 %v2057
        %v2059 = vpop.xlane.xlu0 %2058
        %v2060 = vcvt.f32.s32 %v2059
        %v2061 = vcvt.f32.s32 %v2055
        %v2062 = vshll.u32 %v2061, 16
        %v2063 = vadd.s32 %v2062, %v2060
        %v2064 = vand.u32 %v1892, 65535
        %v2065 = vshra.s32 %v1892, 16
        %v2066 = vcvt.s32.f32 %v2064
        %v2067 = vcvt.s32.f32 %v2065
        %2068 = vmin.xlane.f32.xlu0 %v2067
        %v2069 = vpop.xlane.xlu0 %2068
        %vm2070 = vcmp.eq.f32.partialorder %v2067, %v2069
        %v2071 = vsel %vm2070, %v2066, inf
        %2072 = vmin.xlane.f32.xlu0 %v2071
        %v2073 = vpop.xlane.xlu0 %2072
        %v2074 = vcvt.f32.s32 %v2073
        %v2075 = vcvt.f32.s32 %v2069
        %v2076 = vshll.u32 %v2075, 16
        %v2077 = vadd.s32 %v2076, %v2074
        %v2078 = vand.u32 %v1893, 65535
        %v2079 = vshra.s32 %v1893, 16
        %v2080 = vcvt.s32.f32 %v2078
        %v2081 = vcvt.s32.f32 %v2079
        %2082 = vmin.xlane.f32.xlu0 %v2081
        %v2083 = vpop.xlane.xlu0 %2082
        %vm2084 = vcmp.eq.f32.partialorder %v2081, %v2083
        %v2085 = vsel %vm2084, %v2080, inf
        %2086 = vmin.xlane.f32.xlu0 %v2085
        %v2087 = vpop.xlane.xlu0 %2086
        %v2088 = vcvt.f32.s32 %v2087
        %v2089 = vcvt.f32.s32 %v2083
        %v2090 = vshll.u32 %v2089, 16
        %v2091 = vadd.s32 %v2090, %v2088
        %v2092 = vand.u32 %v1894, 65535
        %v2093 = vshra.s32 %v1894, 16
        %v2094 = vcvt.s32.f32 %v2092
        %v2095 = vcvt.s32.f32 %v2093
        %2096 = vmin.xlane.f32.xlu0 %v2095
        %v2097 = vpop.xlane.xlu0 %2096
        %vm2098 = vcmp.eq.f32.partialorder %v2095, %v2097
        %v2099 = vsel %vm2098, %v2094, inf
        %2100 = vmin.xlane.f32.xlu0 %v2099
        %v2101 = vpop.xlane.xlu0 %2100
        %v2102 = vcvt.f32.s32 %v2101
        %v2103 = vcvt.f32.s32 %v2097
        %v2104 = vshll.u32 %v2103, 16
        %v2105 = vadd.s32 %v2104, %v2102
        %v2106 = vand.u32 %v1895, 65535
        %v2107 = vshra.s32 %v1895, 16
        %v2108 = vcvt.s32.f32 %v2106
        %v2109 = vcvt.s32.f32 %v2107
        %2110 = vmin.xlane.f32.xlu0 %v2109
        %v2111 = vpop.xlane.xlu0 %2110
        %vm2112 = vcmp.eq.f32.partialorder %v2109, %v2111
        %v2113 = vsel %vm2112, %v2108, inf
        %2114 = vmin.xlane.f32.xlu0 %v2113
        %v2115 = vpop.xlane.xlu0 %2114
        %v2116 = vcvt.f32.s32 %v2115
        %v2117 = vcvt.f32.s32 %v2111
        %v2118 = vshll.u32 %v2117, 16
        %v2119 = vadd.s32 %v2118, %v2116
        %vm2120 = vcmp.eq.s32.totalorder %v999, %v1909
        %vm2121 = vcmp.eq.s32.totalorder %v999, %v1923
        %vm2122 = vcmp.eq.s32.totalorder %v999, %v1937
        %vm2123 = vcmp.eq.s32.totalorder %v999, %v1951
        %vm2124 = vcmp.eq.s32.totalorder %v999, %v1965
        %vm2125 = vcmp.eq.s32.totalorder %v999, %v1979
        %vm2126 = vcmp.eq.s32.totalorder %v999, %v1993
        %vm2127 = vcmp.eq.s32.totalorder %v999, %v2007
        %vm2128 = vcmp.eq.s32.totalorder %v999, %v2021
        %vm2129 = vcmp.eq.s32.totalorder %v999, %v2035
        %vm2130 = vcmp.eq.s32.totalorder %v999, %v2049
        %vm2131 = vcmp.eq.s32.totalorder %v999, %v2063
        %vm2132 = vcmp.eq.s32.totalorder %v999, %v2077
        %vm2133 = vcmp.eq.s32.totalorder %v999, %v2091
        %vm2134 = vcmp.eq.s32.totalorder %v999, %v2105
        %vm2135 = vcmp.eq.s32.totalorder %v999, %v2119
        %v2136 = vmax.f32 %v1833, 1e-16
        %v2137 = vmax.f32 %v1835, 1e-16
        %v2138 = vmax.f32 %v1837, 1e-16
        %v2139 = vmax.f32 %v1839, 1e-16
        %v2140 = vmax.f32 %v1841, 1e-16
        %v2141 = vmax.f32 %v1843, 1e-16
        %v2142 = vmax.f32 %v1845, 1e-16
        %v2143 = vmax.f32 %v1847, 1e-16
        %v2144 = vmax.f32 %v1849, 1e-16
        %v2145 = vmax.f32 %v1851, 1e-16
        %v2146 = vmax.f32 %v1853, 1e-16
        %v2147 = vmax.f32 %v1855, 1e-16
        %v2148 = vmax.f32 %v1857, 1e-16
        %v2149 = vmax.f32 %v1859, 1e-16
        %v2150 = vmax.f32 %v1861, 1e-16
        %v2151 = vmax.f32 %v1863, 1e-16
        %v2152 = vrcp.pop %v2136
        %v2153 = vmul.f32 1.0, %v2152
        %v2154 = vrcp.pop %v2137
        %v2155 = vmul.f32 1.0, %v2154
        %v2156 = vrcp.pop %v2138
        %v2157 = vmul.f32 1.0, %v2156
        %v2158 = vrcp.pop %v2139
        %v2159 = vmul.f32 1.0, %v2158
        %v2160 = vrcp.pop %v2140
        %v2161 = vmul.f32 1.0, %v2160
        %v2162 = vrcp.pop %v2141
        %v2163 = vmul.f32 1.0, %v2162
        %v2164 = vrcp.pop %v2142
        %v2165 = vmul.f32 1.0, %v2164
        %v2166 = vrcp.pop %v2143
        %v2167 = vmul.f32 1.0, %v2166
        %v2168 = vrcp.pop %v2144
        %v2169 = vmul.f32 1.0, %v2168
        %v2170 = vrcp.pop %v2145
        %v2171 = vmul.f32 1.0, %v2170
        %v2172 = vrcp.pop %v2146
        %v2173 = vmul.f32 1.0, %v2172
        %v2174 = vrcp.pop %v2147
        %v2175 = vmul.f32 1.0, %v2174
        %v2176 = vrcp.pop %v2148
        %v2177 = vmul.f32 1.0, %v2176
        %v2178 = vrcp.pop %v2149
        %v2179 = vmul.f32 1.0, %v2178
        %v2180 = vrcp.pop %v2150
        %v2181 = vmul.f32 1.0, %v2180
        %v2182 = vrcp.pop %v2151
        %v2183 = vmul.f32 1.0, %v2182
        %v2184 = vsel %vm2120, %v2153, 0.0
        %v2185 = vsel %vm2121, %v2155, 0.0
        %v2186 = vsel %vm2122, %v2157, 0.0
        %v2187 = vsel %vm2123, %v2159, 0.0
        %v2188 = vsel %vm2124, %v2161, 0.0
        %v2189 = vsel %vm2125, %v2163, 0.0
        %v2190 = vsel %vm2126, %v2165, 0.0
        %v2191 = vsel %vm2127, %v2167, 0.0
        %v2192 = vsel %vm2128, %v2169, 0.0
        %v2193 = vsel %vm2129, %v2171, 0.0
        %v2194 = vsel %vm2130, %v2173, 0.0
        %v2195 = vsel %vm2131, %v2175, 0.0
        %v2196 = vsel %vm2132, %v2177, 0.0
        %v2197 = vsel %vm2133, %v2179, 0.0
        %v2198 = vsel %vm2134, %v2181, 0.0
        %v2199 = vsel %vm2135, %v2183, 0.0
        %v2200 = vadd.f32 %v1784, %v2184
        %v2201 = vadd.f32 %v1785, %v2185
        %v2202 = vadd.f32 %v1786, %v2186
        %v2203 = vadd.f32 %v1787, %v2187
        %v2204 = vadd.f32 %v1788, %v2188
        %v2205 = vadd.f32 %v1789, %v2189
        %v2206 = vadd.f32 %v1790, %v2190
        %v2207 = vadd.f32 %v1791, %v2191
        %v2208 = vadd.f32 %v1792, %v2192
        %v2209 = vadd.f32 %v1793, %v2193
        %v2210 = vadd.f32 %v1794, %v2194
        %v2211 = vadd.f32 %v1795, %v2195
        %v2212 = vadd.f32 %v1796, %v2196
        %v2213 = vadd.f32 %v1797, %v2197
        %v2214 = vadd.f32 %v1798, %v2198
        %v2215 = vadd.f32 %v1799, %v2199
        %v2216 = vadd.f32 %v1800, %v2153
        %v2217 = vadd.f32 %v1801, %v2155
        %v2218 = vadd.f32 %v1802, %v2157
        %v2219 = vadd.f32 %v1803, %v2159
        %v2220 = vadd.f32 %v1804, %v2161
        %v2221 = vadd.f32 %v1805, %v2163
        %v2222 = vadd.f32 %v1806, %v2165
        %v2223 = vadd.f32 %v1807, %v2167
        %v2224 = vadd.f32 %v1808, %v2169
        %v2225 = vadd.f32 %v1809, %v2171
        %v2226 = vadd.f32 %v1810, %v2173
        %v2227 = vadd.f32 %v1811, %v2175
        %v2228 = vadd.f32 %v1812, %v2177
        %v2229 = vadd.f32 %v1813, %v2179
        %v2230 = vadd.f32 %v1814, %v2181
        %v2231 = vadd.f32 %v1815, %v2183
        %v2232 = vrcp.pop %v2216
        %v2233 = vrcp.pop %v2217
        %v2234 = vrcp.pop %v2218
        %v2235 = vrcp.pop %v2219
        %v2236 = vrcp.pop %v2220
        %v2237 = vrcp.pop %v2221
        %v2238 = vrcp.pop %v2222
        %v2239 = vrcp.pop %v2223
        %v2240 = vrcp.pop %v2224
        %v2241 = vrcp.pop %v2225
        %v2242 = vrcp.pop %v2226
        %v2243 = vrcp.pop %v2227
        %v2244 = vrcp.pop %v2228
        %v2245 = vrcp.pop %v2229
        %v2246 = vrcp.pop %v2230
        %v2247 = vrcp.pop %v2231
        %v2248 = vld [vmem:[%s5] sm:$0xff]
        %v2249 = vld [vmem:[%s5 + $0x8] sm:$0xff]
        %v2250 = vld [vmem:[%s5 + $0x10] sm:$0xff]
        %v2251 = vld [vmem:[%s5 + $0x18] sm:$0xff]
        %v2252 = vld [vmem:[%s5 + $0x20] sm:$0xff]
        %v2253 = vld [vmem:[%s5 + $0x28] sm:$0xff]
        %v2254 = vld [vmem:[%s5 + $0x30] sm:$0xff]
        %v2255 = vld [vmem:[%s5 + $0x38] sm:$0xff]
        %v2256 = vld [vmem:[%s5 + $0x40] sm:$0xff]
        %v2257 = vld [vmem:[%s5 + $0x48] sm:$0xff]
        %v2258 = vld [vmem:[%s5 + $0x50] sm:$0xff]
        %v2259 = vld [vmem:[%s5 + $0x58] sm:$0xff]
        %v2260 = vld [vmem:[%s5 + $0x60] sm:$0xff]
        %v2261 = vld [vmem:[%s5 + $0x68] sm:$0xff]
        %v2262 = vld [vmem:[%s5 + $0x70] sm:$0xff]
        %v2263 = vld [vmem:[%s5 + $0x78] sm:$0xff]
        %2264 = vmatprep.subr.mxu0 0.0
        %2265 = vmatpush1.msra.mxu0 %v2263
        %2266 = vmatprep.subr.mxu0 0.0
        %2267 = vmatpush1.msra.mxu0 %v2262
        %2268 = vmatprep.subr.mxu0 0.0
        %2269 = vmatpush1.msra.mxu0 %v2261
        %2270 = vmatprep.subr.mxu0 0.0
        %2271 = vmatpush1.msra.mxu0 %v2260
        %2272 = vmatprep.subr.mxu0 0.0
        %2273 = vmatpush1.msra.mxu0 %v2259
        %2274 = vmatprep.subr.mxu0 0.0
        %2275 = vmatpush1.msra.mxu0 %v2258
        %2276 = vmatprep.subr.mxu0 0.0
        %2277 = vmatpush1.msra.mxu0 %v2257
        %2278 = vmatprep.subr.mxu0 0.0
        %2279 = vmatpush1.msra.mxu0 %v2256
        %2280 = vmatprep.subr.mxu0 0.0
        %2281 = vmatpush1.msra.mxu0 %v2255
        %2282 = vmatprep.subr.mxu0 0.0
        %2283 = vmatpush1.msra.mxu0 %v2254
        %2284 = vmatprep.subr.mxu0 0.0
        %2285 = vmatpush1.msra.mxu0 %v2253
        %2286 = vmatprep.subr.mxu0 0.0
        %2287 = vmatpush1.msra.mxu0 %v2252
        %2288 = vmatprep.subr.mxu0 0.0
        %2289 = vmatpush1.msra.mxu0 %v2251
        %2290 = vmatprep.subr.mxu0 0.0
        %2291 = vmatpush1.msra.mxu0 %v2250
        %2292 = vmatprep.subr.mxu0 0.0
        %2293 = vmatpush1.msra.mxu0 %v2249
        %2294 = vmatprep.subr.mxu0 0.0
        %2295 = vmatpush1.msra.mxu0 %v2248
        %2296 = vmatprep.subr.mxu0 0.0
        %2297 = vmatpush2.msra.mxu0 0.0
        %2298 = vmatprep.subr.mxu0 0.0
        %2299 = vmatpush2.msra.mxu0 0.0
        %2300 = vmatprep.subr.mxu0 0.0
        %2301 = vmatpush2.msra.mxu0 0.0
        %2302 = vmatprep.subr.mxu0 0.0
        %2303 = vmatpush2.msra.mxu0 0.0
        %2304 = vmatprep.subr.mxu0 0.0
        %2305 = vmatpush2.msra.mxu0 0.0
        %2306 = vmatprep.subr.mxu0 0.0
        %2307 = vmatpush2.msra.mxu0 0.0
        %2308 = vmatprep.subr.mxu0 0.0
        %2309 = vmatpush2.msra.mxu0 0.0
        %2310 = vmatprep.subr.mxu0 0.0
        %2311 = vmatpush2.msra.mxu0 0.0
        %2312 = vmatprep.subr.mxu0 0.0
        %2313 = vmatpush2.msra.mxu0 0.0
        %2314 = vmatprep.subr.mxu0 0.0
        %2315 = vmatpush2.msra.mxu0 0.0
        %2316 = vmatprep.subr.mxu0 0.0
        %2317 = vmatpush2.msra.mxu0 0.0
        %2318 = vmatprep.subr.mxu0 0.0
        %2319 = vmatpush2.msra.mxu0 0.0
        %2320 = vmatprep.subr.mxu0 0.0
        %2321 = vmatpush2.msra.mxu0 0.0
        %2322 = vmatprep.subr.mxu0 0.0
        %2323 = vmatpush2.msra.mxu0 0.0
        %2324 = vmatprep.subr.mxu0 0.0
        %2325 = vmatpush2.msra.mxu0 0.0
        %2326 = vmatprep.subr.mxu0 0.0
        %2327 = vmatpush2.msra.mxu0 0.0
        %2328 = vmatprep.mubr.f32.mxu0 0.0
        %2329 = vmatmul.mubr.f32.gmra.mxu0 %v2200
        %v2330 = vpop.f32.mrf.mxu0
        %v2331 = vadd.f32 0.0, %v2330
        %v2332 = vpop.f32.mrf.mxu0
        %2333 = vmatprep.mubr.f32.mxu0 0.0
        %2334 = vmatmul.mubr.f32.gmra.mxu0 %v2201
        %v2335 = vpop.f32.mrf.mxu0
        %v2336 = vadd.f32 0.0, %v2335
        %v2337 = vpop.f32.mrf.mxu0
        %2338 = vmatprep.mubr.f32.mxu0 0.0
        %2339 = vmatmul.mubr.f32.gmra.mxu0 %v2202
        %v2340 = vpop.f32.mrf.mxu0
        %v2341 = vadd.f32 0.0, %v2340
        %v2342 = vpop.f32.mrf.mxu0
        %2343 = vmatprep.mubr.f32.mxu0 0.0
        %2344 = vmatmul.mubr.f32.gmra.mxu0 %v2203
        %v2345 = vpop.f32.mrf.mxu0
        %v2346 = vadd.f32 0.0, %v2345
        %v2347 = vpop.f32.mrf.mxu0
        %2348 = vmatprep.mubr.f32.mxu0 0.0
        %2349 = vmatmul.mubr.f32.gmra.mxu0 %v2204
        %v2350 = vpop.f32.mrf.mxu0
        %v2351 = vadd.f32 0.0, %v2350
        %v2352 = vpop.f32.mrf.mxu0
        %2353 = vmatprep.mubr.f32.mxu0 0.0
        %2354 = vmatmul.mubr.f32.gmra.mxu0 %v2205
        %v2355 = vpop.f32.mrf.mxu0
        %v2356 = vadd.f32 0.0, %v2355
        %v2357 = vpop.f32.mrf.mxu0
        %2358 = vmatprep.mubr.f32.mxu0 0.0
        %2359 = vmatmul.mubr.f32.gmra.mxu0 %v2206
        %v2360 = vpop.f32.mrf.mxu0
        %v2361 = vadd.f32 0.0, %v2360
        %v2362 = vpop.f32.mrf.mxu0
        %2363 = vmatprep.mubr.f32.mxu0 0.0
        %2364 = vmatmul.mubr.f32.gmra.mxu0 %v2207
        %v2365 = vpop.f32.mrf.mxu0
        %v2366 = vadd.f32 0.0, %v2365
        %v2367 = vpop.f32.mrf.mxu0
        %2368 = vmatprep.mubr.f32.mxu0 0.0
        %2369 = vmatmul.mubr.f32.gmra.mxu0 %v2208
        %v2370 = vpop.f32.mrf.mxu0
        %v2371 = vadd.f32 0.0, %v2370
        %v2372 = vpop.f32.mrf.mxu0
        %2373 = vmatprep.mubr.f32.mxu0 0.0
        %2374 = vmatmul.mubr.f32.gmra.mxu0 %v2209
        %v2375 = vpop.f32.mrf.mxu0
        %v2376 = vadd.f32 0.0, %v2375
        %v2377 = vpop.f32.mrf.mxu0
        %2378 = vmatprep.mubr.f32.mxu0 0.0
        %2379 = vmatmul.mubr.f32.gmra.mxu0 %v2210
        %v2380 = vpop.f32.mrf.mxu0
        %v2381 = vadd.f32 0.0, %v2380
        %v2382 = vpop.f32.mrf.mxu0
        %2383 = vmatprep.mubr.f32.mxu0 0.0
        %2384 = vmatmul.mubr.f32.gmra.mxu0 %v2211
        %v2385 = vpop.f32.mrf.mxu0
        %v2386 = vadd.f32 0.0, %v2385
        %v2387 = vpop.f32.mrf.mxu0
        %2388 = vmatprep.mubr.f32.mxu0 0.0
        %2389 = vmatmul.mubr.f32.gmra.mxu0 %v2212
        %v2390 = vpop.f32.mrf.mxu0
        %v2391 = vadd.f32 0.0, %v2390
        %v2392 = vpop.f32.mrf.mxu0
        %2393 = vmatprep.mubr.f32.mxu0 0.0
        %2394 = vmatmul.mubr.f32.gmra.mxu0 %v2213
        %v2395 = vpop.f32.mrf.mxu0
        %v2396 = vadd.f32 0.0, %v2395
        %v2397 = vpop.f32.mrf.mxu0
        %2398 = vmatprep.mubr.f32.mxu0 0.0
        %2399 = vmatmul.mubr.f32.gmra.mxu0 %v2214
        %v2400 = vpop.f32.mrf.mxu0
        %v2401 = vadd.f32 0.0, %v2400
        %v2402 = vpop.f32.mrf.mxu0
        %2403 = vmatprep.mubr.f32.mxu0 0.0
        %2404 = vmatmul.mubr.f32.gmra.mxu0 %v2215
        %v2405 = vpop.f32.mrf.mxu0
        %v2406 = vadd.f32 0.0, %v2405
        %v2407 = vpop.f32.mrf.mxu0
        %2408 = vdwg.mxu0
        %v2409 = vmul.f32 %v2331, %v2232
        %v2410 = vmul.f32 %v2336, %v2233
        %v2411 = vmul.f32 %v2341, %v2234
        %v2412 = vmul.f32 %v2346, %v2235
        %v2413 = vmul.f32 %v2351, %v2236
        %v2414 = vmul.f32 %v2356, %v2237
        %v2415 = vmul.f32 %v2361, %v2238
        %v2416 = vmul.f32 %v2366, %v2239
        %v2417 = vmul.f32 %v2371, %v2240
        %v2418 = vmul.f32 %v2376, %v2241
        %v2419 = vmul.f32 %v2381, %v2242
        %v2420 = vmul.f32 %v2386, %v2243
        %v2421 = vmul.f32 %v2391, %v2244
        %v2422 = vmul.f32 %v2396, %v2245
        %v2423 = vmul.f32 %v2401, %v2246
        %v2424 = vmul.f32 %v2406, %v2247
        %v2425 = vld [vmem:[%s6] sm:$0xff]
        %v2426 = vld [vmem:[%s6 + $0x8] sm:$0xff]
        %v2427 = vld [vmem:[%s6 + $0x10] sm:$0xff]
        %v2428 = vld [vmem:[%s6 + $0x18] sm:$0xff]
        %v2429 = vld [vmem:[%s429] sm:$0xff]
        %v2430 = vld [vmem:[%s429 + $0x8] sm:$0xff]
        %v2431 = vld [vmem:[%s429 + $0x10] sm:$0xff]
        %v2432 = vld [vmem:[%s429 + $0x18] sm:$0xff]
        %v2433 = vld [vmem:[%s429 + $0x20] sm:$0xff]
        %v2434 = vld [vmem:[%s429 + $0x28] sm:$0xff]
        %v2435 = vld [vmem:[%s429 + $0x30] sm:$0xff]
        %v2436 = vld [vmem:[%s429 + $0x38] sm:$0xff]
        %v2437 = vld [vmem:[%s429 + $0x40] sm:$0xff]
        %v2438 = vld [vmem:[%s429 + $0x48] sm:$0xff]
        %v2439 = vld [vmem:[%s429 + $0x50] sm:$0xff]
        %v2440 = vld [vmem:[%s429 + $0x58] sm:$0xff]
        %v2441 = vld [vmem:[%s429 + $0x60] sm:$0xff]
        %v2442 = vld [vmem:[%s429 + $0x68] sm:$0xff]
        %v2443 = vld [vmem:[%s429 + $0x70] sm:$0xff]
        %v2444 = vld [vmem:[%s429 + $0x78] sm:$0xff]
        %v2445 = vld [vmem:[%s7] sm:$0xff]
        %v2446 = vld [vmem:[%s7 + $0x8] sm:$0xff]
        %vm2447 = vcmask 130048
        %v2449 = vsel %vm2447, %v2429, 0
        %v2452 = vsel %vm2447, %v2430, 0
        %v2455 = vsel %vm2447, %v2431, 0
        %v2458 = vsel %vm2447, %v2432, 0
        %v2461 = vsel %vm2447, %v2433, 0
        %v2464 = vsel %vm2447, %v2434, 0
        %v2467 = vsel %vm2447, %v2435, 0
        %v2470 = vsel %vm2447, %v2436, 0
        %v2473 = vsel %vm2447, %v2437, 0
        %v2476 = vsel %vm2447, %v2438, 0
        %v2479 = vsel %vm2447, %v2439, 0
        %v2482 = vsel %vm2447, %v2440, 0
        %v2485 = vsel %vm2447, %v2441, 0
        %v2488 = vsel %vm2447, %v2442, 0
        %v2491 = vsel %vm2447, %v2443, 0
        %v2494 = vsel %vm2447, %v2444, 0
        %2496 = vmatprep.subr.mxu0 0.0
        %2497 = vmatpush1.msra.mxu0 0.0
        %2498 = vmatprep.subr.mxu0 0.0
        %2499 = vmatpush1.msra.mxu0 0.0
        %2500 = vmatprep.subr.mxu0 0.0
        %2501 = vmatpush1.msra.mxu0 0.0
        %2502 = vmatprep.subr.mxu0 0.0
        %2503 = vmatpush1.msra.mxu0 0.0
        %2504 = vmatprep.subr.mxu0 0.0
        %2505 = vmatpush1.msra.mxu0 0.0
        %2506 = vmatprep.subr.mxu0 0.0
        %2507 = vmatpush1.msra.mxu0 0.0
        %2508 = vmatprep.subr.mxu0 0.0
        %2509 = vmatpush1.msra.mxu0 0.0
        %2510 = vmatprep.subr.mxu0 0.0
        %2511 = vmatpush1.msra.mxu0 0.0
        %2512 = vmatprep.subr.mxu0 0.0
        %2513 = vmatpush1.msra.mxu0 0.0
        %2514 = vmatprep.subr.mxu0 0.0
        %2515 = vmatpush1.msra.mxu0 0.0
        %2516 = vmatprep.subr.mxu0 0.0
        %2517 = vmatpush1.msra.mxu0 0.0
        %2518 = vmatprep.subr.mxu0 0.0
        %2519 = vmatpush1.msra.mxu0 0.0
        %2520 = vmatprep.subr.mxu0 0.0
        %2521 = vmatpush1.msra.mxu0 0.0
        %2522 = vmatprep.subr.mxu0 0.0
        %2523 = vmatpush1.msra.mxu0 0.0
        %2524 = vmatprep.subr.mxu0 0.0
        %2525 = vmatpush1.msra.mxu0 %v2446
        %2526 = vmatprep.subr.mxu0 0.0
        %2527 = vmatpush1.msra.mxu0 %v2445
        %2528 = vmatprep.subr.mxu0 0.0
        %2529 = vmatpush2.msra.mxu0 0.0
        %2530 = vmatprep.subr.mxu0 0.0
        %2531 = vmatpush2.msra.mxu0 0.0
        %2532 = vmatprep.subr.mxu0 0.0
        %2533 = vmatpush2.msra.mxu0 0.0
        %2534 = vmatprep.subr.mxu0 0.0
        %2535 = vmatpush2.msra.mxu0 0.0
        %2536 = vmatprep.subr.mxu0 0.0
        %2537 = vmatpush2.msra.mxu0 0.0
        %2538 = vmatprep.subr.mxu0 0.0
        %2539 = vmatpush2.msra.mxu0 0.0
        %2540 = vmatprep.subr.mxu0 0.0
        %2541 = vmatpush2.msra.mxu0 0.0
        %2542 = vmatprep.subr.mxu0 0.0
        %2543 = vmatpush2.msra.mxu0 0.0
        %2544 = vmatprep.subr.mxu0 0.0
        %2545 = vmatpush2.msra.mxu0 0.0
        %2546 = vmatprep.subr.mxu0 0.0
        %2547 = vmatpush2.msra.mxu0 0.0
        %2548 = vmatprep.subr.mxu0 0.0
        %2549 = vmatpush2.msra.mxu0 0.0
        %2550 = vmatprep.subr.mxu0 0.0
        %2551 = vmatpush2.msra.mxu0 0.0
        %2552 = vmatprep.subr.mxu0 0.0
        %2553 = vmatpush2.msra.mxu0 0.0
        %2554 = vmatprep.subr.mxu0 0.0
        %2555 = vmatpush2.msra.mxu0 0.0
        %2556 = vmatprep.subr.mxu0 0.0
        %2557 = vmatpush2.msra.mxu0 0.0
        %2558 = vmatprep.subr.mxu0 0.0
        %2559 = vmatpush2.msra.mxu0 0.0
        %2560 = vmatprep.mubr.f32.mxu0 0.0
        %2561 = vmatmul.mubr.f32.gmra.mxu0 %v2449
        %v2562 = vpop.f32.mrf.mxu0
        %v2563 = vadd.f32 0.0, %v2562
        %v2564 = vpop.f32.mrf.mxu0
        %2565 = vmatprep.mubr.f32.mxu0 0.0
        %2566 = vmatmul.mubr.f32.gmra.mxu0 %v2452
        %v2567 = vpop.f32.mrf.mxu0
        %v2568 = vadd.f32 0.0, %v2567
        %v2569 = vpop.f32.mrf.mxu0
        %2570 = vmatprep.mubr.f32.mxu0 0.0
        %2571 = vmatmul.mubr.f32.gmra.mxu0 %v2455
        %v2572 = vpop.f32.mrf.mxu0
        %v2573 = vadd.f32 0.0, %v2572
        %v2574 = vpop.f32.mrf.mxu0
        %2575 = vmatprep.mubr.f32.mxu0 0.0
        %2576 = vmatmul.mubr.f32.gmra.mxu0 %v2458
        %v2577 = vpop.f32.mrf.mxu0
        %v2578 = vadd.f32 0.0, %v2577
        %v2579 = vpop.f32.mrf.mxu0
        %2580 = vmatprep.mubr.f32.mxu0 0.0
        %2581 = vmatmul.mubr.f32.gmra.mxu0 %v2461
        %v2582 = vpop.f32.mrf.mxu0
        %v2583 = vadd.f32 0.0, %v2582
        %v2584 = vpop.f32.mrf.mxu0
        %2585 = vmatprep.mubr.f32.mxu0 0.0
        %2586 = vmatmul.mubr.f32.gmra.mxu0 %v2464
        %v2587 = vpop.f32.mrf.mxu0
        %v2588 = vadd.f32 0.0, %v2587
        %v2589 = vpop.f32.mrf.mxu0
        %2590 = vmatprep.mubr.f32.mxu0 0.0
        %2591 = vmatmul.mubr.f32.gmra.mxu0 %v2467
        %v2592 = vpop.f32.mrf.mxu0
        %v2593 = vadd.f32 0.0, %v2592
        %v2594 = vpop.f32.mrf.mxu0
        %2595 = vmatprep.mubr.f32.mxu0 0.0
        %2596 = vmatmul.mubr.f32.gmra.mxu0 %v2470
        %v2597 = vpop.f32.mrf.mxu0
        %v2598 = vadd.f32 0.0, %v2597
        %v2599 = vpop.f32.mrf.mxu0
        %2600 = vmatprep.mubr.f32.mxu0 0.0
        %2601 = vmatmul.mubr.f32.gmra.mxu0 %v2473
        %v2602 = vpop.f32.mrf.mxu0
        %v2603 = vadd.f32 0.0, %v2602
        %v2604 = vpop.f32.mrf.mxu0
        %2605 = vmatprep.mubr.f32.mxu0 0.0
        %2606 = vmatmul.mubr.f32.gmra.mxu0 %v2476
        %v2607 = vpop.f32.mrf.mxu0
        %v2608 = vadd.f32 0.0, %v2607
        %v2609 = vpop.f32.mrf.mxu0
        %2610 = vmatprep.mubr.f32.mxu0 0.0
        %2611 = vmatmul.mubr.f32.gmra.mxu0 %v2479
        %v2612 = vpop.f32.mrf.mxu0
        %v2613 = vadd.f32 0.0, %v2612
        %v2614 = vpop.f32.mrf.mxu0
        %2615 = vmatprep.mubr.f32.mxu0 0.0
        %2616 = vmatmul.mubr.f32.gmra.mxu0 %v2482
        %v2617 = vpop.f32.mrf.mxu0
        %v2618 = vadd.f32 0.0, %v2617
        %v2619 = vpop.f32.mrf.mxu0
        %2620 = vmatprep.mubr.f32.mxu0 0.0
        %2621 = vmatmul.mubr.f32.gmra.mxu0 %v2485
        %v2622 = vpop.f32.mrf.mxu0
        %v2623 = vadd.f32 0.0, %v2622
        %v2624 = vpop.f32.mrf.mxu0
        %2625 = vmatprep.mubr.f32.mxu0 0.0
        %2626 = vmatmul.mubr.f32.gmra.mxu0 %v2488
        %v2627 = vpop.f32.mrf.mxu0
        %v2628 = vadd.f32 0.0, %v2627
        %v2629 = vpop.f32.mrf.mxu0
        %2630 = vmatprep.mubr.f32.mxu0 0.0
        %2631 = vmatmul.mubr.f32.gmra.mxu0 %v2491
        %v2632 = vpop.f32.mrf.mxu0
        %v2633 = vadd.f32 0.0, %v2632
        %v2634 = vpop.f32.mrf.mxu0
        %2635 = vmatprep.mubr.f32.mxu0 0.0
        %2636 = vmatmul.mubr.f32.gmra.mxu0 %v2494
        %v2637 = vpop.f32.mrf.mxu0
        %v2638 = vadd.f32 0.0, %v2637
        %v2639 = vpop.f32.mrf.mxu0
        %2640 = vdwg.mxu0
        %vm2641 = vcmask 261120
        %v2643 = vsel %vm2641, %v2409, 0
        %v2646 = vsel %vm2641, %v2410, 0
        %v2649 = vsel %vm2641, %v2411, 0
        %v2652 = vsel %vm2641, %v2412, 0
        %v2655 = vsel %vm2641, %v2413, 0
        %v2658 = vsel %vm2641, %v2414, 0
        %v2661 = vsel %vm2641, %v2415, 0
        %v2664 = vsel %vm2641, %v2416, 0
        %v2667 = vsel %vm2641, %v2417, 0
        %v2670 = vsel %vm2641, %v2418, 0
        %v2673 = vsel %vm2641, %v2419, 0
        %v2676 = vsel %vm2641, %v2420, 0
        %v2679 = vsel %vm2641, %v2421, 0
        %v2682 = vsel %vm2641, %v2422, 0
        %v2685 = vsel %vm2641, %v2423, 0
        %v2688 = vsel %vm2641, %v2424, 0
        %2690 = vmatprep.subr.mxu0 0.0
        %2691 = vmatpush1.msra.mxu0 0.0
        %2692 = vmatprep.subr.mxu0 0.0
        %2693 = vmatpush1.msra.mxu0 0.0
        %2694 = vmatprep.subr.mxu0 0.0
        %2695 = vmatpush1.msra.mxu0 0.0
        %2696 = vmatprep.subr.mxu0 0.0
        %2697 = vmatpush1.msra.mxu0 0.0
        %2698 = vmatprep.subr.mxu0 0.0
        %2699 = vmatpush1.msra.mxu0 0.0
        %2700 = vmatprep.subr.mxu0 0.0
        %2701 = vmatpush1.msra.mxu0 0.0
        %2702 = vmatprep.subr.mxu0 0.0
        %2703 = vmatpush1.msra.mxu0 0.0
        %2704 = vmatprep.subr.mxu0 0.0
        %2705 = vmatpush1.msra.mxu0 0.0
        %2706 = vmatprep.subr.mxu0 0.0
        %2707 = vmatpush1.msra.mxu0 0.0
        %2708 = vmatprep.subr.mxu0 0.0
        %2709 = vmatpush1.msra.mxu0 0.0
        %2710 = vmatprep.subr.mxu0 0.0
        %2711 = vmatpush1.msra.mxu0 0.0
        %2712 = vmatprep.subr.mxu0 0.0
        %2713 = vmatpush1.msra.mxu0 0.0
        %2714 = vmatprep.subr.mxu0 0.0
        %2715 = vmatpush1.msra.mxu0 %v2428
        %2716 = vmatprep.subr.mxu0 0.0
        %2717 = vmatpush1.msra.mxu0 %v2427
        %2718 = vmatprep.subr.mxu0 0.0
        %2719 = vmatpush1.msra.mxu0 %v2426
        %2720 = vmatprep.subr.mxu0 0.0
        %2721 = vmatpush1.msra.mxu0 %v2425
        %2722 = vmatprep.subr.mxu0 0.0
        %2723 = vmatpush2.msra.mxu0 0.0
        %2724 = vmatprep.subr.mxu0 0.0
        %2725 = vmatpush2.msra.mxu0 0.0
        %2726 = vmatprep.subr.mxu0 0.0
        %2727 = vmatpush2.msra.mxu0 0.0
        %2728 = vmatprep.subr.mxu0 0.0
        %2729 = vmatpush2.msra.mxu0 0.0
        %2730 = vmatprep.subr.mxu0 0.0
        %2731 = vmatpush2.msra.mxu0 0.0
        %2732 = vmatprep.subr.mxu0 0.0
        %2733 = vmatpush2.msra.mxu0 0.0
        %2734 = vmatprep.subr.mxu0 0.0
        %2735 = vmatpush2.msra.mxu0 0.0
        %2736 = vmatprep.subr.mxu0 0.0
        %2737 = vmatpush2.msra.mxu0 0.0
        %2738 = vmatprep.subr.mxu0 0.0
        %2739 = vmatpush2.msra.mxu0 0.0
        %2740 = vmatprep.subr.mxu0 0.0
        %2741 = vmatpush2.msra.mxu0 0.0
        %2742 = vmatprep.subr.mxu0 0.0
        %2743 = vmatpush2.msra.mxu0 0.0
        %2744 = vmatprep.subr.mxu0 0.0
        %2745 = vmatpush2.msra.mxu0 0.0
        %2746 = vmatprep.subr.mxu0 0.0
        %2747 = vmatpush2.msra.mxu0 0.0
        %2748 = vmatprep.subr.mxu0 0.0
        %2749 = vmatpush2.msra.mxu0 0.0
        %2750 = vmatprep.subr.mxu0 0.0
        %2751 = vmatpush2.msra.mxu0 0.0
        %2752 = vmatprep.subr.mxu0 0.0
        %2753 = vmatpush2.msra.mxu0 0.0
        %2754 = vmatprep.mubr.f32.mxu0 0.0
        %2755 = vmatmul.mubr.f32.gmra.mxu0 %v2643
        %v2756 = vpop.f32.mrf.mxu0
        %v2757 = vadd.f32 %v2563, %v2756
        %v2758 = vpop.f32.mrf.mxu0
        %2759 = vmatprep.mubr.f32.mxu0 0.0
        %2760 = vmatmul.mubr.f32.gmra.mxu0 %v2646
        %v2761 = vpop.f32.mrf.mxu0
        %v2762 = vadd.f32 %v2568, %v2761
        %v2763 = vpop.f32.mrf.mxu0
        %2764 = vmatprep.mubr.f32.mxu0 0.0
        %2765 = vmatmul.mubr.f32.gmra.mxu0 %v2649
        %v2766 = vpop.f32.mrf.mxu0
        %v2767 = vadd.f32 %v2573, %v2766
        %v2768 = vpop.f32.mrf.mxu0
        %2769 = vmatprep.mubr.f32.mxu0 0.0
        %2770 = vmatmul.mubr.f32.gmra.mxu0 %v2652
        %v2771 = vpop.f32.mrf.mxu0
        %v2772 = vadd.f32 %v2578, %v2771
        %v2773 = vpop.f32.mrf.mxu0
        %2774 = vmatprep.mubr.f32.mxu0 0.0
        %2775 = vmatmul.mubr.f32.gmra.mxu0 %v2655
        %v2776 = vpop.f32.mrf.mxu0
        %v2777 = vadd.f32 %v2583, %v2776
        %v2778 = vpop.f32.mrf.mxu0
        %2779 = vmatprep.mubr.f32.mxu0 0.0
        %2780 = vmatmul.mubr.f32.gmra.mxu0 %v2658
        %v2781 = vpop.f32.mrf.mxu0
        %v2782 = vadd.f32 %v2588, %v2781
        %v2783 = vpop.f32.mrf.mxu0
        %2784 = vmatprep.mubr.f32.mxu0 0.0
        %2785 = vmatmul.mubr.f32.gmra.mxu0 %v2661
        %v2786 = vpop.f32.mrf.mxu0
        %v2787 = vadd.f32 %v2593, %v2786
        %v2788 = vpop.f32.mrf.mxu0
        %2789 = vmatprep.mubr.f32.mxu0 0.0
        %2790 = vmatmul.mubr.f32.gmra.mxu0 %v2664
        %v2791 = vpop.f32.mrf.mxu0
        %v2792 = vadd.f32 %v2598, %v2791
        %v2793 = vpop.f32.mrf.mxu0
        %2794 = vmatprep.mubr.f32.mxu0 0.0
        %2795 = vmatmul.mubr.f32.gmra.mxu0 %v2667
        %v2796 = vpop.f32.mrf.mxu0
        %v2797 = vadd.f32 %v2603, %v2796
        %v2798 = vpop.f32.mrf.mxu0
        %2799 = vmatprep.mubr.f32.mxu0 0.0
        %2800 = vmatmul.mubr.f32.gmra.mxu0 %v2670
        %v2801 = vpop.f32.mrf.mxu0
        %v2802 = vadd.f32 %v2608, %v2801
        %v2803 = vpop.f32.mrf.mxu0
        %2804 = vmatprep.mubr.f32.mxu0 0.0
        %2805 = vmatmul.mubr.f32.gmra.mxu0 %v2673
        %v2806 = vpop.f32.mrf.mxu0
        %v2807 = vadd.f32 %v2613, %v2806
        %v2808 = vpop.f32.mrf.mxu0
        %2809 = vmatprep.mubr.f32.mxu0 0.0
        %2810 = vmatmul.mubr.f32.gmra.mxu0 %v2676
        %v2811 = vpop.f32.mrf.mxu0
        %v2812 = vadd.f32 %v2618, %v2811
        %v2813 = vpop.f32.mrf.mxu0
        %2814 = vmatprep.mubr.f32.mxu0 0.0
        %2815 = vmatmul.mubr.f32.gmra.mxu0 %v2679
        %v2816 = vpop.f32.mrf.mxu0
        %v2817 = vadd.f32 %v2623, %v2816
        %v2818 = vpop.f32.mrf.mxu0
        %2819 = vmatprep.mubr.f32.mxu0 0.0
        %2820 = vmatmul.mubr.f32.gmra.mxu0 %v2682
        %v2821 = vpop.f32.mrf.mxu0
        %v2822 = vadd.f32 %v2628, %v2821
        %v2823 = vpop.f32.mrf.mxu0
        %2824 = vmatprep.mubr.f32.mxu0 0.0
        %2825 = vmatmul.mubr.f32.gmra.mxu0 %v2685
        %v2826 = vpop.f32.mrf.mxu0
        %v2827 = vadd.f32 %v2633, %v2826
        %v2828 = vpop.f32.mrf.mxu0
        %2829 = vmatprep.mubr.f32.mxu0 0.0
        %2830 = vmatmul.mubr.f32.gmra.mxu0 %v2688
        %v2831 = vpop.f32.mrf.mxu0
        %v2832 = vadd.f32 %v2638, %v2831
        %v2833 = vpop.f32.mrf.mxu0
        %2834 = vdwg.mxu0
        %v2835 = vld [vmem:[%s8] sm:$0x1]
        %v2837 = vlaneseq
        %v2838 = vshrl.u32 %v2837, 7
        %v2839 = vsub.s32 0, %v2838
        %v2840 = vrot.slane %v2835, %v2839
        %v2842 = vadd.f32 %v2757, %v2840
        %v2843 = vadd.f32 %v2762, %v2840
        %v2844 = vadd.f32 %v2767, %v2840
        %v2845 = vadd.f32 %v2772, %v2840
        %v2846 = vadd.f32 %v2777, %v2840
        %v2847 = vadd.f32 %v2782, %v2840
        %v2848 = vadd.f32 %v2787, %v2840
        %v2849 = vadd.f32 %v2792, %v2840
        %v2850 = vadd.f32 %v2797, %v2840
        %v2851 = vadd.f32 %v2802, %v2840
        %v2852 = vadd.f32 %v2807, %v2840
        %v2853 = vadd.f32 %v2812, %v2840
        %v2854 = vadd.f32 %v2817, %v2840
        %v2855 = vadd.f32 %v2822, %v2840
        %v2856 = vadd.f32 %v2827, %v2840
        %v2857 = vadd.f32 %v2832, %v2840
        %v2858 = vmax.f32 %v2842, 0.0
        %v2859 = vmax.f32 %v2843, 0.0
        %v2860 = vmax.f32 %v2844, 0.0
        %v2861 = vmax.f32 %v2845, 0.0
        %v2862 = vmax.f32 %v2846, 0.0
        %v2863 = vmax.f32 %v2847, 0.0
        %v2864 = vmax.f32 %v2848, 0.0
        %v2865 = vmax.f32 %v2849, 0.0
        %v2866 = vmax.f32 %v2850, 0.0
        %v2867 = vmax.f32 %v2851, 0.0
        %v2868 = vmax.f32 %v2852, 0.0
        %v2869 = vmax.f32 %v2853, 0.0
        %v2870 = vmax.f32 %v2854, 0.0
        %v2871 = vmax.f32 %v2855, 0.0
        %v2872 = vmax.f32 %v2856, 0.0
        %v2873 = vmax.f32 %v2857, 0.0
        %v2874 = vld [vmem:[%s9] sm:$0xff]
        %v2875 = vld [vmem:[%s9 + $0x8] sm:$0xff]
        %v2876 = vld [vmem:[%s9 + $0x10] sm:$0xff]
        %v2877 = vld [vmem:[%s9 + $0x18] sm:$0xff]
        %v2878 = vld [vmem:[%s9 + $0x20] sm:$0xff]
        %v2879 = vld [vmem:[%s9 + $0x28] sm:$0xff]
        %v2880 = vld [vmem:[%s9 + $0x30] sm:$0xff]
        %v2881 = vld [vmem:[%s9 + $0x38] sm:$0xff]
        %v2882 = vld [vmem:[%s9 + $0x40] sm:$0xff]
        %v2883 = vld [vmem:[%s9 + $0x48] sm:$0xff]
        %v2884 = vld [vmem:[%s9 + $0x50] sm:$0xff]
        %v2885 = vld [vmem:[%s9 + $0x58] sm:$0xff]
        %v2886 = vld [vmem:[%s9 + $0x60] sm:$0xff]
        %v2887 = vld [vmem:[%s9 + $0x68] sm:$0xff]
        %v2888 = vld [vmem:[%s9 + $0x70] sm:$0xff]
        %v2889 = vld [vmem:[%s9 + $0x78] sm:$0xff]
        %v2890 = vld [vmem:[%s10] sm:$0x1]
        %v2892 = vlaneseq
        %v2893 = vshrl.u32 %v2892, 7
        %v2894 = vsub.s32 0, %v2893
        %v2895 = vrot.slane %v2890, %v2894
        %2897 = vmatprep.subr.mxu0 0.0
        %2898 = vmatpush1.msra.mxu0 %v2889
        %2899 = vmatprep.subr.mxu0 0.0
        %2900 = vmatpush1.msra.mxu0 %v2888
        %2901 = vmatprep.subr.mxu0 0.0
        %2902 = vmatpush1.msra.mxu0 %v2887
        %2903 = vmatprep.subr.mxu0 0.0
        %2904 = vmatpush1.msra.mxu0 %v2886
        %2905 = vmatprep.subr.mxu0 0.0
        %2906 = vmatpush1.msra.mxu0 %v2885
        %2907 = vmatprep.subr.mxu0 0.0
        %2908 = vmatpush1.msra.mxu0 %v2884
        %2909 = vmatprep.subr.mxu0 0.0
        %2910 = vmatpush1.msra.mxu0 %v2883
        %2911 = vmatprep.subr.mxu0 0.0
        %2912 = vmatpush1.msra.mxu0 %v2882
        %2913 = vmatprep.subr.mxu0 0.0
        %2914 = vmatpush1.msra.mxu0 %v2881
        %2915 = vmatprep.subr.mxu0 0.0
        %2916 = vmatpush1.msra.mxu0 %v2880
        %2917 = vmatprep.subr.mxu0 0.0
        %2918 = vmatpush1.msra.mxu0 %v2879
        %2919 = vmatprep.subr.mxu0 0.0
        %2920 = vmatpush1.msra.mxu0 %v2878
        %2921 = vmatprep.subr.mxu0 0.0
        %2922 = vmatpush1.msra.mxu0 %v2877
        %2923 = vmatprep.subr.mxu0 0.0
        %2924 = vmatpush1.msra.mxu0 %v2876
        %2925 = vmatprep.subr.mxu0 0.0
        %2926 = vmatpush1.msra.mxu0 %v2875
        %2927 = vmatprep.subr.mxu0 0.0
        %2928 = vmatpush1.msra.mxu0 %v2874
        %2929 = vmatprep.subr.mxu0 0.0
        %2930 = vmatpush2.msra.mxu0 0.0
        %2931 = vmatprep.subr.mxu0 0.0
        %2932 = vmatpush2.msra.mxu0 0.0
        %2933 = vmatprep.subr.mxu0 0.0
        %2934 = vmatpush2.msra.mxu0 0.0
        %2935 = vmatprep.subr.mxu0 0.0
        %2936 = vmatpush2.msra.mxu0 0.0
        %2937 = vmatprep.subr.mxu0 0.0
        %2938 = vmatpush2.msra.mxu0 0.0
        %2939 = vmatprep.subr.mxu0 0.0
        %2940 = vmatpush2.msra.mxu0 0.0
        %2941 = vmatprep.subr.mxu0 0.0
        %2942 = vmatpush2.msra.mxu0 0.0
        %2943 = vmatprep.subr.mxu0 0.0
        %2944 = vmatpush2.msra.mxu0 0.0
        %2945 = vmatprep.subr.mxu0 0.0
        %2946 = vmatpush2.msra.mxu0 0.0
        %2947 = vmatprep.subr.mxu0 0.0
        %2948 = vmatpush2.msra.mxu0 0.0
        %2949 = vmatprep.subr.mxu0 0.0
        %2950 = vmatpush2.msra.mxu0 0.0
        %2951 = vmatprep.subr.mxu0 0.0
        %2952 = vmatpush2.msra.mxu0 0.0
        %2953 = vmatprep.subr.mxu0 0.0
        %2954 = vmatpush2.msra.mxu0 0.0
        %2955 = vmatprep.subr.mxu0 0.0
        %2956 = vmatpush2.msra.mxu0 0.0
        %2957 = vmatprep.subr.mxu0 0.0
        %2958 = vmatpush2.msra.mxu0 0.0
        %2959 = vmatprep.subr.mxu0 0.0
        %2960 = vmatpush2.msra.mxu0 0.0
        %2961 = vmatprep.mubr.f32.mxu0 0.0
        %2962 = vmatmul.mubr.f32.gmra.mxu0 %v2858
        %v2963 = vpop.f32.mrf.mxu0
        %v2964 = vadd.f32 %v2895, %v2963
        %v2965 = vpop.f32.mrf.mxu0
        %2966 = vmatprep.mubr.f32.mxu0 0.0
        %2967 = vmatmul.mubr.f32.gmra.mxu0 %v2859
        %v2968 = vpop.f32.mrf.mxu0
        %v2969 = vadd.f32 %v2895, %v2968
        %v2970 = vpop.f32.mrf.mxu0
        %2971 = vmatprep.mubr.f32.mxu0 0.0
        %2972 = vmatmul.mubr.f32.gmra.mxu0 %v2860
        %v2973 = vpop.f32.mrf.mxu0
        %v2974 = vadd.f32 %v2895, %v2973
        %v2975 = vpop.f32.mrf.mxu0
        %2976 = vmatprep.mubr.f32.mxu0 0.0
        %2977 = vmatmul.mubr.f32.gmra.mxu0 %v2861
        %v2978 = vpop.f32.mrf.mxu0
        %v2979 = vadd.f32 %v2895, %v2978
        %v2980 = vpop.f32.mrf.mxu0
        %2981 = vmatprep.mubr.f32.mxu0 0.0
        %2982 = vmatmul.mubr.f32.gmra.mxu0 %v2862
        %v2983 = vpop.f32.mrf.mxu0
        %v2984 = vadd.f32 %v2895, %v2983
        %v2985 = vpop.f32.mrf.mxu0
        %2986 = vmatprep.mubr.f32.mxu0 0.0
        %2987 = vmatmul.mubr.f32.gmra.mxu0 %v2863
        %v2988 = vpop.f32.mrf.mxu0
        %v2989 = vadd.f32 %v2895, %v2988
        %v2990 = vpop.f32.mrf.mxu0
        %2991 = vmatprep.mubr.f32.mxu0 0.0
        %2992 = vmatmul.mubr.f32.gmra.mxu0 %v2864
        %v2993 = vpop.f32.mrf.mxu0
        %v2994 = vadd.f32 %v2895, %v2993
        %v2995 = vpop.f32.mrf.mxu0
        %2996 = vmatprep.mubr.f32.mxu0 0.0
        %2997 = vmatmul.mubr.f32.gmra.mxu0 %v2865
        %v2998 = vpop.f32.mrf.mxu0
        %v2999 = vadd.f32 %v2895, %v2998
        %v3000 = vpop.f32.mrf.mxu0
        %3001 = vmatprep.mubr.f32.mxu0 0.0
        %3002 = vmatmul.mubr.f32.gmra.mxu0 %v2866
        %v3003 = vpop.f32.mrf.mxu0
        %v3004 = vadd.f32 %v2895, %v3003
        %v3005 = vpop.f32.mrf.mxu0
        %3006 = vmatprep.mubr.f32.mxu0 0.0
        %3007 = vmatmul.mubr.f32.gmra.mxu0 %v2867
        %v3008 = vpop.f32.mrf.mxu0
        %v3009 = vadd.f32 %v2895, %v3008
        %v3010 = vpop.f32.mrf.mxu0
        %3011 = vmatprep.mubr.f32.mxu0 0.0
        %3012 = vmatmul.mubr.f32.gmra.mxu0 %v2868
        %v3013 = vpop.f32.mrf.mxu0
        %v3014 = vadd.f32 %v2895, %v3013
        %v3015 = vpop.f32.mrf.mxu0
        %3016 = vmatprep.mubr.f32.mxu0 0.0
        %3017 = vmatmul.mubr.f32.gmra.mxu0 %v2869
        %v3018 = vpop.f32.mrf.mxu0
        %v3019 = vadd.f32 %v2895, %v3018
        %v3020 = vpop.f32.mrf.mxu0
        %3021 = vmatprep.mubr.f32.mxu0 0.0
        %3022 = vmatmul.mubr.f32.gmra.mxu0 %v2870
        %v3023 = vpop.f32.mrf.mxu0
        %v3024 = vadd.f32 %v2895, %v3023
        %v3025 = vpop.f32.mrf.mxu0
        %3026 = vmatprep.mubr.f32.mxu0 0.0
        %3027 = vmatmul.mubr.f32.gmra.mxu0 %v2871
        %v3028 = vpop.f32.mrf.mxu0
        %v3029 = vadd.f32 %v2895, %v3028
        %v3030 = vpop.f32.mrf.mxu0
        %3031 = vmatprep.mubr.f32.mxu0 0.0
        %3032 = vmatmul.mubr.f32.gmra.mxu0 %v2872
        %v3033 = vpop.f32.mrf.mxu0
        %v3034 = vadd.f32 %v2895, %v3033
        %v3035 = vpop.f32.mrf.mxu0
        %3036 = vmatprep.mubr.f32.mxu0 0.0
        %3037 = vmatmul.mubr.f32.gmra.mxu0 %v2873
        %v3038 = vpop.f32.mrf.mxu0
        %v3039 = vadd.f32 %v2895, %v3038
        %v3040 = vpop.f32.mrf.mxu0
        %3041 = vdwg.mxu0
        %3042 = vst [vmem:[%s412] sm:$0xff] %v2964
        %3043 = vst [vmem:[%s412 + $0x8] sm:$0xff] %v2969
        %3044 = vst [vmem:[%s412 + $0x10] sm:$0xff] %v2974
        %3045 = vst [vmem:[%s412 + $0x18] sm:$0xff] %v2979
        %3046 = vst [vmem:[%s412 + $0x20] sm:$0xff] %v2984
        %3047 = vst [vmem:[%s412 + $0x28] sm:$0xff] %v2989
        %3048 = vst [vmem:[%s412 + $0x30] sm:$0xff] %v2994
        %3049 = vst [vmem:[%s412 + $0x38] sm:$0xff] %v2999
        %3050 = vst [vmem:[%s412 + $0x40] sm:$0xff] %v3004
        %3051 = vst [vmem:[%s412 + $0x48] sm:$0xff] %v3009
        %3052 = vst [vmem:[%s412 + $0x50] sm:$0xff] %v3014
        %3053 = vst [vmem:[%s412 + $0x58] sm:$0xff] %v3019
        %3054 = vst [vmem:[%s412 + $0x60] sm:$0xff] %v3024
        %3055 = vst [vmem:[%s412 + $0x68] sm:$0xff] %v3029
        %3056 = vst [vmem:[%s412 + $0x70] sm:$0xff] %v3034
        %3057 = vst [vmem:[%s412 + $0x78] sm:$0xff] %v3039
        %s3058 = sand.u32 %s279, 1
        %s3059 = scalar_lea.sflag [#allocation3], %s3058
        %s3060 = sand.u32 %s279, 1
        %s3061 = smul.addr %s3060, 128
        %s3062 = scalar_lea.vmem [#allocation2], %s3061
        // Predicated region
        $region65: #{tpu_custom_call.1} parent=63 // pred_check
          %p3063 = pneg %p289
        $region66: #{tpu_custom_call.1} parent=63 // pred_check_branch
          %3065 = sbr.rel (%p3063) target = $region68
        $region67: #{tpu_custom_call.1} parent=63 // pred_region
          %s3066 = smul.u32 16, %s25
          %s3068 = ssub.s32 2048, 2048
          %3069 = vsyncadd %s3059, %s3068
          %s3070 = smul.addr %s3066, 128
          %s3071 = scalar_lea.hbm %s11, %s3070
          %s3072 = sshll.u32 %s3062, 4
          %s3073 = int_to_ptr.vmem [resolvable:$true] %s3072
          %3078 = dma.vmem_to_hbm [thread:$0]  %s3073, 2048, %s3071, %s3059, 128, 128, 8
        $region68: #{tpu_custom_call.1} parent=63 // pred_fallthru
          _
      $region64: #{tpu_custom_call.1} parent=5 // pred_fallthru
        _
      %p3079 = scmp.le.s32.totalorder 2, %s20
      // Predicated region
      $region69: #{tpu_custom_call.1} parent=5 // pred_check
        %p3080 = pneg %p3079
      $region70: #{tpu_custom_call.1} parent=5 // pred_check_branch
        %3082 = sbr.rel (%p3080) target = $region72
      $region71: #{tpu_custom_call.1} parent=5 // pred_region
        %s3083 = ssub.s32 %s20, 2
        // Predicated region
        $region73: #{tpu_custom_call.1} parent=71 // pred_check
          %p3084 = pneg %p295
        $region74: #{tpu_custom_call.1} parent=71 // pred_check_branch
          %3086 = sbr.rel (%p3084) target = $region76
        $region75: #{tpu_custom_call.1} parent=71 // pred_region
          %s3087 = sand.u32 %s280, 1
          %s3088 = scalar_lea.sflag [#allocation3], %s3087
          %s3089 = sand.u32 %s280, 1
          %s3090 = smul.addr %s3089, 128
          %s3091 = scalar_lea.vmem [#allocation2], %s3090
          %3092 = dma.done %s3088, 2048
        $region76: #{tpu_custom_call.1} parent=71 // pred_fallthru
          _
      $region72: #{tpu_custom_call.1} parent=5 // pred_fallthru
        _
    $region6: #{tpu_custom_call.1} parent=1 // loop_footer
      %s24 = sadd.s32 1, %s20
    $region7: #{tpu_custom_call.1} parent=1 // loop_footer_branch
      %19 = sbr.rel target = $region3
    $region8: #{tpu_custom_call.1} parent=1 // loop_exit
      _
    %3093 = vsyncpa [#allocation3], 1
    %s3094 = scalar_lea.sflag [#allocation3], 1
    %3095 = vsyncpa %s3094, 1

</llo_original>
